<compile_context>
chip_gen: v7x
topology: tpu7x:2x2x1
jax: 0.10.0
libtpu: 0.0.40
codegen_flags: <defaults>
</compile_context>

<pallas_src>
import functools
import math

import jax
import jax.numpy as jnp
from jax.experimental import pallas as pl
from jax.experimental.pallas import tpu as pltpu

# ------------------------- small model config -------------------------------
B = 2            # batch
S = 8            # sequence length
H = 32           # hidden size
N_HEADS = 4
HEAD = H // N_HEADS
FFN = 64
N_LAYERS = 2
VOCAB = 120
MAX_POS = 64
PAD_ID = 1       # XLM-R padding token id
LN_EPS = 1e-5

_VMEM = pl.BlockSpec(memory_space=pltpu.MemorySpace.VMEM)


# ------------------------------ fused kernel ----------------------------------
def _fused_forward_kernel(
    emb_ref,        # (B*S, H)      word+pos+type embeddings (pre-LN)
    am_ref,         # (B, 1, S)     attention_masks (1 = keep)
    hm_ref,         # (B, S, 1)     (input_ids > 0) mask for the avg head
    emb_ln_g_ref, emb_ln_b_ref,         # (1, H)
    wqkv_ref, bqkv_ref,                 # (L, H, 3H), (L, 1, 3H)
    wo_ref, bo_ref,                     # (L, H, H),  (L, 1, H)
    ln1_g_ref, ln1_b_ref,               # (L, 1, H)
    w1_ref, b1_ref,                     # (L, H, FFN), (L, 1, FFN)
    w2_ref, b2_ref,                     # (L, FFN, H), (L, 1, H)
    ln2_g_ref, ln2_b_ref,               # (L, 1, H)
    reg_w_ref, reg_b_ref,               # (1, H), (1, 1)
    o_ref,                              # (B, 1)
):
    scale = 1.0 / math.sqrt(HEAD)

    def layernorm(x, g, b):
        mu = jnp.mean(x, axis=-1, keepdims=True)
        var = jnp.mean((x - mu) ** 2, axis=-1, keepdims=True)
        return (x - mu) * jax.lax.rsqrt(var + LN_EPS) * g + b

    # TODO(synk): HF XLM-R uses exact erf-GELU; tanh-approximate GELU is used
    #             here for robust EUP lowering inside the Pallas kernel.
    gelu = lambda y: jax.nn.gelu(y, approximate=True)

    # ---- embedding LayerNorm (activations stay in vregs/VMEM from here on) ---
    h = layernorm(emb_ref[...].astype(jnp.float32),
                  emb_ln_g_ref[...], emb_ln_b_ref[...])            # (B*S, H)

    # additive attention bias built in-kernel (HF extended-mask semantics)
    bias = (1.0 - am_ref[...].astype(jnp.float32)) * -1e9          # (B, 1, S)

    for l in range(N_LAYERS):                                       # static unroll
        # --- fused QKV projection: one (B*S,H)x(H,3H) MXU pass ---------------
        qkv = jnp.dot(h, wqkv_ref[l],
                      preferred_element_type=jnp.float32) + bqkv_ref[l]  # (B*S, 3H)

        # --- per-head attention, heads handled with static lane slices -------
        ctx_heads = []
        for hd in range(N_HEADS):
            lo = hd * HEAD
            q = qkv[:, lo:lo + HEAD].reshape(B, S, HEAD)
            k = qkv[:, H + lo:H + lo + HEAD].reshape(B, S, HEAD)
            v = qkv[:, 2 * H + lo:2 * H + lo + HEAD].reshape(B, S, HEAD)

            s = jnp.einsum("bqd,bkd->bqk", q, k,
                           preferred_element_type=jnp.float32)
            s = s * scale + bias                                   # (B, S, S)
            s = s - jnp.max(s, axis=-1, keepdims=True)             # stable softmax
            p = jnp.exp(s)
            p = p * pl.reciprocal(jnp.sum(p, axis=-1, keepdims=True), approx=True)

            ctx = jnp.einsum("bqk,bkd->bqd", p, v,
                             preferred_element_type=jnp.float32)   # (B, S, HEAD)
            ctx_heads.append(ctx.reshape(B * S, HEAD))
        ctx = jnp.concatenate(ctx_heads, axis=-1)                  # (B*S, H)

        # --- output proj + residual + post-LN (fused) -------------------------
        attn_out = jnp.dot(ctx, wo_ref[l],
                           preferred_element_type=jnp.float32) + bo_ref[l]
        h1 = layernorm(attn_out + h, ln1_g_ref[l], ln1_b_ref[l])

        # --- FFN + residual + post-LN (fused) ---------------------------------
        ff = gelu(jnp.dot(h1, w1_ref[l],
                          preferred_element_type=jnp.float32) + b1_ref[l])
        ff2 = jnp.dot(ff, w2_ref[l],
                      preferred_element_type=jnp.float32) + b2_ref[l]
        h = layernorm(ff2 + h1, ln2_g_ref[l], ln2_b_ref[l])

    # ------------------------- masked-avg regression head --------------------
    m = hm_ref[...].astype(jnp.float32)                            # (B, S, 1)
    word_rep = h.reshape(B, S, H) * m
    summed = jnp.sum(word_rep, axis=1)                             # (B, H)
    total_cnt = jnp.sum(m)                                         # SCALAR, batch-wide (as in torch)
    avg = summed / total_cnt
    # Dropout(p=0.1) is identity in eval.  Linear(H,1) as a VPU reduce:
    out = jnp.sum(avg * reg_w_ref[...], axis=-1, keepdims=True) + reg_b_ref[...]
    o_ref[...] = out.astype(o_ref.dtype)


def _fused_forward_call(emb, am, hm, p):
    n_in = 19
    return pl.pallas_call(
        _fused_forward_kernel,
        out_shape=jax.ShapeDtypeStruct((B, 1), jnp.float32),
        in_specs=[_VMEM] * n_in,
        out_specs=_VMEM,
        compiler_params=pltpu.CompilerParams(vmem_limit_bytes=16 * 1024 * 1024),
    )(
        emb, am, hm,
        p["emb_ln_g"], p["emb_ln_b"],
        p["wqkv"], p["bqkv"], p["wo"], p["bo"],
        p["ln1_g"], p["ln1_b"],
        p["w1"], p["b1"], p["w2"], p["b2"],
        p["ln2_g"], p["ln2_b"],
        p["reg_w"], p["reg_b"],
    )


# --------------------------- model (glue + kernel) ----------------------------
def forward(input_ids, attention_masks, params):
    # RoBERTa-style embeddings: gathers are plain-JAX glue (no clean Pallas
    # equivalent at this size); everything after lands in the fused kernel.
    pad_mask = (input_ids != PAD_ID).astype(jnp.int32)
    position_ids = jnp.cumsum(pad_mask, axis=1) * pad_mask + PAD_ID
    emb = (params["word_emb"][input_ids]
           + params["pos_emb"][position_ids]
           + params["type_emb"][0])
    emb = emb.reshape(B * S, H).astype(jnp.float32)

    am = attention_masks.astype(jnp.float32).reshape(B, 1, S)
    hm = (input_ids > 0).astype(jnp.float32).reshape(B, S, 1)
    # NOTE: sentence_rep (pooler output) is computed-but-unused in the torch
    #       forward, so it is skipped here.
    return _fused_forward_call(emb, am, hm, params)


# --------------------------- deterministic init -------------------------------
def init_params(key):
    def nrm(k, shape):
        return jax.random.normal(k, shape, jnp.float32) * 0.02

    keys = iter(jax.random.split(key, 16))
    return {
        "word_emb": nrm(next(keys), (VOCAB, H)),
        "pos_emb": nrm(next(keys), (MAX_POS, H)),
        "type_emb": nrm(next(keys), (1, H)),
        "emb_ln_g": jnp.ones((1, H), jnp.float32),
        "emb_ln_b": jnp.zeros((1, H), jnp.float32),
        # per-layer weights stacked on a leading layer axis; QKV packed.
        "wqkv": nrm(next(keys), (N_LAYERS, H, 3 * H)),
        "bqkv": jnp.zeros((N_LAYERS, 1, 3 * H), jnp.float32),
        "wo": nrm(next(keys), (N_LAYERS, H, H)),
        "bo": jnp.zeros((N_LAYERS, 1, H), jnp.float32),
        "ln1_g": jnp.ones((N_LAYERS, 1, H), jnp.float32),
        "ln1_b": jnp.zeros((N_LAYERS, 1, H), jnp.float32),
        "w1": nrm(next(keys), (N_LAYERS, H, FFN)),
        "b1": jnp.zeros((N_LAYERS, 1, FFN), jnp.float32),
        "w2": nrm(next(keys), (N_LAYERS, FFN, H)),
        "b2": jnp.zeros((N_LAYERS, 1, H), jnp.float32),
        "ln2_g": jnp.ones((N_LAYERS, 1, H), jnp.float32),
        "ln2_b": jnp.zeros((N_LAYERS, 1, H), jnp.float32),
        "reg_w": nrm(next(keys), (1, H)),
        "reg_b": jnp.zeros((1, 1), jnp.float32),
    }


# ----------------------------------- main -------------------------------------
if __name__ == "__main__":
    key = jax.random.PRNGKey(0)
    k_param, k_ids = jax.random.split(key)

    params = init_params(k_param)

    input_ids = jax.random.randint(k_ids, (B, S), 2, VOCAB, dtype=jnp.int32)
    # pad out the tail of sequence 0 (XLM-R pad id = 1)
    input_ids = input_ids.at[0, 6:].set(PAD_ID)
    attention_masks = (input_ids != PAD_ID).astype(jnp.float32)

    fwd = jax.jit(forward)
    out = fwd(input_ids, attention_masks, params)
    out = jax.block_until_ready(out)
    assert out.shape == (B, 1) and out.dtype == jnp.float32
    assert bool(jnp.all(jnp.isfinite(out)))
    print("KERNEL_OK")
</pallas_src>

<mosaic_0001>
module attributes {stable_mosaic.version = 11 : i64} {
  func.func @_fused_forward_kernel(%arg0: memref<16x32xf32, #tpu.memory_space<vmem>>, %arg1: memref<2x1x8xf32, #tpu.memory_space<vmem>>, %arg2: memref<2x8x1xf32, #tpu.memory_space<vmem>>, %arg3: memref<1x32xf32, #tpu.memory_space<vmem>>, %arg4: memref<1x32xf32, #tpu.memory_space<vmem>>, %arg5: memref<2x32x96xf32, #tpu.memory_space<vmem>>, %arg6: memref<2x1x96xf32, #tpu.memory_space<vmem>>, %arg7: memref<2x32x32xf32, #tpu.memory_space<vmem>>, %arg8: memref<2x1x32xf32, #tpu.memory_space<vmem>>, %arg9: memref<2x1x32xf32, #tpu.memory_space<vmem>>, %arg10: memref<2x1x32xf32, #tpu.memory_space<vmem>>, %arg11: memref<2x32x64xf32, #tpu.memory_space<vmem>>, %arg12: memref<2x1x64xf32, #tpu.memory_space<vmem>>, %arg13: memref<2x64x32xf32, #tpu.memory_space<vmem>>, %arg14: memref<2x1x32xf32, #tpu.memory_space<vmem>>, %arg15: memref<2x1x32xf32, #tpu.memory_space<vmem>>, %arg16: memref<2x1x32xf32, #tpu.memory_space<vmem>>, %arg17: memref<1x32xf32, #tpu.memory_space<vmem>>, %arg18: memref<1x1xf32, #tpu.memory_space<vmem>>, %arg19: memref<2x1xf32, #tpu.memory_space<vmem>>) attributes {dimension_semantics = [], scalar_prefetch = 0 : i64, scratch_operands = 0 : i64, tpu.core_type = #tpu.core_type<tc>} {
    %c0 = arith.constant 0 : index
    %c0_0 = arith.constant 0 : index
    %0 = vector.load %arg0[%c0, %c0_0] : memref<16x32xf32, #tpu.memory_space<vmem>>, vector<16x32xf32>
    %c0_1 = arith.constant 0 : index
    %c0_2 = arith.constant 0 : index
    %1 = vector.load %arg3[%c0_1, %c0_2] : memref<1x32xf32, #tpu.memory_space<vmem>>, vector<1x32xf32>
    %c0_3 = arith.constant 0 : index
    %c0_4 = arith.constant 0 : index
    %2 = vector.load %arg4[%c0_3, %c0_4] : memref<1x32xf32, #tpu.memory_space<vmem>>, vector<1x32xf32>
    %cst = arith.constant dense<0.000000e+00> : vector<16xf32>
    %3 = vector.multi_reduction <add>, %0, %cst [1] : vector<16x32xf32> to vector<16xf32>
    %4 = vector.shape_cast %3 : vector<16xf32> to vector<16x1xf32>
    %cst_5 = arith.constant 3.200000e+01 : f32
    %5 = vector.broadcast %cst_5 : f32 to vector<16x1xf32>
    %6 = arith.divf %4, %5 : vector<16x1xf32>
    %7 = vector.broadcast %6 : vector<16x1xf32> to vector<16x32xf32>
    %8 = arith.subf %0, %7 : vector<16x32xf32>
    %9 = arith.mulf %8, %8 : vector<16x32xf32>
    %cst_6 = arith.constant dense<0.000000e+00> : vector<16xf32>
    %10 = vector.multi_reduction <add>, %9, %cst_6 [1] : vector<16x32xf32> to vector<16xf32>
    %11 = vector.shape_cast %10 : vector<16xf32> to vector<16x1xf32>
    %cst_7 = arith.constant 3.200000e+01 : f32
    %12 = vector.broadcast %cst_7 : f32 to vector<16x1xf32>
    %13 = arith.divf %11, %12 : vector<16x1xf32>
    %14 = vector.broadcast %6 : vector<16x1xf32> to vector<16x32xf32>
    %15 = arith.subf %0, %14 : vector<16x32xf32>
    %cst_8 = arith.constant 9.99999974E-6 : f32
    %16 = vector.broadcast %cst_8 : f32 to vector<16x1xf32>
    %17 = arith.addf %13, %16 : vector<16x1xf32>
    %18 = math.rsqrt %17 : vector<16x1xf32>
    %19 = vector.broadcast %18 : vector<16x1xf32> to vector<16x32xf32>
    %20 = arith.mulf %15, %19 : vector<16x32xf32>
    %21 = vector.broadcast %1 : vector<1x32xf32> to vector<16x32xf32>
    %22 = arith.mulf %20, %21 : vector<16x32xf32>
    %23 = vector.broadcast %2 : vector<1x32xf32> to vector<16x32xf32>
    %24 = arith.addf %22, %23 : vector<16x32xf32>
    %c0_9 = arith.constant 0 : index
    %c0_10 = arith.constant 0 : index
    %c0_11 = arith.constant 0 : index
    %25 = vector.load %arg1[%c0_9, %c0_10, %c0_11] : memref<2x1x8xf32, #tpu.memory_space<vmem>>, vector<2x1x8xf32>
    %cst_12 = arith.constant 1.000000e+00 : f32
    %26 = vector.broadcast %cst_12 : f32 to vector<2x1x8xf32>
    %27 = arith.subf %26, %25 : vector<2x1x8xf32>
    %cst_13 = arith.constant -1.000000e+09 : f32
    %28 = vector.broadcast %cst_13 : f32 to vector<2x1x8xf32>
    %29 = arith.mulf %27, %28 : vector<2x1x8xf32>
    %c0_14 = arith.constant 0 : index
    %c0_15 = arith.constant 0 : index
    %c0_16 = arith.constant 0 : index
    %30 = vector.load %arg5[%c0_14, %c0_15, %c0_16] : memref<2x32x96xf32, #tpu.memory_space<vmem>>, vector<1x32x96xf32>
    %31 = vector.shape_cast %30 : vector<1x32x96xf32> to vector<32x96xf32>
    %cst_17 = arith.constant dense<0.000000e+00> : vector<16x96xf32>
    %32 = tpu.matmul %24, %31, %cst_17 {dimension_numbers = #tpu.dot_dimension_numbers<[1], [0], [0], [1], [0, 0, 1, 1], [], []>} : vector<16x32xf32>, vector<32x96xf32>, vector<16x96xf32> -> vector<16x96xf32>
    %c0_18 = arith.constant 0 : index
    %c0_19 = arith.constant 0 : index
    %c0_20 = arith.constant 0 : index
    %33 = vector.load %arg6[%c0_18, %c0_19, %c0_20] : memref<2x1x96xf32, #tpu.memory_space<vmem>>, vector<1x1x96xf32>
    %34 = vector.shape_cast %33 : vector<1x1x96xf32> to vector<1x96xf32>
    %35 = vector.broadcast %34 : vector<1x96xf32> to vector<16x96xf32>
    %36 = arith.addf %32, %35 : vector<16x96xf32>
    %37 = vector.extract_strided_slice %36 {offsets = [0, 0], sizes = [16, 8], strides = [1, 1]} : vector<16x96xf32> to vector<16x8xf32>
    %38 = vector.shape_cast %37 : vector<16x8xf32> to vector<2x8x8xf32>
    %39 = vector.extract_strided_slice %36 {offsets = [0, 32], sizes = [16, 8], strides = [1, 1]} : vector<16x96xf32> to vector<16x8xf32>
    %40 = vector.shape_cast %39 : vector<16x8xf32> to vector<2x8x8xf32>
    %41 = vector.extract_strided_slice %36 {offsets = [0, 64], sizes = [16, 8], strides = [1, 1]} : vector<16x96xf32> to vector<16x8xf32>
    %42 = vector.shape_cast %41 : vector<16x8xf32> to vector<2x8x8xf32>
    "tpu.trace_start"() <{level = 10 : i32, message = "bqd,bkd->bqk"}> : () -> ()
    %cst_21 = arith.constant dense<0.000000e+00> : vector<2x8x8xf32>
    %43 = tpu.matmul %38, %40, %cst_21 {dimension_numbers = #tpu.dot_dimension_numbers<[2], [2], [1], [1], [0, 0, 0, 1, 1, 1], [0], [0]>} : vector<2x8x8xf32>, vector<2x8x8xf32>, vector<2x8x8xf32> -> vector<2x8x8xf32>
    "tpu.trace_stop"() : () -> ()
    %cst_22 = arith.constant 0.353553385 : f32
    %44 = vector.broadcast %cst_22 : f32 to vector<2x8x8xf32>
    %45 = arith.mulf %43, %44 : vector<2x8x8xf32>
    %46 = vector.broadcast %29 : vector<2x1x8xf32> to vector<2x8x8xf32>
    %47 = arith.addf %45, %46 : vector<2x8x8xf32>
    %cst_23 = arith.constant dense<0xFF800000> : vector<2x8xf32>
    %48 = vector.multi_reduction <maximumf>, %47, %cst_23 [2] : vector<2x8x8xf32> to vector<2x8xf32>
    %49 = vector.shape_cast %48 : vector<2x8xf32> to vector<2x8x1xf32>
    %50 = vector.broadcast %49 : vector<2x8x1xf32> to vector<2x8x8xf32>
    %51 = arith.subf %47, %50 : vector<2x8x8xf32>
    %52 = math.exp %51 : vector<2x8x8xf32>
    %cst_24 = arith.constant dense<0.000000e+00> : vector<2x8xf32>
    %53 = vector.multi_reduction <add>, %52, %cst_24 [2] : vector<2x8x8xf32> to vector<2x8xf32>
    %54 = vector.shape_cast %53 : vector<2x8xf32> to vector<2x8x1xf32>
    %55 = tpu.reciprocal %54 {approx = true} : vector<2x8x1xf32> -> vector<2x8x1xf32>
    %56 = vector.broadcast %55 : vector<2x8x1xf32> to vector<2x8x8xf32>
    %57 = arith.mulf %52, %56 : vector<2x8x8xf32>
    "tpu.trace_start"() <{level = 10 : i32, message = "bqk,bkd->bqd"}> : () -> ()
    %cst_25 = arith.constant dense<0.000000e+00> : vector<2x8x8xf32>
    %58 = tpu.matmul %57, %42, %cst_25 {dimension_numbers = #tpu.dot_dimension_numbers<[2], [1], [1], [2], [0, 0, 0, 1, 1, 2], [0], [0]>} : vector<2x8x8xf32>, vector<2x8x8xf32>, vector<2x8x8xf32> -> vector<2x8x8xf32>
    "tpu.trace_stop"() : () -> ()
    %59 = vector.shape_cast %58 : vector<2x8x8xf32> to vector<16x8xf32>
    %60 = vector.extract_strided_slice %36 {offsets = [0, 8], sizes = [16, 8], strides = [1, 1]} : vector<16x96xf32> to vector<16x8xf32>
    %61 = vector.shape_cast %60 : vector<16x8xf32> to vector<2x8x8xf32>
    %62 = vector.extract_strided_slice %36 {offsets = [0, 40], sizes = [16, 8], strides = [1, 1]} : vector<16x96xf32> to vector<16x8xf32>
    %63 = vector.shape_cast %62 : vector<16x8xf32> to vector<2x8x8xf32>
    %64 = vector.extract_strided_slice %36 {offsets = [0, 72], sizes = [16, 8], strides = [1, 1]} : vector<16x96xf32> to vector<16x8xf32>
    %65 = vector.shape_cast %64 : vector<16x8xf32> to vector<2x8x8xf32>
    "tpu.trace_start"() <{level = 10 : i32, message = "bqd,bkd->bqk"}> : () -> ()
    %cst_26 = arith.constant dense<0.000000e+00> : vector<2x8x8xf32>
    %66 = tpu.matmul %61, %63, %cst_26 {dimension_numbers = #tpu.dot_dimension_numbers<[2], [2], [1], [1], [0, 0, 0, 1, 1, 1], [0], [0]>} : vector<2x8x8xf32>, vector<2x8x8xf32>, vector<2x8x8xf32> -> vector<2x8x8xf32>
    "tpu.trace_stop"() : () -> ()
    %cst_27 = arith.constant 0.353553385 : f32
    %67 = vector.broadcast %cst_27 : f32 to vector<2x8x8xf32>
    %68 = arith.mulf %66, %67 : vector<2x8x8xf32>
    %69 = vector.broadcast %29 : vector<2x1x8xf32> to vector<2x8x8xf32>
    %70 = arith.addf %68, %69 : vector<2x8x8xf32>
    %cst_28 = arith.constant dense<0xFF800000> : vector<2x8xf32>
    %71 = vector.multi_reduction <maximumf>, %70, %cst_28 [2] : vector<2x8x8xf32> to vector<2x8xf32>
    %72 = vector.shape_cast %71 : vector<2x8xf32> to vector<2x8x1xf32>
    %73 = vector.broadcast %72 : vector<2x8x1xf32> to vector<2x8x8xf32>
    %74 = arith.subf %70, %73 : vector<2x8x8xf32>
    %75 = math.exp %74 : vector<2x8x8xf32>
    %cst_29 = arith.constant dense<0.000000e+00> : vector<2x8xf32>
    %76 = vector.multi_reduction <add>, %75, %cst_29 [2] : vector<2x8x8xf32> to vector<2x8xf32>
    %77 = vector.shape_cast %76 : vector<2x8xf32> to vector<2x8x1xf32>
    %78 = tpu.reciprocal %77 {approx = true} : vector<2x8x1xf32> -> vector<2x8x1xf32>
    %79 = vector.broadcast %78 : vector<2x8x1xf32> to vector<2x8x8xf32>
    %80 = arith.mulf %75, %79 : vector<2x8x8xf32>
    "tpu.trace_start"() <{level = 10 : i32, message = "bqk,bkd->bqd"}> : () -> ()
    %cst_30 = arith.constant dense<0.000000e+00> : vector<2x8x8xf32>
    %81 = tpu.matmul %80, %65, %cst_30 {dimension_numbers = #tpu.dot_dimension_numbers<[2], [1], [1], [2], [0, 0, 0, 1, 1, 2], [0], [0]>} : vector<2x8x8xf32>, vector<2x8x8xf32>, vector<2x8x8xf32> -> vector<2x8x8xf32>
    "tpu.trace_stop"() : () -> ()
    %82 = vector.shape_cast %81 : vector<2x8x8xf32> to vector<16x8xf32>
    %83 = vector.extract_strided_slice %36 {offsets = [0, 16], sizes = [16, 8], strides = [1, 1]} : vector<16x96xf32> to vector<16x8xf32>
    %84 = vector.shape_cast %83 : vector<16x8xf32> to vector<2x8x8xf32>
    %85 = vector.extract_strided_slice %36 {offsets = [0, 48], sizes = [16, 8], strides = [1, 1]} : vector<16x96xf32> to vector<16x8xf32>
    %86 = vector.shape_cast %85 : vector<16x8xf32> to vector<2x8x8xf32>
    %87 = vector.extract_strided_slice %36 {offsets = [0, 80], sizes = [16, 8], strides = [1, 1]} : vector<16x96xf32> to vector<16x8xf32>
    %88 = vector.shape_cast %87 : vector<16x8xf32> to vector<2x8x8xf32>
    "tpu.trace_start"() <{level = 10 : i32, message = "bqd,bkd->bqk"}> : () -> ()
    %cst_31 = arith.constant dense<0.000000e+00> : vector<2x8x8xf32>
    %89 = tpu.matmul %84, %86, %cst_31 {dimension_numbers = #tpu.dot_dimension_numbers<[2], [2], [1], [1], [0, 0, 0, 1, 1, 1], [0], [0]>} : vector<2x8x8xf32>, vector<2x8x8xf32>, vector<2x8x8xf32> -> vector<2x8x8xf32>
    "tpu.trace_stop"() : () -> ()
    %cst_32 = arith.constant 0.353553385 : f32
    %90 = vector.broadcast %cst_32 : f32 to vector<2x8x8xf32>
    %91 = arith.mulf %89, %90 : vector<2x8x8xf32>
    %92 = vector.broadcast %29 : vector<2x1x8xf32> to vector<2x8x8xf32>
    %93 = arith.addf %91, %92 : vector<2x8x8xf32>
    %cst_33 = arith.constant dense<0xFF800000> : vector<2x8xf32>
    %94 = vector.multi_reduction <maximumf>, %93, %cst_33 [2] : vector<2x8x8xf32> to vector<2x8xf32>
    %95 = vector.shape_cast %94 : vector<2x8xf32> to vector<2x8x1xf32>
    %96 = vector.broadcast %95 : vector<2x8x1xf32> to vector<2x8x8xf32>
    %97 = arith.subf %93, %96 : vector<2x8x8xf32>
    %98 = math.exp %97 : vector<2x8x8xf32>
    %cst_34 = arith.constant dense<0.000000e+00> : vector<2x8xf32>
    %99 = vector.multi_reduction <add>, %98, %cst_34 [2] : vector<2x8x8xf32> to vector<2x8xf32>
    %100 = vector.shape_cast %99 : vector<2x8xf32> to vector<2x8x1xf32>
    %101 = tpu.reciprocal %100 {approx = true} : vector<2x8x1xf32> -> vector<2x8x1xf32>
    %102 = vector.broadcast %101 : vector<2x8x1xf32> to vector<2x8x8xf32>
    %103 = arith.mulf %98, %102 : vector<2x8x8xf32>
    "tpu.trace_start"() <{level = 10 : i32, message = "bqk,bkd->bqd"}> : () -> ()
    %cst_35 = arith.constant dense<0.000000e+00> : vector<2x8x8xf32>
    %104 = tpu.matmul %103, %88, %cst_35 {dimension_numbers = #tpu.dot_dimension_numbers<[2], [1], [1], [2], [0, 0, 0, 1, 1, 2], [0], [0]>} : vector<2x8x8xf32>, vector<2x8x8xf32>, vector<2x8x8xf32> -> vector<2x8x8xf32>
    "tpu.trace_stop"() : () -> ()
    %105 = vector.shape_cast %104 : vector<2x8x8xf32> to vector<16x8xf32>
    %106 = vector.extract_strided_slice %36 {offsets = [0, 24], sizes = [16, 8], strides = [1, 1]} : vector<16x96xf32> to vector<16x8xf32>
    %107 = vector.shape_cast %106 : vector<16x8xf32> to vector<2x8x8xf32>
    %108 = vector.extract_strided_slice %36 {offsets = [0, 56], sizes = [16, 8], strides = [1, 1]} : vector<16x96xf32> to vector<16x8xf32>
    %109 = vector.shape_cast %108 : vector<16x8xf32> to vector<2x8x8xf32>
    %110 = vector.extract_strided_slice %36 {offsets = [0, 88], sizes = [16, 8], strides = [1, 1]} : vector<16x96xf32> to vector<16x8xf32>
    %111 = vector.shape_cast %110 : vector<16x8xf32> to vector<2x8x8xf32>
    "tpu.trace_start"() <{level = 10 : i32, message = "bqd,bkd->bqk"}> : () -> ()
    %cst_36 = arith.constant dense<0.000000e+00> : vector<2x8x8xf32>
    %112 = tpu.matmul %107, %109, %cst_36 {dimension_numbers = #tpu.dot_dimension_numbers<[2], [2], [1], [1], [0, 0, 0, 1, 1, 1], [0], [0]>} : vector<2x8x8xf32>, vector<2x8x8xf32>, vector<2x8x8xf32> -> vector<2x8x8xf32>
    "tpu.trace_stop"() : () -> ()
    %cst_37 = arith.constant 0.353553385 : f32
    %113 = vector.broadcast %cst_37 : f32 to vector<2x8x8xf32>
    %114 = arith.mulf %112, %113 : vector<2x8x8xf32>
    %115 = vector.broadcast %29 : vector<2x1x8xf32> to vector<2x8x8xf32>
    %116 = arith.addf %114, %115 : vector<2x8x8xf32>
    %cst_38 = arith.constant dense<0xFF800000> : vector<2x8xf32>
    %117 = vector.multi_reduction <maximumf>, %116, %cst_38 [2] : vector<2x8x8xf32> to vector<2x8xf32>
    %118 = vector.shape_cast %117 : vector<2x8xf32> to vector<2x8x1xf32>
    %119 = vector.broadcast %118 : vector<2x8x1xf32> to vector<2x8x8xf32>
    %120 = arith.subf %116, %119 : vector<2x8x8xf32>
    %121 = math.exp %120 : vector<2x8x8xf32>
    %cst_39 = arith.constant dense<0.000000e+00> : vector<2x8xf32>
    %122 = vector.multi_reduction <add>, %121, %cst_39 [2] : vector<2x8x8xf32> to vector<2x8xf32>
    %123 = vector.shape_cast %122 : vector<2x8xf32> to vector<2x8x1xf32>
    %124 = tpu.reciprocal %123 {approx = true} : vector<2x8x1xf32> -> vector<2x8x1xf32>
    %125 = vector.broadcast %124 : vector<2x8x1xf32> to vector<2x8x8xf32>
    %126 = arith.mulf %121, %125 : vector<2x8x8xf32>
    "tpu.trace_start"() <{level = 10 : i32, message = "bqk,bkd->bqd"}> : () -> ()
    %cst_40 = arith.constant dense<0.000000e+00> : vector<2x8x8xf32>
    %127 = tpu.matmul %126, %111, %cst_40 {dimension_numbers = #tpu.dot_dimension_numbers<[2], [1], [1], [2], [0, 0, 0, 1, 1, 2], [0], [0]>} : vector<2x8x8xf32>, vector<2x8x8xf32>, vector<2x8x8xf32> -> vector<2x8x8xf32>
    "tpu.trace_stop"() : () -> ()
    %128 = vector.shape_cast %127 : vector<2x8x8xf32> to vector<16x8xf32>
    %129 = tpu.concatenate %59, %82, %105, %128 in 1 : vector<16x8xf32>, vector<16x8xf32>, vector<16x8xf32>, vector<16x8xf32> -> vector<16x32xf32>
    %c0_41 = arith.constant 0 : index
    %c0_42 = arith.constant 0 : index
    %c0_43 = arith.constant 0 : index
    %130 = vector.load %arg7[%c0_41, %c0_42, %c0_43] : memref<2x32x32xf32, #tpu.memory_space<vmem>>, vector<1x32x32xf32>
    %131 = vector.shape_cast %130 : vector<1x32x32xf32> to vector<32x32xf32>
    %cst_44 = arith.constant dense<0.000000e+00> : vector<16x32xf32>
    %132 = tpu.matmul %129, %131, %cst_44 {dimension_numbers = #tpu.dot_dimension_numbers<[1], [0], [0], [1], [0, 0, 1, 1], [], []>} : vector<16x32xf32>, vector<32x32xf32>, vector<16x32xf32> -> vector<16x32xf32>
    %c0_45 = arith.constant 0 : index
    %c0_46 = arith.constant 0 : index
    %c0_47 = arith.constant 0 : index
    %133 = vector.load %arg8[%c0_45, %c0_46, %c0_47] : memref<2x1x32xf32, #tpu.memory_space<vmem>>, vector<1x1x32xf32>
    %134 = vector.shape_cast %133 : vector<1x1x32xf32> to vector<1x32xf32>
    %135 = vector.broadcast %134 : vector<1x32xf32> to vector<16x32xf32>
    %136 = arith.addf %132, %135 : vector<16x32xf32>
    %137 = arith.addf %136, %24 : vector<16x32xf32>
    %c0_48 = arith.constant 0 : index
    %c0_49 = arith.constant 0 : index
    %c0_50 = arith.constant 0 : index
    %138 = vector.load %arg9[%c0_48, %c0_49, %c0_50] : memref<2x1x32xf32, #tpu.memory_space<vmem>>, vector<1x1x32xf32>
    %139 = vector.shape_cast %138 : vector<1x1x32xf32> to vector<1x32xf32>
    %c0_51 = arith.constant 0 : index
    %c0_52 = arith.constant 0 : index
    %c0_53 = arith.constant 0 : index
    %140 = vector.load %arg10[%c0_51, %c0_52, %c0_53] : memref<2x1x32xf32, #tpu.memory_space<vmem>>, vector<1x1x32xf32>
    %141 = vector.shape_cast %140 : vector<1x1x32xf32> to vector<1x32xf32>
    %cst_54 = arith.constant dense<0.000000e+00> : vector<16xf32>
    %142 = vector.multi_reduction <add>, %137, %cst_54 [1] : vector<16x32xf32> to vector<16xf32>
    %143 = vector.shape_cast %142 : vector<16xf32> to vector<16x1xf32>
    %cst_55 = arith.constant 3.200000e+01 : f32
    %144 = vector.broadcast %cst_55 : f32 to vector<16x1xf32>
    %145 = arith.divf %143, %144 : vector<16x1xf32>
    %146 = vector.broadcast %145 : vector<16x1xf32> to vector<16x32xf32>
    %147 = arith.subf %137, %146 : vector<16x32xf32>
    %148 = arith.mulf %147, %147 : vector<16x32xf32>
    %cst_56 = arith.constant dense<0.000000e+00> : vector<16xf32>
    %149 = vector.multi_reduction <add>, %148, %cst_56 [1] : vector<16x32xf32> to vector<16xf32>
    %150 = vector.shape_cast %149 : vector<16xf32> to vector<16x1xf32>
    %cst_57 = arith.constant 3.200000e+01 : f32
    %151 = vector.broadcast %cst_57 : f32 to vector<16x1xf32>
    %152 = arith.divf %150, %151 : vector<16x1xf32>
    %153 = vector.broadcast %145 : vector<16x1xf32> to vector<16x32xf32>
    %154 = arith.subf %137, %153 : vector<16x32xf32>
    %cst_58 = arith.constant 9.99999974E-6 : f32
    %155 = vector.broadcast %cst_58 : f32 to vector<16x1xf32>
    %156 = arith.addf %152, %155 : vector<16x1xf32>
    %157 = math.rsqrt %156 : vector<16x1xf32>
    %158 = vector.broadcast %157 : vector<16x1xf32> to vector<16x32xf32>
    %159 = arith.mulf %154, %158 : vector<16x32xf32>
    %160 = vector.broadcast %139 : vector<1x32xf32> to vector<16x32xf32>
    %161 = arith.mulf %159, %160 : vector<16x32xf32>
    %162 = vector.broadcast %141 : vector<1x32xf32> to vector<16x32xf32>
    %163 = arith.addf %161, %162 : vector<16x32xf32>
    %c0_59 = arith.constant 0 : index
    %c0_60 = arith.constant 0 : index
    %c0_61 = arith.constant 0 : index
    %164 = vector.load %arg11[%c0_59, %c0_60, %c0_61] : memref<2x32x64xf32, #tpu.memory_space<vmem>>, vector<1x32x64xf32>
    %165 = vector.shape_cast %164 : vector<1x32x64xf32> to vector<32x64xf32>
    %cst_62 = arith.constant dense<0.000000e+00> : vector<16x64xf32>
    %166 = tpu.matmul %163, %165, %cst_62 {dimension_numbers = #tpu.dot_dimension_numbers<[1], [0], [0], [1], [0, 0, 1, 1], [], []>} : vector<16x32xf32>, vector<32x64xf32>, vector<16x64xf32> -> vector<16x64xf32>
    %c0_63 = arith.constant 0 : index
    %c0_64 = arith.constant 0 : index
    %c0_65 = arith.constant 0 : index
    %167 = vector.load %arg12[%c0_63, %c0_64, %c0_65] : memref<2x1x64xf32, #tpu.memory_space<vmem>>, vector<1x1x64xf32>
    %168 = vector.shape_cast %167 : vector<1x1x64xf32> to vector<1x64xf32>
    %169 = vector.broadcast %168 : vector<1x64xf32> to vector<16x64xf32>
    %170 = arith.addf %166, %169 : vector<16x64xf32>
    %171 = arith.mulf %170, %170 : vector<16x64xf32>
    %172 = arith.mulf %170, %171 : vector<16x64xf32>
    %cst_66 = arith.constant 4.471500e-02 : f32
    %173 = vector.broadcast %cst_66 : f32 to vector<16x64xf32>
    %174 = arith.mulf %173, %172 : vector<16x64xf32>
    %175 = arith.addf %170, %174 : vector<16x64xf32>
    %cst_67 = arith.constant 0.797884583 : f32
    %176 = vector.broadcast %cst_67 : f32 to vector<16x64xf32>
    %177 = arith.mulf %176, %175 : vector<16x64xf32>
    %178 = math.tanh %177 : vector<16x64xf32>
    %cst_68 = arith.constant 1.000000e+00 : f32
    %179 = vector.broadcast %cst_68 : f32 to vector<16x64xf32>
    %180 = arith.addf %179, %178 : vector<16x64xf32>
    %cst_69 = arith.constant 5.000000e-01 : f32
    %181 = vector.broadcast %cst_69 : f32 to vector<16x64xf32>
    %182 = arith.mulf %181, %180 : vector<16x64xf32>
    %183 = arith.mulf %170, %182 : vector<16x64xf32>
    %c0_70 = arith.constant 0 : index
    %c0_71 = arith.constant 0 : index
    %c0_72 = arith.constant 0 : index
    %184 = vector.load %arg13[%c0_70, %c0_71, %c0_72] : memref<2x64x32xf32, #tpu.memory_space<vmem>>, vector<1x64x32xf32>
    %185 = vector.shape_cast %184 : vector<1x64x32xf32> to vector<64x32xf32>
    %cst_73 = arith.constant dense<0.000000e+00> : vector<16x32xf32>
    %186 = tpu.matmul %183, %185, %cst_73 {dimension_numbers = #tpu.dot_dimension_numbers<[1], [0], [0], [1], [0, 0, 1, 1], [], []>} : vector<16x64xf32>, vector<64x32xf32>, vector<16x32xf32> -> vector<16x32xf32>
    %c0_74 = arith.constant 0 : index
    %c0_75 = arith.constant 0 : index
    %c0_76 = arith.constant 0 : index
    %187 = vector.load %arg14[%c0_74, %c0_75, %c0_76] : memref<2x1x32xf32, #tpu.memory_space<vmem>>, vector<1x1x32xf32>
    %188 = vector.shape_cast %187 : vector<1x1x32xf32> to vector<1x32xf32>
    %189 = vector.broadcast %188 : vector<1x32xf32> to vector<16x32xf32>
    %190 = arith.addf %186, %189 : vector<16x32xf32>
    %191 = arith.addf %190, %163 : vector<16x32xf32>
    %c0_77 = arith.constant 0 : index
    %c0_78 = arith.constant 0 : index
    %c0_79 = arith.constant 0 : index
    %192 = vector.load %arg15[%c0_77, %c0_78, %c0_79] : memref<2x1x32xf32, #tpu.memory_space<vmem>>, vector<1x1x32xf32>
    %193 = vector.shape_cast %192 : vector<1x1x32xf32> to vector<1x32xf32>
    %c0_80 = arith.constant 0 : index
    %c0_81 = arith.constant 0 : index
    %c0_82 = arith.constant 0 : index
    %194 = vector.load %arg16[%c0_80, %c0_81, %c0_82] : memref<2x1x32xf32, #tpu.memory_space<vmem>>, vector<1x1x32xf32>
    %195 = vector.shape_cast %194 : vector<1x1x32xf32> to vector<1x32xf32>
    %cst_83 = arith.constant dense<0.000000e+00> : vector<16xf32>
    %196 = vector.multi_reduction <add>, %191, %cst_83 [1] : vector<16x32xf32> to vector<16xf32>
    %197 = vector.shape_cast %196 : vector<16xf32> to vector<16x1xf32>
    %cst_84 = arith.constant 3.200000e+01 : f32
    %198 = vector.broadcast %cst_84 : f32 to vector<16x1xf32>
    %199 = arith.divf %197, %198 : vector<16x1xf32>
    %200 = vector.broadcast %199 : vector<16x1xf32> to vector<16x32xf32>
    %201 = arith.subf %191, %200 : vector<16x32xf32>
    %202 = arith.mulf %201, %201 : vector<16x32xf32>
    %cst_85 = arith.constant dense<0.000000e+00> : vector<16xf32>
    %203 = vector.multi_reduction <add>, %202, %cst_85 [1] : vector<16x32xf32> to vector<16xf32>
    %204 = vector.shape_cast %203 : vector<16xf32> to vector<16x1xf32>
    %cst_86 = arith.constant 3.200000e+01 : f32
    %205 = vector.broadcast %cst_86 : f32 to vector<16x1xf32>
    %206 = arith.divf %204, %205 : vector<16x1xf32>
    %207 = vector.broadcast %199 : vector<16x1xf32> to vector<16x32xf32>
    %208 = arith.subf %191, %207 : vector<16x32xf32>
    %cst_87 = arith.constant 9.99999974E-6 : f32
    %209 = vector.broadcast %cst_87 : f32 to vector<16x1xf32>
    %210 = arith.addf %206, %209 : vector<16x1xf32>
    %211 = math.rsqrt %210 : vector<16x1xf32>
    %212 = vector.broadcast %211 : vector<16x1xf32> to vector<16x32xf32>
    %213 = arith.mulf %208, %212 : vector<16x32xf32>
    %214 = vector.broadcast %193 : vector<1x32xf32> to vector<16x32xf32>
    %215 = arith.mulf %213, %214 : vector<16x32xf32>
    %216 = vector.broadcast %195 : vector<1x32xf32> to vector<16x32xf32>
    %217 = arith.addf %215, %216 : vector<16x32xf32>
    %c1 = arith.constant 1 : index
    %c0_88 = arith.constant 0 : index
    %c0_89 = arith.constant 0 : index
    %218 = vector.load %arg5[%c1, %c0_88, %c0_89] : memref<2x32x96xf32, #tpu.memory_space<vmem>>, vector<1x32x96xf32>
    %219 = vector.shape_cast %218 : vector<1x32x96xf32> to vector<32x96xf32>
    %cst_90 = arith.constant dense<0.000000e+00> : vector<16x96xf32>
    %220 = tpu.matmul %217, %219, %cst_90 {dimension_numbers = #tpu.dot_dimension_numbers<[1], [0], [0], [1], [0, 0, 1, 1], [], []>} : vector<16x32xf32>, vector<32x96xf32>, vector<16x96xf32> -> vector<16x96xf32>
    %c1_91 = arith.constant 1 : index
    %c0_92 = arith.constant 0 : index
    %c0_93 = arith.constant 0 : index
    %221 = vector.load %arg6[%c1_91, %c0_92, %c0_93] : memref<2x1x96xf32, #tpu.memory_space<vmem>>, vector<1x1x96xf32>
    %222 = vector.shape_cast %221 : vector<1x1x96xf32> to vector<1x96xf32>
    %223 = vector.broadcast %222 : vector<1x96xf32> to vector<16x96xf32>
    %224 = arith.addf %220, %223 : vector<16x96xf32>
    %225 = vector.extract_strided_slice %224 {offsets = [0, 0], sizes = [16, 8], strides = [1, 1]} : vector<16x96xf32> to vector<16x8xf32>
    %226 = vector.shape_cast %225 : vector<16x8xf32> to vector<2x8x8xf32>
    %227 = vector.extract_strided_slice %224 {offsets = [0, 32], sizes = [16, 8], strides = [1, 1]} : vector<16x96xf32> to vector<16x8xf32>
    %228 = vector.shape_cast %227 : vector<16x8xf32> to vector<2x8x8xf32>
    %229 = vector.extract_strided_slice %224 {offsets = [0, 64], sizes = [16, 8], strides = [1, 1]} : vector<16x96xf32> to vector<16x8xf32>
    %230 = vector.shape_cast %229 : vector<16x8xf32> to vector<2x8x8xf32>
    "tpu.trace_start"() <{level = 10 : i32, message = "bqd,bkd->bqk"}> : () -> ()
    %cst_94 = arith.constant dense<0.000000e+00> : vector<2x8x8xf32>
    %231 = tpu.matmul %226, %228, %cst_94 {dimension_numbers = #tpu.dot_dimension_numbers<[2], [2], [1], [1], [0, 0, 0, 1, 1, 1], [0], [0]>} : vector<2x8x8xf32>, vector<2x8x8xf32>, vector<2x8x8xf32> -> vector<2x8x8xf32>
    "tpu.trace_stop"() : () -> ()
    %cst_95 = arith.constant 0.353553385 : f32
    %232 = vector.broadcast %cst_95 : f32 to vector<2x8x8xf32>
    %233 = arith.mulf %231, %232 : vector<2x8x8xf32>
    %234 = vector.broadcast %29 : vector<2x1x8xf32> to vector<2x8x8xf32>
    %235 = arith.addf %233, %234 : vector<2x8x8xf32>
    %cst_96 = arith.constant dense<0xFF800000> : vector<2x8xf32>
    %236 = vector.multi_reduction <maximumf>, %235, %cst_96 [2] : vector<2x8x8xf32> to vector<2x8xf32>
    %237 = vector.shape_cast %236 : vector<2x8xf32> to vector<2x8x1xf32>
    %238 = vector.broadcast %237 : vector<2x8x1xf32> to vector<2x8x8xf32>
    %239 = arith.subf %235, %238 : vector<2x8x8xf32>
    %240 = math.exp %239 : vector<2x8x8xf32>
    %cst_97 = arith.constant dense<0.000000e+00> : vector<2x8xf32>
    %241 = vector.multi_reduction <add>, %240, %cst_97 [2] : vector<2x8x8xf32> to vector<2x8xf32>
    %242 = vector.shape_cast %241 : vector<2x8xf32> to vector<2x8x1xf32>
    %243 = tpu.reciprocal %242 {approx = true} : vector<2x8x1xf32> -> vector<2x8x1xf32>
    %244 = vector.broadcast %243 : vector<2x8x1xf32> to vector<2x8x8xf32>
    %245 = arith.mulf %240, %244 : vector<2x8x8xf32>
    "tpu.trace_start"() <{level = 10 : i32, message = "bqk,bkd->bqd"}> : () -> ()
    %cst_98 = arith.constant dense<0.000000e+00> : vector<2x8x8xf32>
    %246 = tpu.matmul %245, %230, %cst_98 {dimension_numbers = #tpu.dot_dimension_numbers<[2], [1], [1], [2], [0, 0, 0, 1, 1, 2], [0], [0]>} : vector<2x8x8xf32>, vector<2x8x8xf32>, vector<2x8x8xf32> -> vector<2x8x8xf32>
    "tpu.trace_stop"() : () -> ()
    %247 = vector.shape_cast %246 : vector<2x8x8xf32> to vector<16x8xf32>
    %248 = vector.extract_strided_slice %224 {offsets = [0, 8], sizes = [16, 8], strides = [1, 1]} : vector<16x96xf32> to vector<16x8xf32>
    %249 = vector.shape_cast %248 : vector<16x8xf32> to vector<2x8x8xf32>
    %250 = vector.extract_strided_slice %224 {offsets = [0, 40], sizes = [16, 8], strides = [1, 1]} : vector<16x96xf32> to vector<16x8xf32>
    %251 = vector.shape_cast %250 : vector<16x8xf32> to vector<2x8x8xf32>
    %252 = vector.extract_strided_slice %224 {offsets = [0, 72], sizes = [16, 8], strides = [1, 1]} : vector<16x96xf32> to vector<16x8xf32>
    %253 = vector.shape_cast %252 : vector<16x8xf32> to vector<2x8x8xf32>
    "tpu.trace_start"() <{level = 10 : i32, message = "bqd,bkd->bqk"}> : () -> ()
    %cst_99 = arith.constant dense<0.000000e+00> : vector<2x8x8xf32>
    %254 = tpu.matmul %249, %251, %cst_99 {dimension_numbers = #tpu.dot_dimension_numbers<[2], [2], [1], [1], [0, 0, 0, 1, 1, 1], [0], [0]>} : vector<2x8x8xf32>, vector<2x8x8xf32>, vector<2x8x8xf32> -> vector<2x8x8xf32>
    "tpu.trace_stop"() : () -> ()
    %cst_100 = arith.constant 0.353553385 : f32
    %255 = vector.broadcast %cst_100 : f32 to vector<2x8x8xf32>
    %256 = arith.mulf %254, %255 : vector<2x8x8xf32>
    %257 = vector.broadcast %29 : vector<2x1x8xf32> to vector<2x8x8xf32>
    %258 = arith.addf %256, %257 : vector<2x8x8xf32>
    %cst_101 = arith.constant dense<0xFF800000> : vector<2x8xf32>
    %259 = vector.multi_reduction <maximumf>, %258, %cst_101 [2] : vector<2x8x8xf32> to vector<2x8xf32>
    %260 = vector.shape_cast %259 : vector<2x8xf32> to vector<2x8x1xf32>
    %261 = vector.broadcast %260 : vector<2x8x1xf32> to vector<2x8x8xf32>
    %262 = arith.subf %258, %261 : vector<2x8x8xf32>
    %263 = math.exp %262 : vector<2x8x8xf32>
    %cst_102 = arith.constant dense<0.000000e+00> : vector<2x8xf32>
    %264 = vector.multi_reduction <add>, %263, %cst_102 [2] : vector<2x8x8xf32> to vector<2x8xf32>
    %265 = vector.shape_cast %264 : vector<2x8xf32> to vector<2x8x1xf32>
    %266 = tpu.reciprocal %265 {approx = true} : vector<2x8x1xf32> -> vector<2x8x1xf32>
    %267 = vector.broadcast %266 : vector<2x8x1xf32> to vector<2x8x8xf32>
    %268 = arith.mulf %263, %267 : vector<2x8x8xf32>
    "tpu.trace_start"() <{level = 10 : i32, message = "bqk,bkd->bqd"}> : () -> ()
    %cst_103 = arith.constant dense<0.000000e+00> : vector<2x8x8xf32>
    %269 = tpu.matmul %268, %253, %cst_103 {dimension_numbers = #tpu.dot_dimension_numbers<[2], [1], [1], [2], [0, 0, 0, 1, 1, 2], [0], [0]>} : vector<2x8x8xf32>, vector<2x8x8xf32>, vector<2x8x8xf32> -> vector<2x8x8xf32>
    "tpu.trace_stop"() : () -> ()
    %270 = vector.shape_cast %269 : vector<2x8x8xf32> to vector<16x8xf32>
    %271 = vector.extract_strided_slice %224 {offsets = [0, 16], sizes = [16, 8], strides = [1, 1]} : vector<16x96xf32> to vector<16x8xf32>
    %272 = vector.shape_cast %271 : vector<16x8xf32> to vector<2x8x8xf32>
    %273 = vector.extract_strided_slice %224 {offsets = [0, 48], sizes = [16, 8], strides = [1, 1]} : vector<16x96xf32> to vector<16x8xf32>
    %274 = vector.shape_cast %273 : vector<16x8xf32> to vector<2x8x8xf32>
    %275 = vector.extract_strided_slice %224 {offsets = [0, 80], sizes = [16, 8], strides = [1, 1]} : vector<16x96xf32> to vector<16x8xf32>
    %276 = vector.shape_cast %275 : vector<16x8xf32> to vector<2x8x8xf32>
    "tpu.trace_start"() <{level = 10 : i32, message = "bqd,bkd->bqk"}> : () -> ()
    %cst_104 = arith.constant dense<0.000000e+00> : vector<2x8x8xf32>
    %277 = tpu.matmul %272, %274, %cst_104 {dimension_numbers = #tpu.dot_dimension_numbers<[2], [2], [1], [1], [0, 0, 0, 1, 1, 1], [0], [0]>} : vector<2x8x8xf32>, vector<2x8x8xf32>, vector<2x8x8xf32> -> vector<2x8x8xf32>
    "tpu.trace_stop"() : () -> ()
    %cst_105 = arith.constant 0.353553385 : f32
    %278 = vector.broadcast %cst_105 : f32 to vector<2x8x8xf32>
    %279 = arith.mulf %277, %278 : vector<2x8x8xf32>
    %280 = vector.broadcast %29 : vector<2x1x8xf32> to vector<2x8x8xf32>
    %281 = arith.addf %279, %280 : vector<2x8x8xf32>
    %cst_106 = arith.constant dense<0xFF800000> : vector<2x8xf32>
    %282 = vector.multi_reduction <maximumf>, %281, %cst_106 [2] : vector<2x8x8xf32> to vector<2x8xf32>
    %283 = vector.shape_cast %282 : vector<2x8xf32> to vector<2x8x1xf32>
    %284 = vector.broadcast %283 : vector<2x8x1xf32> to vector<2x8x8xf32>
    %285 = arith.subf %281, %284 : vector<2x8x8xf32>
    %286 = math.exp %285 : vector<2x8x8xf32>
    %cst_107 = arith.constant dense<0.000000e+00> : vector<2x8xf32>
    %287 = vector.multi_reduction <add>, %286, %cst_107 [2] : vector<2x8x8xf32> to vector<2x8xf32>
    %288 = vector.shape_cast %287 : vector<2x8xf32> to vector<2x8x1xf32>
    %289 = tpu.reciprocal %288 {approx = true} : vector<2x8x1xf32> -> vector<2x8x1xf32>
    %290 = vector.broadcast %289 : vector<2x8x1xf32> to vector<2x8x8xf32>
    %291 = arith.mulf %286, %290 : vector<2x8x8xf32>
    "tpu.trace_start"() <{level = 10 : i32, message = "bqk,bkd->bqd"}> : () -> ()
    %cst_108 = arith.constant dense<0.000000e+00> : vector<2x8x8xf32>
    %292 = tpu.matmul %291, %276, %cst_108 {dimension_numbers = #tpu.dot_dimension_numbers<[2], [1], [1], [2], [0, 0, 0, 1, 1, 2], [0], [0]>} : vector<2x8x8xf32>, vector<2x8x8xf32>, vector<2x8x8xf32> -> vector<2x8x8xf32>
    "tpu.trace_stop"() : () -> ()
    %293 = vector.shape_cast %292 : vector<2x8x8xf32> to vector<16x8xf32>
    %294 = vector.extract_strided_slice %224 {offsets = [0, 24], sizes = [16, 8], strides = [1, 1]} : vector<16x96xf32> to vector<16x8xf32>
    %295 = vector.shape_cast %294 : vector<16x8xf32> to vector<2x8x8xf32>
    %296 = vector.extract_strided_slice %224 {offsets = [0, 56], sizes = [16, 8], strides = [1, 1]} : vector<16x96xf32> to vector<16x8xf32>
    %297 = vector.shape_cast %296 : vector<16x8xf32> to vector<2x8x8xf32>
    %298 = vector.extract_strided_slice %224 {offsets = [0, 88], sizes = [16, 8], strides = [1, 1]} : vector<16x96xf32> to vector<16x8xf32>
    %299 = vector.shape_cast %298 : vector<16x8xf32> to vector<2x8x8xf32>
    "tpu.trace_start"() <{level = 10 : i32, message = "bqd,bkd->bqk"}> : () -> ()
    %cst_109 = arith.constant dense<0.000000e+00> : vector<2x8x8xf32>
    %300 = tpu.matmul %295, %297, %cst_109 {dimension_numbers = #tpu.dot_dimension_numbers<[2], [2], [1], [1], [0, 0, 0, 1, 1, 1], [0], [0]>} : vector<2x8x8xf32>, vector<2x8x8xf32>, vector<2x8x8xf32> -> vector<2x8x8xf32>
    "tpu.trace_stop"() : () -> ()
    %cst_110 = arith.constant 0.353553385 : f32
    %301 = vector.broadcast %cst_110 : f32 to vector<2x8x8xf32>
    %302 = arith.mulf %300, %301 : vector<2x8x8xf32>
    %303 = vector.broadcast %29 : vector<2x1x8xf32> to vector<2x8x8xf32>
    %304 = arith.addf %302, %303 : vector<2x8x8xf32>
    %cst_111 = arith.constant dense<0xFF800000> : vector<2x8xf32>
    %305 = vector.multi_reduction <maximumf>, %304, %cst_111 [2] : vector<2x8x8xf32> to vector<2x8xf32>
    %306 = vector.shape_cast %305 : vector<2x8xf32> to vector<2x8x1xf32>
    %307 = vector.broadcast %306 : vector<2x8x1xf32> to vector<2x8x8xf32>
    %308 = arith.subf %304, %307 : vector<2x8x8xf32>
    %309 = math.exp %308 : vector<2x8x8xf32>
    %cst_112 = arith.constant dense<0.000000e+00> : vector<2x8xf32>
    %310 = vector.multi_reduction <add>, %309, %cst_112 [2] : vector<2x8x8xf32> to vector<2x8xf32>
    %311 = vector.shape_cast %310 : vector<2x8xf32> to vector<2x8x1xf32>
    %312 = tpu.reciprocal %311 {approx = true} : vector<2x8x1xf32> -> vector<2x8x1xf32>
    %313 = vector.broadcast %312 : vector<2x8x1xf32> to vector<2x8x8xf32>
    %314 = arith.mulf %309, %313 : vector<2x8x8xf32>
    "tpu.trace_start"() <{level = 10 : i32, message = "bqk,bkd->bqd"}> : () -> ()
    %cst_113 = arith.constant dense<0.000000e+00> : vector<2x8x8xf32>
    %315 = tpu.matmul %314, %299, %cst_113 {dimension_numbers = #tpu.dot_dimension_numbers<[2], [1], [1], [2], [0, 0, 0, 1, 1, 2], [0], [0]>} : vector<2x8x8xf32>, vector<2x8x8xf32>, vector<2x8x8xf32> -> vector<2x8x8xf32>
    "tpu.trace_stop"() : () -> ()
    %316 = vector.shape_cast %315 : vector<2x8x8xf32> to vector<16x8xf32>
    %317 = tpu.concatenate %247, %270, %293, %316 in 1 : vector<16x8xf32>, vector<16x8xf32>, vector<16x8xf32>, vector<16x8xf32> -> vector<16x32xf32>
    %c1_114 = arith.constant 1 : index
    %c0_115 = arith.constant 0 : index
    %c0_116 = arith.constant 0 : index
    %318 = vector.load %arg7[%c1_114, %c0_115, %c0_116] : memref<2x32x32xf32, #tpu.memory_space<vmem>>, vector<1x32x32xf32>
    %319 = vector.shape_cast %318 : vector<1x32x32xf32> to vector<32x32xf32>
    %cst_117 = arith.constant dense<0.000000e+00> : vector<16x32xf32>
    %320 = tpu.matmul %317, %319, %cst_117 {dimension_numbers = #tpu.dot_dimension_numbers<[1], [0], [0], [1], [0, 0, 1, 1], [], []>} : vector<16x32xf32>, vector<32x32xf32>, vector<16x32xf32> -> vector<16x32xf32>
    %c1_118 = arith.constant 1 : index
    %c0_119 = arith.constant 0 : index
    %c0_120 = arith.constant 0 : index
    %321 = vector.load %arg8[%c1_118, %c0_119, %c0_120] : memref<2x1x32xf32, #tpu.memory_space<vmem>>, vector<1x1x32xf32>
    %322 = vector.shape_cast %321 : vector<1x1x32xf32> to vector<1x32xf32>
    %323 = vector.broadcast %322 : vector<1x32xf32> to vector<16x32xf32>
    %324 = arith.addf %320, %323 : vector<16x32xf32>
    %325 = arith.addf %324, %217 : vector<16x32xf32>
    %c1_121 = arith.constant 1 : index
    %c0_122 = arith.constant 0 : index
    %c0_123 = arith.constant 0 : index
    %326 = vector.load %arg9[%c1_121, %c0_122, %c0_123] : memref<2x1x32xf32, #tpu.memory_space<vmem>>, vector<1x1x32xf32>
    %327 = vector.shape_cast %326 : vector<1x1x32xf32> to vector<1x32xf32>
    %c1_124 = arith.constant 1 : index
    %c0_125 = arith.constant 0 : index
    %c0_126 = arith.constant 0 : index
    %328 = vector.load %arg10[%c1_124, %c0_125, %c0_126] : memref<2x1x32xf32, #tpu.memory_space<vmem>>, vector<1x1x32xf32>
    %329 = vector.shape_cast %328 : vector<1x1x32xf32> to vector<1x32xf32>
    %cst_127 = arith.constant dense<0.000000e+00> : vector<16xf32>
    %330 = vector.multi_reduction <add>, %325, %cst_127 [1] : vector<16x32xf32> to vector<16xf32>
    %331 = vector.shape_cast %330 : vector<16xf32> to vector<16x1xf32>
    %cst_128 = arith.constant 3.200000e+01 : f32
    %332 = vector.broadcast %cst_128 : f32 to vector<16x1xf32>
    %333 = arith.divf %331, %332 : vector<16x1xf32>
    %334 = vector.broadcast %333 : vector<16x1xf32> to vector<16x32xf32>
    %335 = arith.subf %325, %334 : vector<16x32xf32>
    %336 = arith.mulf %335, %335 : vector<16x32xf32>
    %cst_129 = arith.constant dense<0.000000e+00> : vector<16xf32>
    %337 = vector.multi_reduction <add>, %336, %cst_129 [1] : vector<16x32xf32> to vector<16xf32>
    %338 = vector.shape_cast %337 : vector<16xf32> to vector<16x1xf32>
    %cst_130 = arith.constant 3.200000e+01 : f32
    %339 = vector.broadcast %cst_130 : f32 to vector<16x1xf32>
    %340 = arith.divf %338, %339 : vector<16x1xf32>
    %341 = vector.broadcast %333 : vector<16x1xf32> to vector<16x32xf32>
    %342 = arith.subf %325, %341 : vector<16x32xf32>
    %cst_131 = arith.constant 9.99999974E-6 : f32
    %343 = vector.broadcast %cst_131 : f32 to vector<16x1xf32>
    %344 = arith.addf %340, %343 : vector<16x1xf32>
    %345 = math.rsqrt %344 : vector<16x1xf32>
    %346 = vector.broadcast %345 : vector<16x1xf32> to vector<16x32xf32>
    %347 = arith.mulf %342, %346 : vector<16x32xf32>
    %348 = vector.broadcast %327 : vector<1x32xf32> to vector<16x32xf32>
    %349 = arith.mulf %347, %348 : vector<16x32xf32>
    %350 = vector.broadcast %329 : vector<1x32xf32> to vector<16x32xf32>
    %351 = arith.addf %349, %350 : vector<16x32xf32>
    %c1_132 = arith.constant 1 : index
    %c0_133 = arith.constant 0 : index
    %c0_134 = arith.constant 0 : index
    %352 = vector.load %arg11[%c1_132, %c0_133, %c0_134] : memref<2x32x64xf32, #tpu.memory_space<vmem>>, vector<1x32x64xf32>
    %353 = vector.shape_cast %352 : vector<1x32x64xf32> to vector<32x64xf32>
    %cst_135 = arith.constant dense<0.000000e+00> : vector<16x64xf32>
    %354 = tpu.matmul %351, %353, %cst_135 {dimension_numbers = #tpu.dot_dimension_numbers<[1], [0], [0], [1], [0, 0, 1, 1], [], []>} : vector<16x32xf32>, vector<32x64xf32>, vector<16x64xf32> -> vector<16x64xf32>
    %c1_136 = arith.constant 1 : index
    %c0_137 = arith.constant 0 : index
    %c0_138 = arith.constant 0 : index
    %355 = vector.load %arg12[%c1_136, %c0_137, %c0_138] : memref<2x1x64xf32, #tpu.memory_space<vmem>>, vector<1x1x64xf32>
    %356 = vector.shape_cast %355 : vector<1x1x64xf32> to vector<1x64xf32>
    %357 = vector.broadcast %356 : vector<1x64xf32> to vector<16x64xf32>
    %358 = arith.addf %354, %357 : vector<16x64xf32>
    %359 = arith.mulf %358, %358 : vector<16x64xf32>
    %360 = arith.mulf %358, %359 : vector<16x64xf32>
    %cst_139 = arith.constant 4.471500e-02 : f32
    %361 = vector.broadcast %cst_139 : f32 to vector<16x64xf32>
    %362 = arith.mulf %361, %360 : vector<16x64xf32>
    %363 = arith.addf %358, %362 : vector<16x64xf32>
    %cst_140 = arith.constant 0.797884583 : f32
    %364 = vector.broadcast %cst_140 : f32 to vector<16x64xf32>
    %365 = arith.mulf %364, %363 : vector<16x64xf32>
    %366 = math.tanh %365 : vector<16x64xf32>
    %cst_141 = arith.constant 1.000000e+00 : f32
    %367 = vector.broadcast %cst_141 : f32 to vector<16x64xf32>
    %368 = arith.addf %367, %366 : vector<16x64xf32>
    %cst_142 = arith.constant 5.000000e-01 : f32
    %369 = vector.broadcast %cst_142 : f32 to vector<16x64xf32>
    %370 = arith.mulf %369, %368 : vector<16x64xf32>
    %371 = arith.mulf %358, %370 : vector<16x64xf32>
    %c1_143 = arith.constant 1 : index
    %c0_144 = arith.constant 0 : index
    %c0_145 = arith.constant 0 : index
    %372 = vector.load %arg13[%c1_143, %c0_144, %c0_145] : memref<2x64x32xf32, #tpu.memory_space<vmem>>, vector<1x64x32xf32>
    %373 = vector.shape_cast %372 : vector<1x64x32xf32> to vector<64x32xf32>
    %cst_146 = arith.constant dense<0.000000e+00> : vector<16x32xf32>
    %374 = tpu.matmul %371, %373, %cst_146 {dimension_numbers = #tpu.dot_dimension_numbers<[1], [0], [0], [1], [0, 0, 1, 1], [], []>} : vector<16x64xf32>, vector<64x32xf32>, vector<16x32xf32> -> vector<16x32xf32>
    %c1_147 = arith.constant 1 : index
    %c0_148 = arith.constant 0 : index
    %c0_149 = arith.constant 0 : index
    %375 = vector.load %arg14[%c1_147, %c0_148, %c0_149] : memref<2x1x32xf32, #tpu.memory_space<vmem>>, vector<1x1x32xf32>
    %376 = vector.shape_cast %375 : vector<1x1x32xf32> to vector<1x32xf32>
    %377 = vector.broadcast %376 : vector<1x32xf32> to vector<16x32xf32>
    %378 = arith.addf %374, %377 : vector<16x32xf32>
    %379 = arith.addf %378, %351 : vector<16x32xf32>
    %c1_150 = arith.constant 1 : index
    %c0_151 = arith.constant 0 : index
    %c0_152 = arith.constant 0 : index
    %380 = vector.load %arg15[%c1_150, %c0_151, %c0_152] : memref<2x1x32xf32, #tpu.memory_space<vmem>>, vector<1x1x32xf32>
    %381 = vector.shape_cast %380 : vector<1x1x32xf32> to vector<1x32xf32>
    %c1_153 = arith.constant 1 : index
    %c0_154 = arith.constant 0 : index
    %c0_155 = arith.constant 0 : index
    %382 = vector.load %arg16[%c1_153, %c0_154, %c0_155] : memref<2x1x32xf32, #tpu.memory_space<vmem>>, vector<1x1x32xf32>
    %383 = vector.shape_cast %382 : vector<1x1x32xf32> to vector<1x32xf32>
    %cst_156 = arith.constant dense<0.000000e+00> : vector<16xf32>
    %384 = vector.multi_reduction <add>, %379, %cst_156 [1] : vector<16x32xf32> to vector<16xf32>
    %385 = vector.shape_cast %384 : vector<16xf32> to vector<16x1xf32>
    %cst_157 = arith.constant 3.200000e+01 : f32
    %386 = vector.broadcast %cst_157 : f32 to vector<16x1xf32>
    %387 = arith.divf %385, %386 : vector<16x1xf32>
    %388 = vector.broadcast %387 : vector<16x1xf32> to vector<16x32xf32>
    %389 = arith.subf %379, %388 : vector<16x32xf32>
    %390 = arith.mulf %389, %389 : vector<16x32xf32>
    %cst_158 = arith.constant dense<0.000000e+00> : vector<16xf32>
    %391 = vector.multi_reduction <add>, %390, %cst_158 [1] : vector<16x32xf32> to vector<16xf32>
    %392 = vector.shape_cast %391 : vector<16xf32> to vector<16x1xf32>
    %cst_159 = arith.constant 3.200000e+01 : f32
    %393 = vector.broadcast %cst_159 : f32 to vector<16x1xf32>
    %394 = arith.divf %392, %393 : vector<16x1xf32>
    %395 = vector.broadcast %387 : vector<16x1xf32> to vector<16x32xf32>
    %396 = arith.subf %379, %395 : vector<16x32xf32>
    %cst_160 = arith.constant 9.99999974E-6 : f32
    %397 = vector.broadcast %cst_160 : f32 to vector<16x1xf32>
    %398 = arith.addf %394, %397 : vector<16x1xf32>
    %399 = math.rsqrt %398 : vector<16x1xf32>
    %400 = vector.broadcast %399 : vector<16x1xf32> to vector<16x32xf32>
    %401 = arith.mulf %396, %400 : vector<16x32xf32>
    %402 = vector.broadcast %381 : vector<1x32xf32> to vector<16x32xf32>
    %403 = arith.mulf %401, %402 : vector<16x32xf32>
    %404 = vector.broadcast %383 : vector<1x32xf32> to vector<16x32xf32>
    %405 = arith.addf %403, %404 : vector<16x32xf32>
    %c0_161 = arith.constant 0 : index
    %c0_162 = arith.constant 0 : index
    %c0_163 = arith.constant 0 : index
    %406 = vector.load %arg2[%c0_161, %c0_162, %c0_163] : memref<2x8x1xf32, #tpu.memory_space<vmem>>, vector<2x8x1xf32>
    %407 = vector.shape_cast %405 : vector<16x32xf32> to vector<2x8x32xf32>
    %408 = vector.broadcast %406 : vector<2x8x1xf32> to vector<2x8x32xf32>
    %409 = arith.mulf %407, %408 : vector<2x8x32xf32>
    %cst_164 = arith.constant dense<0.000000e+00> : vector<2x32xf32>
    %410 = vector.multi_reduction <add>, %409, %cst_164 [1] : vector<2x8x32xf32> to vector<2x32xf32>
    %411 = vector.shape_cast %406 : vector<2x8x1xf32> to vector<1x2x8x1xf32>
    %cst_165 = arith.constant dense<0.000000e+00> : vector<1xf32>
    %412 = vector.multi_reduction <add>, %411, %cst_165 [1, 2, 3] : vector<1x2x8x1xf32> to vector<1xf32>
    %413 = vector.shape_cast %412 : vector<1xf32> to vector<1x1x1x1xf32>
    %414 = vector.extract %413[0, 0, 0, 0] : f32 from vector<1x1x1x1xf32>
    %415 = vector.broadcast %414 : f32 to vector<2x32xf32>
    %416 = arith.divf %410, %415 : vector<2x32xf32>
    %c0_166 = arith.constant 0 : index
    %c0_167 = arith.constant 0 : index
    %417 = vector.load %arg17[%c0_166, %c0_167] : memref<1x32xf32, #tpu.memory_space<vmem>>, vector<1x32xf32>
    %418 = vector.broadcast %417 : vector<1x32xf32> to vector<2x32xf32>
    %419 = arith.mulf %416, %418 : vector<2x32xf32>
    %cst_168 = arith.constant dense<0.000000e+00> : vector<2xf32>
    %420 = vector.multi_reduction <add>, %419, %cst_168 [1] : vector<2x32xf32> to vector<2xf32>
    %421 = vector.shape_cast %420 : vector<2xf32> to vector<2x1xf32>
    %c0_169 = arith.constant 0 : index
    %c0_170 = arith.constant 0 : index
    %422 = vector.load %arg18[%c0_169, %c0_170] : memref<1x1xf32, #tpu.memory_space<vmem>>, vector<1x1xf32>
    %423 = vector.broadcast %422 : vector<1x1xf32> to vector<2x1xf32>
    %424 = arith.addf %421, %423 : vector<2x1xf32>
    %c0_171 = arith.constant 0 : index
    %c0_172 = arith.constant 0 : index
    %425 = vector.load %arg19[%c0_171, %c0_172] : memref<2x1xf32, #tpu.memory_space<vmem>>, vector<2x1xf32>
    tpu.vector_store %arg19[%c0_171, %c0_172], %424 {strides = array<i32>} : memref<2x1xf32, #tpu.memory_space<vmem>>, vector<2x1xf32>,
    return
  }
}

</mosaic_0001>

<llo_original>
// kernel: forward.1
$region0: #{forward.1}
  #allocation0 [shape = 'u32[]', space=smem, size = 0x4, offset = 0x4, fixed_abs, tag = 'smem constant byte address 0x4 - core index']
  #allocation1 [shape = 'u32[144,128]{1,0:T(1,128)}', space=vmem, size = 0x12000, scoped, tag = 'internal scratch']
  #allocation2 [shape = 'f32[1,1]{1,0:T(1,128)S(1)}', space=vmem, size = 0x200, scoped, tag = 'scoped memory for forward.1']
  %s0 = inlined_call_operand.vmem [shape: f32[16,32], index: 0, kind: input, shape index: {}]
  %s1 = inlined_call_operand.vmem [shape: f32[2,1,8], index: 1, kind: input, shape index: {}]
  %s2 = inlined_call_operand.vmem [shape: f32[2,8,1], index: 2, kind: input, shape index: {}]
  %s3 = inlined_call_operand.vmem [shape: f32[1,32], index: 3, kind: input, shape index: {}]
  %s4 = inlined_call_operand.vmem [shape: f32[1,32], index: 4, kind: input, shape index: {}]
  %s5 = inlined_call_operand.vmem [shape: f32[2,32,96], index: 5, kind: input, shape index: {}]
  %s6 = inlined_call_operand.vmem [shape: f32[2,1,96], index: 6, kind: input, shape index: {}]
  %s7 = inlined_call_operand.vmem [shape: f32[2,32,32], index: 7, kind: input, shape index: {}]
  %s8 = inlined_call_operand.vmem [shape: f32[2,1,32], index: 8, kind: input, shape index: {}]
  %s9 = inlined_call_operand.vmem [shape: f32[2,1,32], index: 9, kind: input, shape index: {}]
  %s10 = inlined_call_operand.vmem [shape: f32[2,1,32], index: 10, kind: input, shape index: {}]
  %s11 = inlined_call_operand.vmem [shape: f32[2,32,64], index: 11, kind: input, shape index: {}]
  %s12 = inlined_call_operand.vmem [shape: f32[2,1,64], index: 12, kind: input, shape index: {}]
  %s13 = inlined_call_operand.vmem [shape: f32[2,64,32], index: 13, kind: input, shape index: {}]
  %s14 = inlined_call_operand.vmem [shape: f32[2,1,32], index: 14, kind: input, shape index: {}]
  %s15 = inlined_call_operand.vmem [shape: f32[2,1,32], index: 15, kind: input, shape index: {}]
  %s16 = inlined_call_operand.vmem [shape: f32[2,1,32], index: 16, kind: input, shape index: {}]
  %s17 = inlined_call_operand.vmem [shape: f32[1,32], index: 17, kind: input, shape index: {}]
  %s18 = inlined_call_operand.<no memory space> [shape: f32[1,1], index: 18, kind: input, shape index: {}]
  %s19 = inlined_call_operand.vmem [shape: f32[2,1], index: 19, kind: output, shape index: {}]
  %s20 = sld [smem:[#allocation0]]
  $region86: #{forward.1} parent=0
    _
  %s22 = ssub.s32 1, %s20
  %s23 = scalar_select 0, %s22, %s20
  %v24 = vstv %s18
  %25 = vst [vmem:[#allocation2] sm:$0x1] %v24
  // Predicated region
  $region2: #{forward.1} parent=0 // pred_check
    _
  $region3: #{forward.1} parent=0 // pred_check_branch
    %27 = sbr.rel (0) target = $region5
  $region4: #{forward.1} parent=0 // pred_region
    _
  $region5: #{forward.1} parent=0 // pred_fallthru
    _
  // Predicated region
  $region6: #{forward.1} parent=0 // pred_check
    _
  $region7: #{forward.1} parent=0 // pred_check_branch
    %29 = sbr.rel (0) target = $region9
  $region8: #{forward.1} parent=0 // pred_region
    _
  $region9: #{forward.1} parent=0 // pred_fallthru
    _
  // Predicated region
  $region10: #{forward.1} parent=0 // pred_check
    _
  $region11: #{forward.1} parent=0 // pred_check_branch
    %31 = sbr.rel (0) target = $region13
  $region12: #{forward.1} parent=0 // pred_region
    _
  $region13: #{forward.1} parent=0 // pred_fallthru
    _
  // Predicated region
  $region14: #{forward.1} parent=0 // pred_check
    _
  $region15: #{forward.1} parent=0 // pred_check_branch
    %33 = sbr.rel (0) target = $region17
  $region16: #{forward.1} parent=0 // pred_region
    _
  $region17: #{forward.1} parent=0 // pred_fallthru
    _
  // Predicated region
  $region18: #{forward.1} parent=0 // pred_check
    _
  $region19: #{forward.1} parent=0 // pred_check_branch
    %35 = sbr.rel (0) target = $region21
  $region20: #{forward.1} parent=0 // pred_region
    _
  $region21: #{forward.1} parent=0 // pred_fallthru
    _
  // Predicated region
  $region22: #{forward.1} parent=0 // pred_check
    _
  $region23: #{forward.1} parent=0 // pred_check_branch
    %37 = sbr.rel (0) target = $region25
  $region24: #{forward.1} parent=0 // pred_region
    _
  $region25: #{forward.1} parent=0 // pred_fallthru
    _
  // Predicated region
  $region26: #{forward.1} parent=0 // pred_check
    _
  $region27: #{forward.1} parent=0 // pred_check_branch
    %39 = sbr.rel (0) target = $region29
  $region28: #{forward.1} parent=0 // pred_region
    _
  $region29: #{forward.1} parent=0 // pred_fallthru
    _
  // Predicated region
  $region30: #{forward.1} parent=0 // pred_check
    _
  $region31: #{forward.1} parent=0 // pred_check_branch
    %41 = sbr.rel (0) target = $region33
  $region32: #{forward.1} parent=0 // pred_region
    _
  $region33: #{forward.1} parent=0 // pred_fallthru
    _
  // Predicated region
  $region34: #{forward.1} parent=0 // pred_check
    _
  $region35: #{forward.1} parent=0 // pred_check_branch
    %43 = sbr.rel (0) target = $region37
  $region36: #{forward.1} parent=0 // pred_region
    _
  $region37: #{forward.1} parent=0 // pred_fallthru
    _
  // Predicated region
  $region38: #{forward.1} parent=0 // pred_check
    _
  $region39: #{forward.1} parent=0 // pred_check_branch
    %45 = sbr.rel (0) target = $region41
  $region40: #{forward.1} parent=0 // pred_region
    _
  $region41: #{forward.1} parent=0 // pred_fallthru
    _
  // Predicated region
  $region42: #{forward.1} parent=0 // pred_check
    _
  $region43: #{forward.1} parent=0 // pred_check_branch
    %47 = sbr.rel (0) target = $region45
  $region44: #{forward.1} parent=0 // pred_region
    _
  $region45: #{forward.1} parent=0 // pred_fallthru
    _
  // Predicated region
  $region46: #{forward.1} parent=0 // pred_check
    _
  $region47: #{forward.1} parent=0 // pred_check_branch
    %49 = sbr.rel (0) target = $region49
  $region48: #{forward.1} parent=0 // pred_region
    _
  $region49: #{forward.1} parent=0 // pred_fallthru
    _
  // Predicated region
  $region50: #{forward.1} parent=0 // pred_check
    _
  $region51: #{forward.1} parent=0 // pred_check_branch
    %51 = sbr.rel (0) target = $region53
  $region52: #{forward.1} parent=0 // pred_region
    _
  $region53: #{forward.1} parent=0 // pred_fallthru
    _
  // Predicated region
  $region54: #{forward.1} parent=0 // pred_check
    _
  $region55: #{forward.1} parent=0 // pred_check_branch
    %53 = sbr.rel (0) target = $region57
  $region56: #{forward.1} parent=0 // pred_region
    _
  $region57: #{forward.1} parent=0 // pred_fallthru
    _
  // Predicated region
  $region58: #{forward.1} parent=0 // pred_check
    _
  $region59: #{forward.1} parent=0 // pred_check_branch
    %55 = sbr.rel (0) target = $region61
  $region60: #{forward.1} parent=0 // pred_region
    _
  $region61: #{forward.1} parent=0 // pred_fallthru
    _
  // Predicated region
  $region62: #{forward.1} parent=0 // pred_check
    _
  $region63: #{forward.1} parent=0 // pred_check_branch
    %57 = sbr.rel (0) target = $region65
  $region64: #{forward.1} parent=0 // pred_region
    _
  $region65: #{forward.1} parent=0 // pred_fallthru
    _
  // Predicated region
  $region66: #{forward.1} parent=0 // pred_check
    _
  $region67: #{forward.1} parent=0 // pred_check_branch
    %59 = sbr.rel (0) target = $region69
  $region68: #{forward.1} parent=0 // pred_region
    _
  $region69: #{forward.1} parent=0 // pred_fallthru
    _
  // Predicated region
  $region70: #{forward.1} parent=0 // pred_check
    _
  $region71: #{forward.1} parent=0 // pred_check_branch
    %61 = sbr.rel (0) target = $region73
  $region72: #{forward.1} parent=0 // pred_region
    _
  $region73: #{forward.1} parent=0 // pred_fallthru
    _
  // Predicated region
  $region74: #{forward.1} parent=0 // pred_check
    _
  $region75: #{forward.1} parent=0 // pred_check_branch
    %63 = sbr.rel (0) target = $region77
  $region76: #{forward.1} parent=0 // pred_region
    _
  $region77: #{forward.1} parent=0 // pred_fallthru
    _
  %v64 = vld [vmem:[%s0] sm:$0xff]
  %v65 = vld [vmem:[%s0 + $0x8] sm:$0xff]
  %v66 = vld [vmem:[%s3] sm:$0x1]
  %v67 = vld [vmem:[%s4] sm:$0x1]
  %vm68 = vcmask 261120
  %v69 = vsel %vm68, %v64, 0.0
  %70 = vadd.xlane.f32.xlu0 %v69
  %v71 = vpop.xlane.xlu0 %70
  %v72 = vsel %vm68, %v65, 0.0
  %73 = vadd.xlane.f32.xlu0 %v72
  %v74 = vpop.xlane.xlu0 %73
  %v75 = vrcp.pop 32.0
  %v76 = vmul.f32 %v71, %v75
  %v77 = vmul.f32 %v74, %v75
  %v78 = vsub.f32 %v64, %v76
  %v79 = vsub.f32 %v65, %v77
  %v80 = vmul.f32 %v78, %v78
  %v81 = vmul.f32 %v79, %v79
  %v82 = vsel %vm68, %v80, 0.0
  %83 = vadd.xlane.f32.xlu0 %v82
  %v84 = vpop.xlane.xlu0 %83
  %v85 = vsel %vm68, %v81, 0.0
  %86 = vadd.xlane.f32.xlu0 %v85
  %v87 = vpop.xlane.xlu0 %86
  %v88 = vmul.f32 %v84, %v75
  %v89 = vmul.f32 %v87, %v75
  %v90 = vadd.f32 %v88, 1e-05
  %v91 = vadd.f32 %v89, 1e-05
  %v92 = vrsqrt.pop %v90
  %v93 = vrsqrt.pop %v91
  %v94 = vmul.f32 %v78, %v92
  %v95 = vmul.f32 %v79, %v93
  %v97 = vlaneseq
  %v98 = vshrl.u32 %v97, 7
  %v99 = vsub.s32 0, %v98
  %v100 = vrot.slane %v66, %v99
  %v102 = vmul.f32 %v94, %v100
  %v103 = vmul.f32 %v95, %v100
  %v105 = vlaneseq
  %v106 = vshrl.u32 %v105, 7
  %v107 = vsub.s32 0, %v106
  %v108 = vrot.slane %v67, %v107
  %v110 = vadd.f32 %v102, %v108
  %v111 = vadd.f32 %v103, %v108
  %v112 = vld [vmem:[%s1] sm:$0x1]
  %v113 = vld [vmem:[%s1 + $0x1] sm:$0x1]
  %v114 = vsub.f32 1.0, %v112
  %v115 = vsub.f32 1.0, %v113
  %v116 = vmul.f32 %v114, -1e+09
  %v117 = vmul.f32 %v115, -1e+09
  %v118 = vld [vmem:[%s5] sm:$0xff]
  %v119 = vld [vmem:[%s5 + $0x8] sm:$0xff]
  %v120 = vld [vmem:[%s5 + $0x10] sm:$0xff]
  %v121 = vld [vmem:[%s5 + $0x18] sm:$0xff]
  %v122 = vld [vmem:[%s6] sm:$0x1]
  %v124 = vlaneseq
  %v125 = vshrl.u32 %v124, 7
  %v126 = vsub.s32 0, %v125
  %v127 = vrot.slane %v122, %v126
  %v130 = vsel %vm68, %v110, 0
  %v133 = vsel %vm68, %v111, 0
  %135 = vmatprep.subr.mxu0 0.0
  %136 = vmatpush1.msra.mxu0 %v118
  %137 = vmatprep.subr.mxu0 0.0
  %138 = vmatpush1.msra.mxu0 %v119
  %139 = vmatprep.subr.mxu0 0.0
  %140 = vmatpush1.msra.mxu0 %v120
  %141 = vmatprep.subr.mxu0 0.0
  %142 = vmatpush1.msra.mxu0 %v121
  %143 = vmatprep.subr.mxu0 0.0
  %144 = vmatpush1.msra.mxu0 0.0
  %145 = vmatprep.subr.mxu0 0.0
  %146 = vmatpush1.msra.mxu0 0.0
  %147 = vmatprep.subr.mxu0 0.0
  %148 = vmatpush1.msra.mxu0 0.0
  %149 = vmatprep.subr.mxu0 0.0
  %150 = vmatpush1.msra.mxu0 0.0
  %151 = vmatprep.subr.mxu0 0.0
  %152 = vmatpush1.msra.mxu0 0.0
  %153 = vmatprep.subr.mxu0 0.0
  %154 = vmatpush1.msra.mxu0 0.0
  %155 = vmatprep.subr.mxu0 0.0
  %156 = vmatpush1.msra.mxu0 0.0
  %157 = vmatprep.subr.mxu0 0.0
  %158 = vmatpush1.msra.mxu0 0.0
  %159 = vmatprep.subr.mxu0 0.0
  %160 = vmatpush1.msra.mxu0 0.0
  %161 = vmatprep.subr.mxu0 0.0
  %162 = vmatpush1.msra.mxu0 0.0
  %163 = vmatprep.subr.mxu0 0.0
  %164 = vmatpush1.msra.mxu0 0.0
  %165 = vmatprep.subr.mxu0 0.0
  %166 = vmatpush1.msra.mxu0 0.0
  %167 = vmatprep.subr.mxu0 0.0
  %168 = vmatpush1.msra.mxu0 0.0
  %169 = vmatprep.subr.mxu0 0.0
  %170 = vmatpush1.msra.mxu0 0.0
  %171 = vmatprep.subr.mxu0 0.0
  %172 = vmatpush1.msra.mxu0 0.0
  %173 = vmatprep.subr.mxu0 0.0
  %174 = vmatpush1.msra.mxu0 0.0
  %175 = vmatprep.subr.mxu0 0.0
  %176 = vmatpush1.msra.mxu0 0.0
  %177 = vmatprep.subr.mxu0 0.0
  %178 = vmatpush1.msra.mxu0 0.0
  %179 = vmatprep.subr.mxu0 0.0
  %180 = vmatpush1.msra.mxu0 0.0
  %181 = vmatprep.subr.mxu0 0.0
  %182 = vmatpush1.msra.mxu0 0.0
  %183 = vmatprep.subr.mxu0 0.0
  %184 = vmatpush1.msra.mxu0 0.0
  %185 = vmatprep.subr.mxu0 0.0
  %186 = vmatpush1.msra.mxu0 0.0
  %187 = vmatprep.subr.mxu0 0.0
  %188 = vmatpush1.msra.mxu0 0.0
  %189 = vmatprep.subr.mxu0 0.0
  %190 = vmatpush1.msra.mxu0 0.0
  %191 = vmatprep.subr.mxu0 0.0
  %192 = vmatpush1.msra.mxu0 0.0
  %193 = vmatprep.subr.mxu0 0.0
  %194 = vmatpush1.msra.mxu0 0.0
  %195 = vmatprep.subr.mxu0 0.0
  %196 = vmatpush1.msra.mxu0 0.0
  %197 = vmatprep.subr.mxu0 0.0
  %198 = vmatpush1.msra.mxu0 0.0
  %199 = vmatprep.mubr.f32.mxu0 0.0
  %200 = vmatmul.mubr.f32.gmra.mrb[0].mxu0 %v130
  %v201 = vpop.f32.mrb[0].mxu0
  %v202 = vadd.f32 %v127, %v201
  %v203 = vpop.f32.mrb[0].mxu0
  %204 = vmatprep.mubr.f32.mxu0 0.0
  %205 = vmatmul.mubr.f32.gmra.mrb[0].mxu0 %v133
  %v206 = vpop.f32.mrb[0].mxu0
  %v207 = vadd.f32 %v127, %v206
  %v208 = vpop.f32.mrb[0].mxu0
  %209 = vdwg.mxu0
  %211 = vrot.lane.b32.xlu0 %v202, 96
  %v212 = vpop.permute.xlu0 %211
  %vm213 = vcmask 64512
  %v214 = vsel %vm213, %v202, 0
  %v216 = vsel %vm213, %v212, 0
  %218 = vmatprep.subr.mxu0 0.0
  %219 = vmatpush1.xpose.msra.mxu0 %v216
  %220 = vmatprep.subr.mxu0 0.0
  %221 = vmatpush1.xpose.msra.mxu0 0.0
  %222 = vmatprep.subr.mxu0 0.0
  %223 = vmatpush1.xpose.msra.mxu0 0.0
  %224 = vmatprep.subr.mxu0 0.0
  %225 = vmatpush1.xpose.msra.mxu0 0.0
  %226 = vmatprep.subr.mxu0 0.0
  %227 = vmatpush1.xpose.msra.mxu0 0.0
  %228 = vmatprep.subr.mxu0 0.0
  %229 = vmatpush1.xpose.msra.mxu0 0.0
  %230 = vmatprep.subr.mxu0 0.0
  %231 = vmatpush1.xpose.msra.mxu0 0.0
  %232 = vmatprep.subr.mxu0 0.0
  %233 = vmatpush1.xpose.msra.mxu0 0.0
  %234 = vmatprep.subr.mxu0 0.0
  %235 = vmatpush1.xpose.msra.mxu0 0.0
  %236 = vmatprep.subr.mxu0 0.0
  %237 = vmatpush1.xpose.msra.mxu0 0.0
  %238 = vmatprep.subr.mxu0 0.0
  %239 = vmatpush1.xpose.msra.mxu0 0.0
  %240 = vmatprep.subr.mxu0 0.0
  %241 = vmatpush1.xpose.msra.mxu0 0.0
  %242 = vmatprep.subr.mxu0 0.0
  %243 = vmatpush1.xpose.msra.mxu0 0.0
  %244 = vmatprep.subr.mxu0 0.0
  %245 = vmatpush1.xpose.msra.mxu0 0.0
  %246 = vmatprep.subr.mxu0 0.0
  %247 = vmatpush1.xpose.msra.mxu0 0.0
  %248 = vmatprep.subr.mxu0 0.0
  %249 = vmatpush1.xpose.msra.mxu0 0.0
  %250 = vmatprep.subr.mxu0 0.0
  %251 = vmatpush1.xpose.msra.mxu0 0.0
  %252 = vmatprep.subr.mxu0 0.0
  %253 = vmatpush1.xpose.msra.mxu0 0.0
  %254 = vmatprep.subr.mxu0 0.0
  %255 = vmatpush1.xpose.msra.mxu0 0.0
  %256 = vmatprep.subr.mxu0 0.0
  %257 = vmatpush1.xpose.msra.mxu0 0.0
  %258 = vmatprep.subr.mxu0 0.0
  %259 = vmatpush1.xpose.msra.mxu0 0.0
  %260 = vmatprep.subr.mxu0 0.0
  %261 = vmatpush1.xpose.msra.mxu0 0.0
  %262 = vmatprep.subr.mxu0 0.0
  %263 = vmatpush1.xpose.msra.mxu0 0.0
  %264 = vmatprep.subr.mxu0 0.0
  %265 = vmatpush1.xpose.msra.mxu0 0.0
  %266 = vmatprep.subr.mxu0 0.0
  %267 = vmatpush1.xpose.msra.mxu0 0.0
  %268 = vmatprep.subr.mxu0 0.0
  %269 = vmatpush1.xpose.msra.mxu0 0.0
  %270 = vmatprep.subr.mxu0 0.0
  %271 = vmatpush1.xpose.msra.mxu0 0.0
  %272 = vmatprep.subr.mxu0 0.0
  %273 = vmatpush1.xpose.msra.mxu0 0.0
  %274 = vmatprep.subr.mxu0 0.0
  %275 = vmatpush1.xpose.msra.mxu0 0.0
  %276 = vmatprep.subr.mxu0 0.0
  %277 = vmatpush1.xpose.msra.mxu0 0.0
  %278 = vmatprep.subr.mxu0 0.0
  %279 = vmatpush1.xpose.msra.mxu0 0.0
  %280 = vmatprep.subr.mxu0 0.0
  %281 = vmatpush1.xpose.msra.mxu0 0.0
  %282 = vmatprep.mubr.f32.mxu0 0.0
  %283 = vmatmul.mubr.f32.gmra.mrb[0].mxu0 %v214
  %v284 = vpop.f32.mrb[0].mxu0
  %v285 = vadd.f32 0.0, %v284
  %v286 = vpop.f32.mrb[0].mxu0
  %287 = vdwg.mxu0
  %289 = vrot.lane.b32.xlu0 %v207, 96
  %v290 = vpop.permute.xlu0 %289
  %v291 = vsel %vm213, %v207, 0
  %v293 = vsel %vm213, %v290, 0
  %295 = vmatprep.subr.mxu0 0.0
  %296 = vmatpush1.xpose.msra.mxu0 %v293
  %297 = vmatprep.subr.mxu0 0.0
  %298 = vmatpush1.xpose.msra.mxu0 0.0
  %299 = vmatprep.subr.mxu0 0.0
  %300 = vmatpush1.xpose.msra.mxu0 0.0
  %301 = vmatprep.subr.mxu0 0.0
  %302 = vmatpush1.xpose.msra.mxu0 0.0
  %303 = vmatprep.subr.mxu0 0.0
  %304 = vmatpush1.xpose.msra.mxu0 0.0
  %305 = vmatprep.subr.mxu0 0.0
  %306 = vmatpush1.xpose.msra.mxu0 0.0
  %307 = vmatprep.subr.mxu0 0.0
  %308 = vmatpush1.xpose.msra.mxu0 0.0
  %309 = vmatprep.subr.mxu0 0.0
  %310 = vmatpush1.xpose.msra.mxu0 0.0
  %311 = vmatprep.subr.mxu0 0.0
  %312 = vmatpush1.xpose.msra.mxu0 0.0
  %313 = vmatprep.subr.mxu0 0.0
  %314 = vmatpush1.xpose.msra.mxu0 0.0
  %315 = vmatprep.subr.mxu0 0.0
  %316 = vmatpush1.xpose.msra.mxu0 0.0
  %317 = vmatprep.subr.mxu0 0.0
  %318 = vmatpush1.xpose.msra.mxu0 0.0
  %319 = vmatprep.subr.mxu0 0.0
  %320 = vmatpush1.xpose.msra.mxu0 0.0
  %321 = vmatprep.subr.mxu0 0.0
  %322 = vmatpush1.xpose.msra.mxu0 0.0
  %323 = vmatprep.subr.mxu0 0.0
  %324 = vmatpush1.xpose.msra.mxu0 0.0
  %325 = vmatprep.subr.mxu0 0.0
  %326 = vmatpush1.xpose.msra.mxu0 0.0
  %327 = vmatprep.subr.mxu0 0.0
  %328 = vmatpush1.xpose.msra.mxu0 0.0
  %329 = vmatprep.subr.mxu0 0.0
  %330 = vmatpush1.xpose.msra.mxu0 0.0
  %331 = vmatprep.subr.mxu0 0.0
  %332 = vmatpush1.xpose.msra.mxu0 0.0
  %333 = vmatprep.subr.mxu0 0.0
  %334 = vmatpush1.xpose.msra.mxu0 0.0
  %335 = vmatprep.subr.mxu0 0.0
  %336 = vmatpush1.xpose.msra.mxu0 0.0
  %337 = vmatprep.subr.mxu0 0.0
  %338 = vmatpush1.xpose.msra.mxu0 0.0
  %339 = vmatprep.subr.mxu0 0.0
  %340 = vmatpush1.xpose.msra.mxu0 0.0
  %341 = vmatprep.subr.mxu0 0.0
  %342 = vmatpush1.xpose.msra.mxu0 0.0
  %343 = vmatprep.subr.mxu0 0.0
  %344 = vmatpush1.xpose.msra.mxu0 0.0
  %345 = vmatprep.subr.mxu0 0.0
  %346 = vmatpush1.xpose.msra.mxu0 0.0
  %347 = vmatprep.subr.mxu0 0.0
  %348 = vmatpush1.xpose.msra.mxu0 0.0
  %349 = vmatprep.subr.mxu0 0.0
  %350 = vmatpush1.xpose.msra.mxu0 0.0
  %351 = vmatprep.subr.mxu0 0.0
  %352 = vmatpush1.xpose.msra.mxu0 0.0
  %353 = vmatprep.subr.mxu0 0.0
  %354 = vmatpush1.xpose.msra.mxu0 0.0
  %355 = vmatprep.subr.mxu0 0.0
  %356 = vmatpush1.xpose.msra.mxu0 0.0
  %357 = vmatprep.subr.mxu0 0.0
  %358 = vmatpush1.xpose.msra.mxu0 0.0
  %359 = vmatprep.mubr.f32.mxu0 0.0
  %360 = vmatmul.mubr.f32.gmra.mrb[0].mxu0 %v291
  %v361 = vpop.f32.mrb[0].mxu0
  %v362 = vadd.f32 0.0, %v361
  %v363 = vpop.f32.mrb[0].mxu0
  %364 = vdwg.mxu0
  %v365 = vmul.f32 %v285, 0.35355338
  %v366 = vmul.f32 %v362, 0.35355338
  %v369 = vlaneseq
  %v370 = vshrl.u32 %v369, 7
  %v371 = vsub.s32 0, %v370
  %v372 = vrot.slane %v116, %v371
  %v373 = vlaneseq
  %v374 = vshrl.u32 %v373, 7
  %v375 = vsub.s32 0, %v374
  %v376 = vrot.slane %v117, %v375
  %v379 = vadd.f32 %v365, %v372
  %v380 = vadd.f32 %v366, %v376
  %v381 = vsel %vm213, %v379, -inf
  %382 = vmax.xlane.f32.xlu0 %v381
  %v383 = vpop.xlane.xlu0 %382
  %v384 = vsel %vm213, %v380, -inf
  %385 = vmax.xlane.f32.xlu0 %v384
  %v386 = vpop.xlane.xlu0 %385
  %v387 = vsub.f32 %v379, %v383
  %v388 = vsub.f32 %v380, %v386
  %v389 = vmul.f32 %v387, 1.442695
  %v390 = vpow.pop %v389
  %v391 = vmul.f32 %v388, 1.442695
  %v392 = vpow.pop %v391
  %v393 = vsel %vm213, %v390, 0.0
  %394 = vadd.xlane.f32.xlu0 %v393
  %v395 = vpop.xlane.xlu0 %394
  %v396 = vsel %vm213, %v392, 0.0
  %397 = vadd.xlane.f32.xlu0 %v396
  %v398 = vpop.xlane.xlu0 %397
  %v399 = vrcp.pop %v395
  %v400 = vrcp.pop %v398
  %v401 = vmul.f32 %v390, %v399
  %v402 = vmul.f32 %v392, %v400
  %403 = vrot.lane.b32.xlu0 %v202, 64
  %v404 = vpop.permute.xlu0 %403
  %v407 = vsel %vm213, %v401, 0
  %409 = vmatprep.subr.mxu0 0.0
  %410 = vmatpush1.msra.mxu0 %v404
  %411 = vmatprep.subr.mxu0 0.0
  %412 = vmatpush1.msra.mxu0 0.0
  %413 = vmatprep.subr.mxu0 0.0
  %414 = vmatpush1.msra.mxu0 0.0
  %415 = vmatprep.subr.mxu0 0.0
  %416 = vmatpush1.msra.mxu0 0.0
  %417 = vmatprep.subr.mxu0 0.0
  %418 = vmatpush1.msra.mxu0 0.0
  %419 = vmatprep.subr.mxu0 0.0
  %420 = vmatpush1.msra.mxu0 0.0
  %421 = vmatprep.subr.mxu0 0.0
  %422 = vmatpush1.msra.mxu0 0.0
  %423 = vmatprep.subr.mxu0 0.0
  %424 = vmatpush1.msra.mxu0 0.0
  %425 = vmatprep.subr.mxu0 0.0
  %426 = vmatpush1.msra.mxu0 0.0
  %427 = vmatprep.subr.mxu0 0.0
  %428 = vmatpush1.msra.mxu0 0.0
  %429 = vmatprep.subr.mxu0 0.0
  %430 = vmatpush1.msra.mxu0 0.0
  %431 = vmatprep.subr.mxu0 0.0
  %432 = vmatpush1.msra.mxu0 0.0
  %433 = vmatprep.subr.mxu0 0.0
  %434 = vmatpush1.msra.mxu0 0.0
  %435 = vmatprep.subr.mxu0 0.0
  %436 = vmatpush1.msra.mxu0 0.0
  %437 = vmatprep.subr.mxu0 0.0
  %438 = vmatpush1.msra.mxu0 0.0
  %439 = vmatprep.subr.mxu0 0.0
  %440 = vmatpush1.msra.mxu0 0.0
  %441 = vmatprep.subr.mxu0 0.0
  %442 = vmatpush1.msra.mxu0 0.0
  %443 = vmatprep.subr.mxu0 0.0
  %444 = vmatpush1.msra.mxu0 0.0
  %445 = vmatprep.subr.mxu0 0.0
  %446 = vmatpush1.msra.mxu0 0.0
  %447 = vmatprep.subr.mxu0 0.0
  %448 = vmatpush1.msra.mxu0 0.0
  %449 = vmatprep.subr.mxu0 0.0
  %450 = vmatpush1.msra.mxu0 0.0
  %451 = vmatprep.subr.mxu0 0.0
  %452 = vmatpush1.msra.mxu0 0.0
  %453 = vmatprep.subr.mxu0 0.0
  %454 = vmatpush1.msra.mxu0 0.0
  %455 = vmatprep.subr.mxu0 0.0
  %456 = vmatpush1.msra.mxu0 0.0
  %457 = vmatprep.subr.mxu0 0.0
  %458 = vmatpush1.msra.mxu0 0.0
  %459 = vmatprep.subr.mxu0 0.0
  %460 = vmatpush1.msra.mxu0 0.0
  %461 = vmatprep.subr.mxu0 0.0
  %462 = vmatpush1.msra.mxu0 0.0
  %463 = vmatprep.subr.mxu0 0.0
  %464 = vmatpush1.msra.mxu0 0.0
  %465 = vmatprep.subr.mxu0 0.0
  %466 = vmatpush1.msra.mxu0 0.0
  %467 = vmatprep.subr.mxu0 0.0
  %468 = vmatpush1.msra.mxu0 0.0
  %469 = vmatprep.subr.mxu0 0.0
  %470 = vmatpush1.msra.mxu0 0.0
  %471 = vmatprep.subr.mxu0 0.0
  %472 = vmatpush1.msra.mxu0 0.0
  %473 = vmatprep.mubr.f32.mxu0 0.0
  %474 = vmatmul.mubr.f32.gmra.mrb[0].mxu0 %v407
  %v475 = vpop.f32.mrb[0].mxu0
  %v476 = vadd.f32 0.0, %v475
  %v477 = vpop.f32.mrb[0].mxu0
  %478 = vdwg.mxu0
  %479 = vrot.lane.b32.xlu0 %v207, 64
  %v480 = vpop.permute.xlu0 %479
  %v483 = vsel %vm213, %v402, 0
  %485 = vmatprep.subr.mxu0 0.0
  %486 = vmatpush1.msra.mxu0 %v480
  %487 = vmatprep.subr.mxu0 0.0
  %488 = vmatpush1.msra.mxu0 0.0
  %489 = vmatprep.subr.mxu0 0.0
  %490 = vmatpush1.msra.mxu0 0.0
  %491 = vmatprep.subr.mxu0 0.0
  %492 = vmatpush1.msra.mxu0 0.0
  %493 = vmatprep.subr.mxu0 0.0
  %494 = vmatpush1.msra.mxu0 0.0
  %495 = vmatprep.subr.mxu0 0.0
  %496 = vmatpush1.msra.mxu0 0.0
  %497 = vmatprep.subr.mxu0 0.0
  %498 = vmatpush1.msra.mxu0 0.0
  %499 = vmatprep.subr.mxu0 0.0
  %500 = vmatpush1.msra.mxu0 0.0
  %501 = vmatprep.subr.mxu0 0.0
  %502 = vmatpush1.msra.mxu0 0.0
  %503 = vmatprep.subr.mxu0 0.0
  %504 = vmatpush1.msra.mxu0 0.0
  %505 = vmatprep.subr.mxu0 0.0
  %506 = vmatpush1.msra.mxu0 0.0
  %507 = vmatprep.subr.mxu0 0.0
  %508 = vmatpush1.msra.mxu0 0.0
  %509 = vmatprep.subr.mxu0 0.0
  %510 = vmatpush1.msra.mxu0 0.0
  %511 = vmatprep.subr.mxu0 0.0
  %512 = vmatpush1.msra.mxu0 0.0
  %513 = vmatprep.subr.mxu0 0.0
  %514 = vmatpush1.msra.mxu0 0.0
  %515 = vmatprep.subr.mxu0 0.0
  %516 = vmatpush1.msra.mxu0 0.0
  %517 = vmatprep.subr.mxu0 0.0
  %518 = vmatpush1.msra.mxu0 0.0
  %519 = vmatprep.subr.mxu0 0.0
  %520 = vmatpush1.msra.mxu0 0.0
  %521 = vmatprep.subr.mxu0 0.0
  %522 = vmatpush1.msra.mxu0 0.0
  %523 = vmatprep.subr.mxu0 0.0
  %524 = vmatpush1.msra.mxu0 0.0
  %525 = vmatprep.subr.mxu0 0.0
  %526 = vmatpush1.msra.mxu0 0.0
  %527 = vmatprep.subr.mxu0 0.0
  %528 = vmatpush1.msra.mxu0 0.0
  %529 = vmatprep.subr.mxu0 0.0
  %530 = vmatpush1.msra.mxu0 0.0
  %531 = vmatprep.subr.mxu0 0.0
  %532 = vmatpush1.msra.mxu0 0.0
  %533 = vmatprep.subr.mxu0 0.0
  %534 = vmatpush1.msra.mxu0 0.0
  %535 = vmatprep.subr.mxu0 0.0
  %536 = vmatpush1.msra.mxu0 0.0
  %537 = vmatprep.subr.mxu0 0.0
  %538 = vmatpush1.msra.mxu0 0.0
  %539 = vmatprep.subr.mxu0 0.0
  %540 = vmatpush1.msra.mxu0 0.0
  %541 = vmatprep.subr.mxu0 0.0
  %542 = vmatpush1.msra.mxu0 0.0
  %543 = vmatprep.subr.mxu0 0.0
  %544 = vmatpush1.msra.mxu0 0.0
  %545 = vmatprep.subr.mxu0 0.0
  %546 = vmatpush1.msra.mxu0 0.0
  %547 = vmatprep.subr.mxu0 0.0
  %548 = vmatpush1.msra.mxu0 0.0
  %549 = vmatprep.mubr.f32.mxu0 0.0
  %550 = vmatmul.mubr.f32.gmra.mrb[0].mxu0 %v483
  %v551 = vpop.f32.mrb[0].mxu0
  %v552 = vadd.f32 0.0, %v551
  %v553 = vpop.f32.mrb[0].mxu0
  %554 = vdwg.mxu0
  %555 = vrot.lane.b32.xlu0 %v202, 120
  %v556 = vpop.permute.xlu0 %555
  %557 = vrot.lane.b32.xlu0 %v202, 88
  %v558 = vpop.permute.xlu0 %557
  %v559 = vsel %vm213, %v556, 0
  %v561 = vsel %vm213, %v558, 0
  %563 = vmatprep.subr.mxu0 0.0
  %564 = vmatpush1.xpose.msra.mxu0 %v561
  %565 = vmatprep.subr.mxu0 0.0
  %566 = vmatpush1.xpose.msra.mxu0 0.0
  %567 = vmatprep.subr.mxu0 0.0
  %568 = vmatpush1.xpose.msra.mxu0 0.0
  %569 = vmatprep.subr.mxu0 0.0
  %570 = vmatpush1.xpose.msra.mxu0 0.0
  %571 = vmatprep.subr.mxu0 0.0
  %572 = vmatpush1.xpose.msra.mxu0 0.0
  %573 = vmatprep.subr.mxu0 0.0
  %574 = vmatpush1.xpose.msra.mxu0 0.0
  %575 = vmatprep.subr.mxu0 0.0
  %576 = vmatpush1.xpose.msra.mxu0 0.0
  %577 = vmatprep.subr.mxu0 0.0
  %578 = vmatpush1.xpose.msra.mxu0 0.0
  %579 = vmatprep.subr.mxu0 0.0
  %580 = vmatpush1.xpose.msra.mxu0 0.0
  %581 = vmatprep.subr.mxu0 0.0
  %582 = vmatpush1.xpose.msra.mxu0 0.0
  %583 = vmatprep.subr.mxu0 0.0
  %584 = vmatpush1.xpose.msra.mxu0 0.0
  %585 = vmatprep.subr.mxu0 0.0
  %586 = vmatpush1.xpose.msra.mxu0 0.0
  %587 = vmatprep.subr.mxu0 0.0
  %588 = vmatpush1.xpose.msra.mxu0 0.0
  %589 = vmatprep.subr.mxu0 0.0
  %590 = vmatpush1.xpose.msra.mxu0 0.0
  %591 = vmatprep.subr.mxu0 0.0
  %592 = vmatpush1.xpose.msra.mxu0 0.0
  %593 = vmatprep.subr.mxu0 0.0
  %594 = vmatpush1.xpose.msra.mxu0 0.0
  %595 = vmatprep.subr.mxu0 0.0
  %596 = vmatpush1.xpose.msra.mxu0 0.0
  %597 = vmatprep.subr.mxu0 0.0
  %598 = vmatpush1.xpose.msra.mxu0 0.0
  %599 = vmatprep.subr.mxu0 0.0
  %600 = vmatpush1.xpose.msra.mxu0 0.0
  %601 = vmatprep.subr.mxu0 0.0
  %602 = vmatpush1.xpose.msra.mxu0 0.0
  %603 = vmatprep.subr.mxu0 0.0
  %604 = vmatpush1.xpose.msra.mxu0 0.0
  %605 = vmatprep.subr.mxu0 0.0
  %606 = vmatpush1.xpose.msra.mxu0 0.0
  %607 = vmatprep.subr.mxu0 0.0
  %608 = vmatpush1.xpose.msra.mxu0 0.0
  %609 = vmatprep.subr.mxu0 0.0
  %610 = vmatpush1.xpose.msra.mxu0 0.0
  %611 = vmatprep.subr.mxu0 0.0
  %612 = vmatpush1.xpose.msra.mxu0 0.0
  %613 = vmatprep.subr.mxu0 0.0
  %614 = vmatpush1.xpose.msra.mxu0 0.0
  %615 = vmatprep.subr.mxu0 0.0
  %616 = vmatpush1.xpose.msra.mxu0 0.0
  %617 = vmatprep.subr.mxu0 0.0
  %618 = vmatpush1.xpose.msra.mxu0 0.0
  %619 = vmatprep.subr.mxu0 0.0
  %620 = vmatpush1.xpose.msra.mxu0 0.0
  %621 = vmatprep.subr.mxu0 0.0
  %622 = vmatpush1.xpose.msra.mxu0 0.0
  %623 = vmatprep.subr.mxu0 0.0
  %624 = vmatpush1.xpose.msra.mxu0 0.0
  %625 = vmatprep.subr.mxu0 0.0
  %626 = vmatpush1.xpose.msra.mxu0 0.0
  %627 = vmatprep.mubr.f32.mxu0 0.0
  %628 = vmatmul.mubr.f32.gmra.mrb[0].mxu0 %v559
  %v629 = vpop.f32.mrb[0].mxu0
  %v630 = vadd.f32 0.0, %v629
  %v631 = vpop.f32.mrb[0].mxu0
  %632 = vdwg.mxu0
  %633 = vrot.lane.b32.xlu0 %v207, 120
  %v634 = vpop.permute.xlu0 %633
  %635 = vrot.lane.b32.xlu0 %v207, 88
  %v636 = vpop.permute.xlu0 %635
  %v637 = vsel %vm213, %v634, 0
  %v639 = vsel %vm213, %v636, 0
  %641 = vmatprep.subr.mxu0 0.0
  %642 = vmatpush1.xpose.msra.mxu0 %v639
  %643 = vmatprep.subr.mxu0 0.0
  %644 = vmatpush1.xpose.msra.mxu0 0.0
  %645 = vmatprep.subr.mxu0 0.0
  %646 = vmatpush1.xpose.msra.mxu0 0.0
  %647 = vmatprep.subr.mxu0 0.0
  %648 = vmatpush1.xpose.msra.mxu0 0.0
  %649 = vmatprep.subr.mxu0 0.0
  %650 = vmatpush1.xpose.msra.mxu0 0.0
  %651 = vmatprep.subr.mxu0 0.0
  %652 = vmatpush1.xpose.msra.mxu0 0.0
  %653 = vmatprep.subr.mxu0 0.0
  %654 = vmatpush1.xpose.msra.mxu0 0.0
  %655 = vmatprep.subr.mxu0 0.0
  %656 = vmatpush1.xpose.msra.mxu0 0.0
  %657 = vmatprep.subr.mxu0 0.0
  %658 = vmatpush1.xpose.msra.mxu0 0.0
  %659 = vmatprep.subr.mxu0 0.0
  %660 = vmatpush1.xpose.msra.mxu0 0.0
  %661 = vmatprep.subr.mxu0 0.0
  %662 = vmatpush1.xpose.msra.mxu0 0.0
  %663 = vmatprep.subr.mxu0 0.0
  %664 = vmatpush1.xpose.msra.mxu0 0.0
  %665 = vmatprep.subr.mxu0 0.0
  %666 = vmatpush1.xpose.msra.mxu0 0.0
  %667 = vmatprep.subr.mxu0 0.0
  %668 = vmatpush1.xpose.msra.mxu0 0.0
  %669 = vmatprep.subr.mxu0 0.0
  %670 = vmatpush1.xpose.msra.mxu0 0.0
  %671 = vmatprep.subr.mxu0 0.0
  %672 = vmatpush1.xpose.msra.mxu0 0.0
  %673 = vmatprep.subr.mxu0 0.0
  %674 = vmatpush1.xpose.msra.mxu0 0.0
  %675 = vmatprep.subr.mxu0 0.0
  %676 = vmatpush1.xpose.msra.mxu0 0.0
  %677 = vmatprep.subr.mxu0 0.0
  %678 = vmatpush1.xpose.msra.mxu0 0.0
  %679 = vmatprep.subr.mxu0 0.0
  %680 = vmatpush1.xpose.msra.mxu0 0.0
  %681 = vmatprep.subr.mxu0 0.0
  %682 = vmatpush1.xpose.msra.mxu0 0.0
  %683 = vmatprep.subr.mxu0 0.0
  %684 = vmatpush1.xpose.msra.mxu0 0.0
  %685 = vmatprep.subr.mxu0 0.0
  %686 = vmatpush1.xpose.msra.mxu0 0.0
  %687 = vmatprep.subr.mxu0 0.0
  %688 = vmatpush1.xpose.msra.mxu0 0.0
  %689 = vmatprep.subr.mxu0 0.0
  %690 = vmatpush1.xpose.msra.mxu0 0.0
  %691 = vmatprep.subr.mxu0 0.0
  %692 = vmatpush1.xpose.msra.mxu0 0.0
  %693 = vmatprep.subr.mxu0 0.0
  %694 = vmatpush1.xpose.msra.mxu0 0.0
  %695 = vmatprep.subr.mxu0 0.0
  %696 = vmatpush1.xpose.msra.mxu0 0.0
  %697 = vmatprep.subr.mxu0 0.0
  %698 = vmatpush1.xpose.msra.mxu0 0.0
  %699 = vmatprep.subr.mxu0 0.0
  %700 = vmatpush1.xpose.msra.mxu0 0.0
  %701 = vmatprep.subr.mxu0 0.0
  %702 = vmatpush1.xpose.msra.mxu0 0.0
  %703 = vmatprep.subr.mxu0 0.0
  %704 = vmatpush1.xpose.msra.mxu0 0.0
  %705 = vmatprep.mubr.f32.mxu0 0.0
  %706 = vmatmul.mubr.f32.gmra.mrb[0].mxu0 %v637
  %v707 = vpop.f32.mrb[0].mxu0
  %v708 = vadd.f32 0.0, %v707
  %v709 = vpop.f32.mrb[0].mxu0
  %710 = vdwg.mxu0
  %v711 = vmul.f32 %v630, 0.35355338
  %v712 = vmul.f32 %v708, 0.35355338
  %v713 = vadd.f32 %v711, %v372
  %v714 = vadd.f32 %v712, %v376
  %v715 = vsel %vm213, %v713, -inf
  %716 = vmax.xlane.f32.xlu0 %v715
  %v717 = vpop.xlane.xlu0 %716
  %v718 = vsel %vm213, %v714, -inf
  %719 = vmax.xlane.f32.xlu0 %v718
  %v720 = vpop.xlane.xlu0 %719
  %v721 = vsub.f32 %v713, %v717
  %v722 = vsub.f32 %v714, %v720
  %v723 = vmul.f32 %v721, 1.442695
  %v724 = vpow.pop %v723
  %v725 = vmul.f32 %v722, 1.442695
  %v726 = vpow.pop %v725
  %v727 = vsel %vm213, %v724, 0.0
  %728 = vadd.xlane.f32.xlu0 %v727
  %v729 = vpop.xlane.xlu0 %728
  %v730 = vsel %vm213, %v726, 0.0
  %731 = vadd.xlane.f32.xlu0 %v730
  %v732 = vpop.xlane.xlu0 %731
  %v733 = vrcp.pop %v729
  %v734 = vrcp.pop %v732
  %v735 = vmul.f32 %v724, %v733
  %v736 = vmul.f32 %v726, %v734
  %737 = vrot.lane.b32.xlu0 %v202, 56
  %v738 = vpop.permute.xlu0 %737
  %v741 = vsel %vm213, %v735, 0
  %743 = vmatprep.subr.mxu0 0.0
  %744 = vmatpush1.msra.mxu0 %v738
  %745 = vmatprep.subr.mxu0 0.0
  %746 = vmatpush1.msra.mxu0 0.0
  %747 = vmatprep.subr.mxu0 0.0
  %748 = vmatpush1.msra.mxu0 0.0
  %749 = vmatprep.subr.mxu0 0.0
  %750 = vmatpush1.msra.mxu0 0.0
  %751 = vmatprep.subr.mxu0 0.0
  %752 = vmatpush1.msra.mxu0 0.0
  %753 = vmatprep.subr.mxu0 0.0
  %754 = vmatpush1.msra.mxu0 0.0
  %755 = vmatprep.subr.mxu0 0.0
  %756 = vmatpush1.msra.mxu0 0.0
  %757 = vmatprep.subr.mxu0 0.0
  %758 = vmatpush1.msra.mxu0 0.0
  %759 = vmatprep.subr.mxu0 0.0
  %760 = vmatpush1.msra.mxu0 0.0
  %761 = vmatprep.subr.mxu0 0.0
  %762 = vmatpush1.msra.mxu0 0.0
  %763 = vmatprep.subr.mxu0 0.0
  %764 = vmatpush1.msra.mxu0 0.0
  %765 = vmatprep.subr.mxu0 0.0
  %766 = vmatpush1.msra.mxu0 0.0
  %767 = vmatprep.subr.mxu0 0.0
  %768 = vmatpush1.msra.mxu0 0.0
  %769 = vmatprep.subr.mxu0 0.0
  %770 = vmatpush1.msra.mxu0 0.0
  %771 = vmatprep.subr.mxu0 0.0
  %772 = vmatpush1.msra.mxu0 0.0
  %773 = vmatprep.subr.mxu0 0.0
  %774 = vmatpush1.msra.mxu0 0.0
  %775 = vmatprep.subr.mxu0 0.0
  %776 = vmatpush1.msra.mxu0 0.0
  %777 = vmatprep.subr.mxu0 0.0
  %778 = vmatpush1.msra.mxu0 0.0
  %779 = vmatprep.subr.mxu0 0.0
  %780 = vmatpush1.msra.mxu0 0.0
  %781 = vmatprep.subr.mxu0 0.0
  %782 = vmatpush1.msra.mxu0 0.0
  %783 = vmatprep.subr.mxu0 0.0
  %784 = vmatpush1.msra.mxu0 0.0
  %785 = vmatprep.subr.mxu0 0.0
  %786 = vmatpush1.msra.mxu0 0.0
  %787 = vmatprep.subr.mxu0 0.0
  %788 = vmatpush1.msra.mxu0 0.0
  %789 = vmatprep.subr.mxu0 0.0
  %790 = vmatpush1.msra.mxu0 0.0
  %791 = vmatprep.subr.mxu0 0.0
  %792 = vmatpush1.msra.mxu0 0.0
  %793 = vmatprep.subr.mxu0 0.0
  %794 = vmatpush1.msra.mxu0 0.0
  %795 = vmatprep.subr.mxu0 0.0
  %796 = vmatpush1.msra.mxu0 0.0
  %797 = vmatprep.subr.mxu0 0.0
  %798 = vmatpush1.msra.mxu0 0.0
  %799 = vmatprep.subr.mxu0 0.0
  %800 = vmatpush1.msra.mxu0 0.0
  %801 = vmatprep.subr.mxu0 0.0
  %802 = vmatpush1.msra.mxu0 0.0
  %803 = vmatprep.subr.mxu0 0.0
  %804 = vmatpush1.msra.mxu0 0.0
  %805 = vmatprep.subr.mxu0 0.0
  %806 = vmatpush1.msra.mxu0 0.0
  %807 = vmatprep.mubr.f32.mxu0 0.0
  %808 = vmatmul.mubr.f32.gmra.mrb[0].mxu0 %v741
  %v809 = vpop.f32.mrb[0].mxu0
  %v810 = vadd.f32 0.0, %v809
  %v811 = vpop.f32.mrb[0].mxu0
  %812 = vdwg.mxu0
  %813 = vrot.lane.b32.xlu0 %v207, 56
  %v814 = vpop.permute.xlu0 %813
  %v817 = vsel %vm213, %v736, 0
  %819 = vmatprep.subr.mxu0 0.0
  %820 = vmatpush1.msra.mxu0 %v814
  %821 = vmatprep.subr.mxu0 0.0
  %822 = vmatpush1.msra.mxu0 0.0
  %823 = vmatprep.subr.mxu0 0.0
  %824 = vmatpush1.msra.mxu0 0.0
  %825 = vmatprep.subr.mxu0 0.0
  %826 = vmatpush1.msra.mxu0 0.0
  %827 = vmatprep.subr.mxu0 0.0
  %828 = vmatpush1.msra.mxu0 0.0
  %829 = vmatprep.subr.mxu0 0.0
  %830 = vmatpush1.msra.mxu0 0.0
  %831 = vmatprep.subr.mxu0 0.0
  %832 = vmatpush1.msra.mxu0 0.0
  %833 = vmatprep.subr.mxu0 0.0
  %834 = vmatpush1.msra.mxu0 0.0
  %835 = vmatprep.subr.mxu0 0.0
  %836 = vmatpush1.msra.mxu0 0.0
  %837 = vmatprep.subr.mxu0 0.0
  %838 = vmatpush1.msra.mxu0 0.0
  %839 = vmatprep.subr.mxu0 0.0
  %840 = vmatpush1.msra.mxu0 0.0
  %841 = vmatprep.subr.mxu0 0.0
  %842 = vmatpush1.msra.mxu0 0.0
  %843 = vmatprep.subr.mxu0 0.0
  %844 = vmatpush1.msra.mxu0 0.0
  %845 = vmatprep.subr.mxu0 0.0
  %846 = vmatpush1.msra.mxu0 0.0
  %847 = vmatprep.subr.mxu0 0.0
  %848 = vmatpush1.msra.mxu0 0.0
  %849 = vmatprep.subr.mxu0 0.0
  %850 = vmatpush1.msra.mxu0 0.0
  %851 = vmatprep.subr.mxu0 0.0
  %852 = vmatpush1.msra.mxu0 0.0
  %853 = vmatprep.subr.mxu0 0.0
  %854 = vmatpush1.msra.mxu0 0.0
  %855 = vmatprep.subr.mxu0 0.0
  %856 = vmatpush1.msra.mxu0 0.0
  %857 = vmatprep.subr.mxu0 0.0
  %858 = vmatpush1.msra.mxu0 0.0
  %859 = vmatprep.subr.mxu0 0.0
  %860 = vmatpush1.msra.mxu0 0.0
  %861 = vmatprep.subr.mxu0 0.0
  %862 = vmatpush1.msra.mxu0 0.0
  %863 = vmatprep.subr.mxu0 0.0
  %864 = vmatpush1.msra.mxu0 0.0
  %865 = vmatprep.subr.mxu0 0.0
  %866 = vmatpush1.msra.mxu0 0.0
  %867 = vmatprep.subr.mxu0 0.0
  %868 = vmatpush1.msra.mxu0 0.0
  %869 = vmatprep.subr.mxu0 0.0
  %870 = vmatpush1.msra.mxu0 0.0
  %871 = vmatprep.subr.mxu0 0.0
  %872 = vmatpush1.msra.mxu0 0.0
  %873 = vmatprep.subr.mxu0 0.0
  %874 = vmatpush1.msra.mxu0 0.0
  %875 = vmatprep.subr.mxu0 0.0
  %876 = vmatpush1.msra.mxu0 0.0
  %877 = vmatprep.subr.mxu0 0.0
  %878 = vmatpush1.msra.mxu0 0.0
  %879 = vmatprep.subr.mxu0 0.0
  %880 = vmatpush1.msra.mxu0 0.0
  %881 = vmatprep.subr.mxu0 0.0
  %882 = vmatpush1.msra.mxu0 0.0
  %883 = vmatprep.mubr.f32.mxu0 0.0
  %884 = vmatmul.mubr.f32.gmra.mrb[0].mxu0 %v817
  %v885 = vpop.f32.mrb[0].mxu0
  %v886 = vadd.f32 0.0, %v885
  %v887 = vpop.f32.mrb[0].mxu0
  %888 = vdwg.mxu0
  %889 = vrot.lane.b32.xlu0 %v202, 112
  %v890 = vpop.permute.xlu0 %889
  %891 = vrot.lane.b32.xlu0 %v202, 80
  %v892 = vpop.permute.xlu0 %891
  %v893 = vsel %vm213, %v890, 0
  %v895 = vsel %vm213, %v892, 0
  %897 = vmatprep.subr.mxu0 0.0
  %898 = vmatpush1.xpose.msra.mxu0 %v895
  %899 = vmatprep.subr.mxu0 0.0
  %900 = vmatpush1.xpose.msra.mxu0 0.0
  %901 = vmatprep.subr.mxu0 0.0
  %902 = vmatpush1.xpose.msra.mxu0 0.0
  %903 = vmatprep.subr.mxu0 0.0
  %904 = vmatpush1.xpose.msra.mxu0 0.0
  %905 = vmatprep.subr.mxu0 0.0
  %906 = vmatpush1.xpose.msra.mxu0 0.0
  %907 = vmatprep.subr.mxu0 0.0
  %908 = vmatpush1.xpose.msra.mxu0 0.0
  %909 = vmatprep.subr.mxu0 0.0
  %910 = vmatpush1.xpose.msra.mxu0 0.0
  %911 = vmatprep.subr.mxu0 0.0
  %912 = vmatpush1.xpose.msra.mxu0 0.0
  %913 = vmatprep.subr.mxu0 0.0
  %914 = vmatpush1.xpose.msra.mxu0 0.0
  %915 = vmatprep.subr.mxu0 0.0
  %916 = vmatpush1.xpose.msra.mxu0 0.0
  %917 = vmatprep.subr.mxu0 0.0
  %918 = vmatpush1.xpose.msra.mxu0 0.0
  %919 = vmatprep.subr.mxu0 0.0
  %920 = vmatpush1.xpose.msra.mxu0 0.0
  %921 = vmatprep.subr.mxu0 0.0
  %922 = vmatpush1.xpose.msra.mxu0 0.0
  %923 = vmatprep.subr.mxu0 0.0
  %924 = vmatpush1.xpose.msra.mxu0 0.0
  %925 = vmatprep.subr.mxu0 0.0
  %926 = vmatpush1.xpose.msra.mxu0 0.0
  %927 = vmatprep.subr.mxu0 0.0
  %928 = vmatpush1.xpose.msra.mxu0 0.0
  %929 = vmatprep.subr.mxu0 0.0
  %930 = vmatpush1.xpose.msra.mxu0 0.0
  %931 = vmatprep.subr.mxu0 0.0
  %932 = vmatpush1.xpose.msra.mxu0 0.0
  %933 = vmatprep.subr.mxu0 0.0
  %934 = vmatpush1.xpose.msra.mxu0 0.0
  %935 = vmatprep.subr.mxu0 0.0
  %936 = vmatpush1.xpose.msra.mxu0 0.0
  %937 = vmatprep.subr.mxu0 0.0
  %938 = vmatpush1.xpose.msra.mxu0 0.0
  %939 = vmatprep.subr.mxu0 0.0
  %940 = vmatpush1.xpose.msra.mxu0 0.0
  %941 = vmatprep.subr.mxu0 0.0
  %942 = vmatpush1.xpose.msra.mxu0 0.0
  %943 = vmatprep.subr.mxu0 0.0
  %944 = vmatpush1.xpose.msra.mxu0 0.0
  %945 = vmatprep.subr.mxu0 0.0
  %946 = vmatpush1.xpose.msra.mxu0 0.0
  %947 = vmatprep.subr.mxu0 0.0
  %948 = vmatpush1.xpose.msra.mxu0 0.0
  %949 = vmatprep.subr.mxu0 0.0
  %950 = vmatpush1.xpose.msra.mxu0 0.0
  %951 = vmatprep.subr.mxu0 0.0
  %952 = vmatpush1.xpose.msra.mxu0 0.0
  %953 = vmatprep.subr.mxu0 0.0
  %954 = vmatpush1.xpose.msra.mxu0 0.0
  %955 = vmatprep.subr.mxu0 0.0
  %956 = vmatpush1.xpose.msra.mxu0 0.0
  %957 = vmatprep.subr.mxu0 0.0
  %958 = vmatpush1.xpose.msra.mxu0 0.0
  %959 = vmatprep.subr.mxu0 0.0
  %960 = vmatpush1.xpose.msra.mxu0 0.0
  %961 = vmatprep.mubr.f32.mxu0 0.0
  %962 = vmatmul.mubr.f32.gmra.mrb[0].mxu0 %v893
  %v963 = vpop.f32.mrb[0].mxu0
  %v964 = vadd.f32 0.0, %v963
  %v965 = vpop.f32.mrb[0].mxu0
  %966 = vdwg.mxu0
  %967 = vrot.lane.b32.xlu0 %v207, 112
  %v968 = vpop.permute.xlu0 %967
  %969 = vrot.lane.b32.xlu0 %v207, 80
  %v970 = vpop.permute.xlu0 %969
  %v971 = vsel %vm213, %v968, 0
  %v973 = vsel %vm213, %v970, 0
  %975 = vmatprep.subr.mxu0 0.0
  %976 = vmatpush1.xpose.msra.mxu0 %v973
  %977 = vmatprep.subr.mxu0 0.0
  %978 = vmatpush1.xpose.msra.mxu0 0.0
  %979 = vmatprep.subr.mxu0 0.0
  %980 = vmatpush1.xpose.msra.mxu0 0.0
  %981 = vmatprep.subr.mxu0 0.0
  %982 = vmatpush1.xpose.msra.mxu0 0.0
  %983 = vmatprep.subr.mxu0 0.0
  %984 = vmatpush1.xpose.msra.mxu0 0.0
  %985 = vmatprep.subr.mxu0 0.0
  %986 = vmatpush1.xpose.msra.mxu0 0.0
  %987 = vmatprep.subr.mxu0 0.0
  %988 = vmatpush1.xpose.msra.mxu0 0.0
  %989 = vmatprep.subr.mxu0 0.0
  %990 = vmatpush1.xpose.msra.mxu0 0.0
  %991 = vmatprep.subr.mxu0 0.0
  %992 = vmatpush1.xpose.msra.mxu0 0.0
  %993 = vmatprep.subr.mxu0 0.0
  %994 = vmatpush1.xpose.msra.mxu0 0.0
  %995 = vmatprep.subr.mxu0 0.0
  %996 = vmatpush1.xpose.msra.mxu0 0.0
  %997 = vmatprep.subr.mxu0 0.0
  %998 = vmatpush1.xpose.msra.mxu0 0.0
  %999 = vmatprep.subr.mxu0 0.0
  %1000 = vmatpush1.xpose.msra.mxu0 0.0
  %1001 = vmatprep.subr.mxu0 0.0
  %1002 = vmatpush1.xpose.msra.mxu0 0.0
  %1003 = vmatprep.subr.mxu0 0.0
  %1004 = vmatpush1.xpose.msra.mxu0 0.0
  %1005 = vmatprep.subr.mxu0 0.0
  %1006 = vmatpush1.xpose.msra.mxu0 0.0
  %1007 = vmatprep.subr.mxu0 0.0
  %1008 = vmatpush1.xpose.msra.mxu0 0.0
  %1009 = vmatprep.subr.mxu0 0.0
  %1010 = vmatpush1.xpose.msra.mxu0 0.0
  %1011 = vmatprep.subr.mxu0 0.0
  %1012 = vmatpush1.xpose.msra.mxu0 0.0
  %1013 = vmatprep.subr.mxu0 0.0
  %1014 = vmatpush1.xpose.msra.mxu0 0.0
  %1015 = vmatprep.subr.mxu0 0.0
  %1016 = vmatpush1.xpose.msra.mxu0 0.0
  %1017 = vmatprep.subr.mxu0 0.0
  %1018 = vmatpush1.xpose.msra.mxu0 0.0
  %1019 = vmatprep.subr.mxu0 0.0
  %1020 = vmatpush1.xpose.msra.mxu0 0.0
  %1021 = vmatprep.subr.mxu0 0.0
  %1022 = vmatpush1.xpose.msra.mxu0 0.0
  %1023 = vmatprep.subr.mxu0 0.0
  %1024 = vmatpush1.xpose.msra.mxu0 0.0
  %1025 = vmatprep.subr.mxu0 0.0
  %1026 = vmatpush1.xpose.msra.mxu0 0.0
  %1027 = vmatprep.subr.mxu0 0.0
  %1028 = vmatpush1.xpose.msra.mxu0 0.0
  %1029 = vmatprep.subr.mxu0 0.0
  %1030 = vmatpush1.xpose.msra.mxu0 0.0
  %1031 = vmatprep.subr.mxu0 0.0
  %1032 = vmatpush1.xpose.msra.mxu0 0.0
  %1033 = vmatprep.subr.mxu0 0.0
  %1034 = vmatpush1.xpose.msra.mxu0 0.0
  %1035 = vmatprep.subr.mxu0 0.0
  %1036 = vmatpush1.xpose.msra.mxu0 0.0
  %1037 = vmatprep.subr.mxu0 0.0
  %1038 = vmatpush1.xpose.msra.mxu0 0.0
  %1039 = vmatprep.mubr.f32.mxu0 0.0
  %1040 = vmatmul.mubr.f32.gmra.mrb[0].mxu0 %v971
  %v1041 = vpop.f32.mrb[0].mxu0
  %v1042 = vadd.f32 0.0, %v1041
  %v1043 = vpop.f32.mrb[0].mxu0
  %1044 = vdwg.mxu0
  %v1045 = vmul.f32 %v964, 0.35355338
  %v1046 = vmul.f32 %v1042, 0.35355338
  %v1047 = vadd.f32 %v1045, %v372
  %v1048 = vadd.f32 %v1046, %v376
  %v1049 = vsel %vm213, %v1047, -inf
  %1050 = vmax.xlane.f32.xlu0 %v1049
  %v1051 = vpop.xlane.xlu0 %1050
  %v1052 = vsel %vm213, %v1048, -inf
  %1053 = vmax.xlane.f32.xlu0 %v1052
  %v1054 = vpop.xlane.xlu0 %1053
  %v1055 = vsub.f32 %v1047, %v1051
  %v1056 = vsub.f32 %v1048, %v1054
  %v1057 = vmul.f32 %v1055, 1.442695
  %v1058 = vpow.pop %v1057
  %v1059 = vmul.f32 %v1056, 1.442695
  %v1060 = vpow.pop %v1059
  %v1061 = vsel %vm213, %v1058, 0.0
  %1062 = vadd.xlane.f32.xlu0 %v1061
  %v1063 = vpop.xlane.xlu0 %1062
  %v1064 = vsel %vm213, %v1060, 0.0
  %1065 = vadd.xlane.f32.xlu0 %v1064
  %v1066 = vpop.xlane.xlu0 %1065
  %v1067 = vrcp.pop %v1063
  %v1068 = vrcp.pop %v1066
  %v1069 = vmul.f32 %v1058, %v1067
  %v1070 = vmul.f32 %v1060, %v1068
  %1071 = vrot.lane.b32.xlu0 %v202, 48
  %v1072 = vpop.permute.xlu0 %1071
  %v1075 = vsel %vm213, %v1069, 0
  %1077 = vmatprep.subr.mxu0 0.0
  %1078 = vmatpush1.msra.mxu0 %v1072
  %1079 = vmatprep.subr.mxu0 0.0
  %1080 = vmatpush1.msra.mxu0 0.0
  %1081 = vmatprep.subr.mxu0 0.0
  %1082 = vmatpush1.msra.mxu0 0.0
  %1083 = vmatprep.subr.mxu0 0.0
  %1084 = vmatpush1.msra.mxu0 0.0
  %1085 = vmatprep.subr.mxu0 0.0
  %1086 = vmatpush1.msra.mxu0 0.0
  %1087 = vmatprep.subr.mxu0 0.0
  %1088 = vmatpush1.msra.mxu0 0.0
  %1089 = vmatprep.subr.mxu0 0.0
  %1090 = vmatpush1.msra.mxu0 0.0
  %1091 = vmatprep.subr.mxu0 0.0
  %1092 = vmatpush1.msra.mxu0 0.0
  %1093 = vmatprep.subr.mxu0 0.0
  %1094 = vmatpush1.msra.mxu0 0.0
  %1095 = vmatprep.subr.mxu0 0.0
  %1096 = vmatpush1.msra.mxu0 0.0
  %1097 = vmatprep.subr.mxu0 0.0
  %1098 = vmatpush1.msra.mxu0 0.0
  %1099 = vmatprep.subr.mxu0 0.0
  %1100 = vmatpush1.msra.mxu0 0.0
  %1101 = vmatprep.subr.mxu0 0.0
  %1102 = vmatpush1.msra.mxu0 0.0
  %1103 = vmatprep.subr.mxu0 0.0
  %1104 = vmatpush1.msra.mxu0 0.0
  %1105 = vmatprep.subr.mxu0 0.0
  %1106 = vmatpush1.msra.mxu0 0.0
  %1107 = vmatprep.subr.mxu0 0.0
  %1108 = vmatpush1.msra.mxu0 0.0
  %1109 = vmatprep.subr.mxu0 0.0
  %1110 = vmatpush1.msra.mxu0 0.0
  %1111 = vmatprep.subr.mxu0 0.0
  %1112 = vmatpush1.msra.mxu0 0.0
  %1113 = vmatprep.subr.mxu0 0.0
  %1114 = vmatpush1.msra.mxu0 0.0
  %1115 = vmatprep.subr.mxu0 0.0
  %1116 = vmatpush1.msra.mxu0 0.0
  %1117 = vmatprep.subr.mxu0 0.0
  %1118 = vmatpush1.msra.mxu0 0.0
  %1119 = vmatprep.subr.mxu0 0.0
  %1120 = vmatpush1.msra.mxu0 0.0
  %1121 = vmatprep.subr.mxu0 0.0
  %1122 = vmatpush1.msra.mxu0 0.0
  %1123 = vmatprep.subr.mxu0 0.0
  %1124 = vmatpush1.msra.mxu0 0.0
  %1125 = vmatprep.subr.mxu0 0.0
  %1126 = vmatpush1.msra.mxu0 0.0
  %1127 = vmatprep.subr.mxu0 0.0
  %1128 = vmatpush1.msra.mxu0 0.0
  %1129 = vmatprep.subr.mxu0 0.0
  %1130 = vmatpush1.msra.mxu0 0.0
  %1131 = vmatprep.subr.mxu0 0.0
  %1132 = vmatpush1.msra.mxu0 0.0
  %1133 = vmatprep.subr.mxu0 0.0
  %1134 = vmatpush1.msra.mxu0 0.0
  %1135 = vmatprep.subr.mxu0 0.0
  %1136 = vmatpush1.msra.mxu0 0.0
  %1137 = vmatprep.subr.mxu0 0.0
  %1138 = vmatpush1.msra.mxu0 0.0
  %1139 = vmatprep.subr.mxu0 0.0
  %1140 = vmatpush1.msra.mxu0 0.0
  %1141 = vmatprep.mubr.f32.mxu0 0.0
  %1142 = vmatmul.mubr.f32.gmra.mrb[0].mxu0 %v1075
  %v1143 = vpop.f32.mrb[0].mxu0
  %v1144 = vadd.f32 0.0, %v1143
  %v1145 = vpop.f32.mrb[0].mxu0
  %1146 = vdwg.mxu0
  %1147 = vrot.lane.b32.xlu0 %v207, 48
  %v1148 = vpop.permute.xlu0 %1147
  %v1151 = vsel %vm213, %v1070, 0
  %1153 = vmatprep.subr.mxu0 0.0
  %1154 = vmatpush1.msra.mxu0 %v1148
  %1155 = vmatprep.subr.mxu0 0.0
  %1156 = vmatpush1.msra.mxu0 0.0
  %1157 = vmatprep.subr.mxu0 0.0
  %1158 = vmatpush1.msra.mxu0 0.0
  %1159 = vmatprep.subr.mxu0 0.0
  %1160 = vmatpush1.msra.mxu0 0.0
  %1161 = vmatprep.subr.mxu0 0.0
  %1162 = vmatpush1.msra.mxu0 0.0
  %1163 = vmatprep.subr.mxu0 0.0
  %1164 = vmatpush1.msra.mxu0 0.0
  %1165 = vmatprep.subr.mxu0 0.0
  %1166 = vmatpush1.msra.mxu0 0.0
  %1167 = vmatprep.subr.mxu0 0.0
  %1168 = vmatpush1.msra.mxu0 0.0
  %1169 = vmatprep.subr.mxu0 0.0
  %1170 = vmatpush1.msra.mxu0 0.0
  %1171 = vmatprep.subr.mxu0 0.0
  %1172 = vmatpush1.msra.mxu0 0.0
  %1173 = vmatprep.subr.mxu0 0.0
  %1174 = vmatpush1.msra.mxu0 0.0
  %1175 = vmatprep.subr.mxu0 0.0
  %1176 = vmatpush1.msra.mxu0 0.0
  %1177 = vmatprep.subr.mxu0 0.0
  %1178 = vmatpush1.msra.mxu0 0.0
  %1179 = vmatprep.subr.mxu0 0.0
  %1180 = vmatpush1.msra.mxu0 0.0
  %1181 = vmatprep.subr.mxu0 0.0
  %1182 = vmatpush1.msra.mxu0 0.0
  %1183 = vmatprep.subr.mxu0 0.0
  %1184 = vmatpush1.msra.mxu0 0.0
  %1185 = vmatprep.subr.mxu0 0.0
  %1186 = vmatpush1.msra.mxu0 0.0
  %1187 = vmatprep.subr.mxu0 0.0
  %1188 = vmatpush1.msra.mxu0 0.0
  %1189 = vmatprep.subr.mxu0 0.0
  %1190 = vmatpush1.msra.mxu0 0.0
  %1191 = vmatprep.subr.mxu0 0.0
  %1192 = vmatpush1.msra.mxu0 0.0
  %1193 = vmatprep.subr.mxu0 0.0
  %1194 = vmatpush1.msra.mxu0 0.0
  %1195 = vmatprep.subr.mxu0 0.0
  %1196 = vmatpush1.msra.mxu0 0.0
  %1197 = vmatprep.subr.mxu0 0.0
  %1198 = vmatpush1.msra.mxu0 0.0
  %1199 = vmatprep.subr.mxu0 0.0
  %1200 = vmatpush1.msra.mxu0 0.0
  %1201 = vmatprep.subr.mxu0 0.0
  %1202 = vmatpush1.msra.mxu0 0.0
  %1203 = vmatprep.subr.mxu0 0.0
  %1204 = vmatpush1.msra.mxu0 0.0
  %1205 = vmatprep.subr.mxu0 0.0
  %1206 = vmatpush1.msra.mxu0 0.0
  %1207 = vmatprep.subr.mxu0 0.0
  %1208 = vmatpush1.msra.mxu0 0.0
  %1209 = vmatprep.subr.mxu0 0.0
  %1210 = vmatpush1.msra.mxu0 0.0
  %1211 = vmatprep.subr.mxu0 0.0
  %1212 = vmatpush1.msra.mxu0 0.0
  %1213 = vmatprep.subr.mxu0 0.0
  %1214 = vmatpush1.msra.mxu0 0.0
  %1215 = vmatprep.subr.mxu0 0.0
  %1216 = vmatpush1.msra.mxu0 0.0
  %1217 = vmatprep.mubr.f32.mxu0 0.0
  %1218 = vmatmul.mubr.f32.gmra.mrb[0].mxu0 %v1151
  %v1219 = vpop.f32.mrb[0].mxu0
  %v1220 = vadd.f32 0.0, %v1219
  %v1221 = vpop.f32.mrb[0].mxu0
  %1222 = vdwg.mxu0
  %1223 = vrot.lane.b32.xlu0 %v202, 104
  %v1224 = vpop.permute.xlu0 %1223
  %1225 = vrot.lane.b32.xlu0 %v202, 72
  %v1226 = vpop.permute.xlu0 %1225
  %v1227 = vsel %vm213, %v1224, 0
  %v1229 = vsel %vm213, %v1226, 0
  %1231 = vmatprep.subr.mxu0 0.0
  %1232 = vmatpush1.xpose.msra.mxu0 %v1229
  %1233 = vmatprep.subr.mxu0 0.0
  %1234 = vmatpush1.xpose.msra.mxu0 0.0
  %1235 = vmatprep.subr.mxu0 0.0
  %1236 = vmatpush1.xpose.msra.mxu0 0.0
  %1237 = vmatprep.subr.mxu0 0.0
  %1238 = vmatpush1.xpose.msra.mxu0 0.0
  %1239 = vmatprep.subr.mxu0 0.0
  %1240 = vmatpush1.xpose.msra.mxu0 0.0
  %1241 = vmatprep.subr.mxu0 0.0
  %1242 = vmatpush1.xpose.msra.mxu0 0.0
  %1243 = vmatprep.subr.mxu0 0.0
  %1244 = vmatpush1.xpose.msra.mxu0 0.0
  %1245 = vmatprep.subr.mxu0 0.0
  %1246 = vmatpush1.xpose.msra.mxu0 0.0
  %1247 = vmatprep.subr.mxu0 0.0
  %1248 = vmatpush1.xpose.msra.mxu0 0.0
  %1249 = vmatprep.subr.mxu0 0.0
  %1250 = vmatpush1.xpose.msra.mxu0 0.0
  %1251 = vmatprep.subr.mxu0 0.0
  %1252 = vmatpush1.xpose.msra.mxu0 0.0
  %1253 = vmatprep.subr.mxu0 0.0
  %1254 = vmatpush1.xpose.msra.mxu0 0.0
  %1255 = vmatprep.subr.mxu0 0.0
  %1256 = vmatpush1.xpose.msra.mxu0 0.0
  %1257 = vmatprep.subr.mxu0 0.0
  %1258 = vmatpush1.xpose.msra.mxu0 0.0
  %1259 = vmatprep.subr.mxu0 0.0
  %1260 = vmatpush1.xpose.msra.mxu0 0.0
  %1261 = vmatprep.subr.mxu0 0.0
  %1262 = vmatpush1.xpose.msra.mxu0 0.0
  %1263 = vmatprep.subr.mxu0 0.0
  %1264 = vmatpush1.xpose.msra.mxu0 0.0
  %1265 = vmatprep.subr.mxu0 0.0
  %1266 = vmatpush1.xpose.msra.mxu0 0.0
  %1267 = vmatprep.subr.mxu0 0.0
  %1268 = vmatpush1.xpose.msra.mxu0 0.0
  %1269 = vmatprep.subr.mxu0 0.0
  %1270 = vmatpush1.xpose.msra.mxu0 0.0
  %1271 = vmatprep.subr.mxu0 0.0
  %1272 = vmatpush1.xpose.msra.mxu0 0.0
  %1273 = vmatprep.subr.mxu0 0.0
  %1274 = vmatpush1.xpose.msra.mxu0 0.0
  %1275 = vmatprep.subr.mxu0 0.0
  %1276 = vmatpush1.xpose.msra.mxu0 0.0
  %1277 = vmatprep.subr.mxu0 0.0
  %1278 = vmatpush1.xpose.msra.mxu0 0.0
  %1279 = vmatprep.subr.mxu0 0.0
  %1280 = vmatpush1.xpose.msra.mxu0 0.0
  %1281 = vmatprep.subr.mxu0 0.0
  %1282 = vmatpush1.xpose.msra.mxu0 0.0
  %1283 = vmatprep.subr.mxu0 0.0
  %1284 = vmatpush1.xpose.msra.mxu0 0.0
  %1285 = vmatprep.subr.mxu0 0.0
  %1286 = vmatpush1.xpose.msra.mxu0 0.0
  %1287 = vmatprep.subr.mxu0 0.0
  %1288 = vmatpush1.xpose.msra.mxu0 0.0
  %1289 = vmatprep.subr.mxu0 0.0
  %1290 = vmatpush1.xpose.msra.mxu0 0.0
  %1291 = vmatprep.subr.mxu0 0.0
  %1292 = vmatpush1.xpose.msra.mxu0 0.0
  %1293 = vmatprep.subr.mxu0 0.0
  %1294 = vmatpush1.xpose.msra.mxu0 0.0
  %1295 = vmatprep.mubr.f32.mxu0 0.0
  %1296 = vmatmul.mubr.f32.gmra.mrb[0].mxu0 %v1227
  %v1297 = vpop.f32.mrb[0].mxu0
  %v1298 = vadd.f32 0.0, %v1297
  %v1299 = vpop.f32.mrb[0].mxu0
  %1300 = vdwg.mxu0
  %1301 = vrot.lane.b32.xlu0 %v207, 104
  %v1302 = vpop.permute.xlu0 %1301
  %1303 = vrot.lane.b32.xlu0 %v207, 72
  %v1304 = vpop.permute.xlu0 %1303
  %v1305 = vsel %vm213, %v1302, 0
  %v1307 = vsel %vm213, %v1304, 0
  %1309 = vmatprep.subr.mxu0 0.0
  %1310 = vmatpush1.xpose.msra.mxu0 %v1307
  %1311 = vmatprep.subr.mxu0 0.0
  %1312 = vmatpush1.xpose.msra.mxu0 0.0
  %1313 = vmatprep.subr.mxu0 0.0
  %1314 = vmatpush1.xpose.msra.mxu0 0.0
  %1315 = vmatprep.subr.mxu0 0.0
  %1316 = vmatpush1.xpose.msra.mxu0 0.0
  %1317 = vmatprep.subr.mxu0 0.0
  %1318 = vmatpush1.xpose.msra.mxu0 0.0
  %1319 = vmatprep.subr.mxu0 0.0
  %1320 = vmatpush1.xpose.msra.mxu0 0.0
  %1321 = vmatprep.subr.mxu0 0.0
  %1322 = vmatpush1.xpose.msra.mxu0 0.0
  %1323 = vmatprep.subr.mxu0 0.0
  %1324 = vmatpush1.xpose.msra.mxu0 0.0
  %1325 = vmatprep.subr.mxu0 0.0
  %1326 = vmatpush1.xpose.msra.mxu0 0.0
  %1327 = vmatprep.subr.mxu0 0.0
  %1328 = vmatpush1.xpose.msra.mxu0 0.0
  %1329 = vmatprep.subr.mxu0 0.0
  %1330 = vmatpush1.xpose.msra.mxu0 0.0
  %1331 = vmatprep.subr.mxu0 0.0
  %1332 = vmatpush1.xpose.msra.mxu0 0.0
  %1333 = vmatprep.subr.mxu0 0.0
  %1334 = vmatpush1.xpose.msra.mxu0 0.0
  %1335 = vmatprep.subr.mxu0 0.0
  %1336 = vmatpush1.xpose.msra.mxu0 0.0
  %1337 = vmatprep.subr.mxu0 0.0
  %1338 = vmatpush1.xpose.msra.mxu0 0.0
  %1339 = vmatprep.subr.mxu0 0.0
  %1340 = vmatpush1.xpose.msra.mxu0 0.0
  %1341 = vmatprep.subr.mxu0 0.0
  %1342 = vmatpush1.xpose.msra.mxu0 0.0
  %1343 = vmatprep.subr.mxu0 0.0
  %1344 = vmatpush1.xpose.msra.mxu0 0.0
  %1345 = vmatprep.subr.mxu0 0.0
  %1346 = vmatpush1.xpose.msra.mxu0 0.0
  %1347 = vmatprep.subr.mxu0 0.0
  %1348 = vmatpush1.xpose.msra.mxu0 0.0
  %1349 = vmatprep.subr.mxu0 0.0
  %1350 = vmatpush1.xpose.msra.mxu0 0.0
  %1351 = vmatprep.subr.mxu0 0.0
  %1352 = vmatpush1.xpose.msra.mxu0 0.0
  %1353 = vmatprep.subr.mxu0 0.0
  %1354 = vmatpush1.xpose.msra.mxu0 0.0
  %1355 = vmatprep.subr.mxu0 0.0
  %1356 = vmatpush1.xpose.msra.mxu0 0.0
  %1357 = vmatprep.subr.mxu0 0.0
  %1358 = vmatpush1.xpose.msra.mxu0 0.0
  %1359 = vmatprep.subr.mxu0 0.0
  %1360 = vmatpush1.xpose.msra.mxu0 0.0
  %1361 = vmatprep.subr.mxu0 0.0
  %1362 = vmatpush1.xpose.msra.mxu0 0.0
  %1363 = vmatprep.subr.mxu0 0.0
  %1364 = vmatpush1.xpose.msra.mxu0 0.0
  %1365 = vmatprep.subr.mxu0 0.0
  %1366 = vmatpush1.xpose.msra.mxu0 0.0
  %1367 = vmatprep.subr.mxu0 0.0
  %1368 = vmatpush1.xpose.msra.mxu0 0.0
  %1369 = vmatprep.subr.mxu0 0.0
  %1370 = vmatpush1.xpose.msra.mxu0 0.0
  %1371 = vmatprep.subr.mxu0 0.0
  %1372 = vmatpush1.xpose.msra.mxu0 0.0
  %1373 = vmatprep.mubr.f32.mxu0 0.0
  %1374 = vmatmul.mubr.f32.gmra.mrb[0].mxu0 %v1305
  %v1375 = vpop.f32.mrb[0].mxu0
  %v1376 = vadd.f32 0.0, %v1375
  %v1377 = vpop.f32.mrb[0].mxu0
  %1378 = vdwg.mxu0
  %v1379 = vmul.f32 %v1298, 0.35355338
  %v1380 = vmul.f32 %v1376, 0.35355338
  %v1381 = vadd.f32 %v1379, %v372
  %v1382 = vadd.f32 %v1380, %v376
  %v1383 = vsel %vm213, %v1381, -inf
  %1384 = vmax.xlane.f32.xlu0 %v1383
  %v1385 = vpop.xlane.xlu0 %1384
  %v1386 = vsel %vm213, %v1382, -inf
  %1387 = vmax.xlane.f32.xlu0 %v1386
  %v1388 = vpop.xlane.xlu0 %1387
  %v1389 = vsub.f32 %v1381, %v1385
  %v1390 = vsub.f32 %v1382, %v1388
  %v1391 = vmul.f32 %v1389, 1.442695
  %v1392 = vpow.pop %v1391
  %v1393 = vmul.f32 %v1390, 1.442695
  %v1394 = vpow.pop %v1393
  %v1395 = vsel %vm213, %v1392, 0.0
  %1396 = vadd.xlane.f32.xlu0 %v1395
  %v1397 = vpop.xlane.xlu0 %1396
  %v1398 = vsel %vm213, %v1394, 0.0
  %1399 = vadd.xlane.f32.xlu0 %v1398
  %v1400 = vpop.xlane.xlu0 %1399
  %v1401 = vrcp.pop %v1397
  %v1402 = vrcp.pop %v1400
  %v1403 = vmul.f32 %v1392, %v1401
  %v1404 = vmul.f32 %v1394, %v1402
  %1405 = vrot.lane.b32.xlu0 %v202, 40
  %v1406 = vpop.permute.xlu0 %1405
  %v1409 = vsel %vm213, %v1403, 0
  %1411 = vmatprep.subr.mxu0 0.0
  %1412 = vmatpush1.msra.mxu0 %v1406
  %1413 = vmatprep.subr.mxu0 0.0
  %1414 = vmatpush1.msra.mxu0 0.0
  %1415 = vmatprep.subr.mxu0 0.0
  %1416 = vmatpush1.msra.mxu0 0.0
  %1417 = vmatprep.subr.mxu0 0.0
  %1418 = vmatpush1.msra.mxu0 0.0
  %1419 = vmatprep.subr.mxu0 0.0
  %1420 = vmatpush1.msra.mxu0 0.0
  %1421 = vmatprep.subr.mxu0 0.0
  %1422 = vmatpush1.msra.mxu0 0.0
  %1423 = vmatprep.subr.mxu0 0.0
  %1424 = vmatpush1.msra.mxu0 0.0
  %1425 = vmatprep.subr.mxu0 0.0
  %1426 = vmatpush1.msra.mxu0 0.0
  %1427 = vmatprep.subr.mxu0 0.0
  %1428 = vmatpush1.msra.mxu0 0.0
  %1429 = vmatprep.subr.mxu0 0.0
  %1430 = vmatpush1.msra.mxu0 0.0
  %1431 = vmatprep.subr.mxu0 0.0
  %1432 = vmatpush1.msra.mxu0 0.0
  %1433 = vmatprep.subr.mxu0 0.0
  %1434 = vmatpush1.msra.mxu0 0.0
  %1435 = vmatprep.subr.mxu0 0.0
  %1436 = vmatpush1.msra.mxu0 0.0
  %1437 = vmatprep.subr.mxu0 0.0
  %1438 = vmatpush1.msra.mxu0 0.0
  %1439 = vmatprep.subr.mxu0 0.0
  %1440 = vmatpush1.msra.mxu0 0.0
  %1441 = vmatprep.subr.mxu0 0.0
  %1442 = vmatpush1.msra.mxu0 0.0
  %1443 = vmatprep.subr.mxu0 0.0
  %1444 = vmatpush1.msra.mxu0 0.0
  %1445 = vmatprep.subr.mxu0 0.0
  %1446 = vmatpush1.msra.mxu0 0.0
  %1447 = vmatprep.subr.mxu0 0.0
  %1448 = vmatpush1.msra.mxu0 0.0
  %1449 = vmatprep.subr.mxu0 0.0
  %1450 = vmatpush1.msra.mxu0 0.0
  %1451 = vmatprep.subr.mxu0 0.0
  %1452 = vmatpush1.msra.mxu0 0.0
  %1453 = vmatprep.subr.mxu0 0.0
  %1454 = vmatpush1.msra.mxu0 0.0
  %1455 = vmatprep.subr.mxu0 0.0
  %1456 = vmatpush1.msra.mxu0 0.0
  %1457 = vmatprep.subr.mxu0 0.0
  %1458 = vmatpush1.msra.mxu0 0.0
  %1459 = vmatprep.subr.mxu0 0.0
  %1460 = vmatpush1.msra.mxu0 0.0
  %1461 = vmatprep.subr.mxu0 0.0
  %1462 = vmatpush1.msra.mxu0 0.0
  %1463 = vmatprep.subr.mxu0 0.0
  %1464 = vmatpush1.msra.mxu0 0.0
  %1465 = vmatprep.subr.mxu0 0.0
  %1466 = vmatpush1.msra.mxu0 0.0
  %1467 = vmatprep.subr.mxu0 0.0
  %1468 = vmatpush1.msra.mxu0 0.0
  %1469 = vmatprep.subr.mxu0 0.0
  %1470 = vmatpush1.msra.mxu0 0.0
  %1471 = vmatprep.subr.mxu0 0.0
  %1472 = vmatpush1.msra.mxu0 0.0
  %1473 = vmatprep.subr.mxu0 0.0
  %1474 = vmatpush1.msra.mxu0 0.0
  %1475 = vmatprep.mubr.f32.mxu0 0.0
  %1476 = vmatmul.mubr.f32.gmra.mrb[0].mxu0 %v1409
  %v1477 = vpop.f32.mrb[0].mxu0
  %v1478 = vadd.f32 0.0, %v1477
  %v1479 = vpop.f32.mrb[0].mxu0
  %1480 = vdwg.mxu0
  %1481 = vrot.lane.b32.xlu0 %v207, 40
  %v1482 = vpop.permute.xlu0 %1481
  %v1485 = vsel %vm213, %v1404, 0
  %1487 = vmatprep.subr.mxu0 0.0
  %1488 = vmatpush1.msra.mxu0 %v1482
  %1489 = vmatprep.subr.mxu0 0.0
  %1490 = vmatpush1.msra.mxu0 0.0
  %1491 = vmatprep.subr.mxu0 0.0
  %1492 = vmatpush1.msra.mxu0 0.0
  %1493 = vmatprep.subr.mxu0 0.0
  %1494 = vmatpush1.msra.mxu0 0.0
  %1495 = vmatprep.subr.mxu0 0.0
  %1496 = vmatpush1.msra.mxu0 0.0
  %1497 = vmatprep.subr.mxu0 0.0
  %1498 = vmatpush1.msra.mxu0 0.0
  %1499 = vmatprep.subr.mxu0 0.0
  %1500 = vmatpush1.msra.mxu0 0.0
  %1501 = vmatprep.subr.mxu0 0.0
  %1502 = vmatpush1.msra.mxu0 0.0
  %1503 = vmatprep.subr.mxu0 0.0
  %1504 = vmatpush1.msra.mxu0 0.0
  %1505 = vmatprep.subr.mxu0 0.0
  %1506 = vmatpush1.msra.mxu0 0.0
  %1507 = vmatprep.subr.mxu0 0.0
  %1508 = vmatpush1.msra.mxu0 0.0
  %1509 = vmatprep.subr.mxu0 0.0
  %1510 = vmatpush1.msra.mxu0 0.0
  %1511 = vmatprep.subr.mxu0 0.0
  %1512 = vmatpush1.msra.mxu0 0.0
  %1513 = vmatprep.subr.mxu0 0.0
  %1514 = vmatpush1.msra.mxu0 0.0
  %1515 = vmatprep.subr.mxu0 0.0
  %1516 = vmatpush1.msra.mxu0 0.0
  %1517 = vmatprep.subr.mxu0 0.0
  %1518 = vmatpush1.msra.mxu0 0.0
  %1519 = vmatprep.subr.mxu0 0.0
  %1520 = vmatpush1.msra.mxu0 0.0
  %1521 = vmatprep.subr.mxu0 0.0
  %1522 = vmatpush1.msra.mxu0 0.0
  %1523 = vmatprep.subr.mxu0 0.0
  %1524 = vmatpush1.msra.mxu0 0.0
  %1525 = vmatprep.subr.mxu0 0.0
  %1526 = vmatpush1.msra.mxu0 0.0
  %1527 = vmatprep.subr.mxu0 0.0
  %1528 = vmatpush1.msra.mxu0 0.0
  %1529 = vmatprep.subr.mxu0 0.0
  %1530 = vmatpush1.msra.mxu0 0.0
  %1531 = vmatprep.subr.mxu0 0.0
  %1532 = vmatpush1.msra.mxu0 0.0
  %1533 = vmatprep.subr.mxu0 0.0
  %1534 = vmatpush1.msra.mxu0 0.0
  %1535 = vmatprep.subr.mxu0 0.0
  %1536 = vmatpush1.msra.mxu0 0.0
  %1537 = vmatprep.subr.mxu0 0.0
  %1538 = vmatpush1.msra.mxu0 0.0
  %1539 = vmatprep.subr.mxu0 0.0
  %1540 = vmatpush1.msra.mxu0 0.0
  %1541 = vmatprep.subr.mxu0 0.0
  %1542 = vmatpush1.msra.mxu0 0.0
  %1543 = vmatprep.subr.mxu0 0.0
  %1544 = vmatpush1.msra.mxu0 0.0
  %1545 = vmatprep.subr.mxu0 0.0
  %1546 = vmatpush1.msra.mxu0 0.0
  %1547 = vmatprep.subr.mxu0 0.0
  %1548 = vmatpush1.msra.mxu0 0.0
  %1549 = vmatprep.subr.mxu0 0.0
  %1550 = vmatpush1.msra.mxu0 0.0
  %1551 = vmatprep.mubr.f32.mxu0 0.0
  %1552 = vmatmul.mubr.f32.gmra.mrb[0].mxu0 %v1485
  %v1553 = vpop.f32.mrb[0].mxu0
  %v1554 = vadd.f32 0.0, %v1553
  %v1555 = vpop.f32.mrb[0].mxu0
  %1556 = vdwg.mxu0
  %1559 = vrot.lane.b32.xlu0 %v810, 8
  %v1560 = vpop.permute.xlu0 %1559
  %1561 = vrot.lane.b32.xlu0 %v886, 8
  %v1562 = vpop.permute.xlu0 %1561
  %1567 = vrot.lane.b32.xlu0 %v1144, 16
  %v1568 = vpop.permute.xlu0 %1567
  %1569 = vrot.lane.b32.xlu0 %v1220, 16
  %v1570 = vpop.permute.xlu0 %1569
  %1575 = vrot.lane.b32.xlu0 %v1478, 24
  %v1576 = vpop.permute.xlu0 %1575
  %1577 = vrot.lane.b32.xlu0 %v1554, 24
  %v1578 = vpop.permute.xlu0 %1577
  %v1581 = vsel %vm213, %v476, %v1560
  %v1582 = vsel %vm213, %v552, %v1562
  %vm1583 = vcmask 130048
  %v1584 = vsel %vm1583, %v1581, %v1568
  %v1585 = vsel %vm1583, %v1582, %v1570
  %vm1586 = vcmask 195584
  %v1587 = vsel %vm1586, %v1584, %v1576
  %v1588 = vsel %vm1586, %v1585, %v1578
  %v1589 = vld [vmem:[%s7] sm:$0xff]
  %v1590 = vld [vmem:[%s7 + $0x8] sm:$0xff]
  %v1591 = vld [vmem:[%s7 + $0x10] sm:$0xff]
  %v1592 = vld [vmem:[%s7 + $0x18] sm:$0xff]
  %v1593 = vld [vmem:[%s8] sm:$0x1]
  %v1595 = vlaneseq
  %v1596 = vshrl.u32 %v1595, 7
  %v1597 = vsub.s32 0, %v1596
  %v1598 = vrot.slane %v1593, %v1597
  %v1601 = vsel %vm68, %v1587, 0
  %v1604 = vsel %vm68, %v1588, 0
  %1606 = vmatprep.subr.mxu0 0.0
  %1607 = vmatpush1.msra.mxu0 %v1589
  %1608 = vmatprep.subr.mxu0 0.0
  %1609 = vmatpush1.msra.mxu0 %v1590
  %1610 = vmatprep.subr.mxu0 0.0
  %1611 = vmatpush1.msra.mxu0 %v1591
  %1612 = vmatprep.subr.mxu0 0.0
  %1613 = vmatpush1.msra.mxu0 %v1592
  %1614 = vmatprep.subr.mxu0 0.0
  %1615 = vmatpush1.msra.mxu0 0.0
  %1616 = vmatprep.subr.mxu0 0.0
  %1617 = vmatpush1.msra.mxu0 0.0
  %1618 = vmatprep.subr.mxu0 0.0
  %1619 = vmatpush1.msra.mxu0 0.0
  %1620 = vmatprep.subr.mxu0 0.0
  %1621 = vmatpush1.msra.mxu0 0.0
  %1622 = vmatprep.subr.mxu0 0.0
  %1623 = vmatpush1.msra.mxu0 0.0
  %1624 = vmatprep.subr.mxu0 0.0
  %1625 = vmatpush1.msra.mxu0 0.0
  %1626 = vmatprep.subr.mxu0 0.0
  %1627 = vmatpush1.msra.mxu0 0.0
  %1628 = vmatprep.subr.mxu0 0.0
  %1629 = vmatpush1.msra.mxu0 0.0
  %1630 = vmatprep.subr.mxu0 0.0
  %1631 = vmatpush1.msra.mxu0 0.0
  %1632 = vmatprep.subr.mxu0 0.0
  %1633 = vmatpush1.msra.mxu0 0.0
  %1634 = vmatprep.subr.mxu0 0.0
  %1635 = vmatpush1.msra.mxu0 0.0
  %1636 = vmatprep.subr.mxu0 0.0
  %1637 = vmatpush1.msra.mxu0 0.0
  %1638 = vmatprep.subr.mxu0 0.0
  %1639 = vmatpush1.msra.mxu0 0.0
  %1640 = vmatprep.subr.mxu0 0.0
  %1641 = vmatpush1.msra.mxu0 0.0
  %1642 = vmatprep.subr.mxu0 0.0
  %1643 = vmatpush1.msra.mxu0 0.0
  %1644 = vmatprep.subr.mxu0 0.0
  %1645 = vmatpush1.msra.mxu0 0.0
  %1646 = vmatprep.subr.mxu0 0.0
  %1647 = vmatpush1.msra.mxu0 0.0
  %1648 = vmatprep.subr.mxu0 0.0
  %1649 = vmatpush1.msra.mxu0 0.0
  %1650 = vmatprep.subr.mxu0 0.0
  %1651 = vmatpush1.msra.mxu0 0.0
  %1652 = vmatprep.subr.mxu0 0.0
  %1653 = vmatpush1.msra.mxu0 0.0
  %1654 = vmatprep.subr.mxu0 0.0
  %1655 = vmatpush1.msra.mxu0 0.0
  %1656 = vmatprep.subr.mxu0 0.0
  %1657 = vmatpush1.msra.mxu0 0.0
  %1658 = vmatprep.subr.mxu0 0.0
  %1659 = vmatpush1.msra.mxu0 0.0
  %1660 = vmatprep.subr.mxu0 0.0
  %1661 = vmatpush1.msra.mxu0 0.0
  %1662 = vmatprep.subr.mxu0 0.0
  %1663 = vmatpush1.msra.mxu0 0.0
  %1664 = vmatprep.subr.mxu0 0.0
  %1665 = vmatpush1.msra.mxu0 0.0
  %1666 = vmatprep.subr.mxu0 0.0
  %1667 = vmatpush1.msra.mxu0 0.0
  %1668 = vmatprep.subr.mxu0 0.0
  %1669 = vmatpush1.msra.mxu0 0.0
  %1670 = vmatprep.mubr.f32.mxu0 0.0
  %1671 = vmatmul.mubr.f32.gmra.mrb[0].mxu0 %v1601
  %v1672 = vpop.f32.mrb[0].mxu0
  %v1673 = vadd.f32 %v1598, %v1672
  %v1674 = vpop.f32.mrb[0].mxu0
  %1675 = vmatprep.mubr.f32.mxu0 0.0
  %1676 = vmatmul.mubr.f32.gmra.mrb[0].mxu0 %v1604
  %v1677 = vpop.f32.mrb[0].mxu0
  %v1678 = vadd.f32 %v1598, %v1677
  %v1679 = vpop.f32.mrb[0].mxu0
  %1680 = vdwg.mxu0
  %v1681 = vadd.f32 %v1673, %v110
  %v1682 = vadd.f32 %v1678, %v111
  %v1683 = vld [vmem:[%s9] sm:$0x1]
  %v1684 = vld [vmem:[%s10] sm:$0x1]
  %v1685 = vsel %vm68, %v1681, 0.0
  %1686 = vadd.xlane.f32.xlu0 %v1685
  %v1687 = vpop.xlane.xlu0 %1686
  %v1688 = vsel %vm68, %v1682, 0.0
  %1689 = vadd.xlane.f32.xlu0 %v1688
  %v1690 = vpop.xlane.xlu0 %1689
  %v1691 = vmul.f32 %v1687, %v75
  %v1692 = vmul.f32 %v1690, %v75
  %v1693 = vsub.f32 %v1681, %v1691
  %v1694 = vsub.f32 %v1682, %v1692
  %v1695 = vmul.f32 %v1693, %v1693
  %v1696 = vmul.f32 %v1694, %v1694
  %v1697 = vsel %vm68, %v1695, 0.0
  %1698 = vadd.xlane.f32.xlu0 %v1697
  %v1699 = vpop.xlane.xlu0 %1698
  %v1700 = vsel %vm68, %v1696, 0.0
  %1701 = vadd.xlane.f32.xlu0 %v1700
  %v1702 = vpop.xlane.xlu0 %1701
  %v1703 = vmul.f32 %v1699, %v75
  %v1704 = vmul.f32 %v1702, %v75
  %v1705 = vadd.f32 %v1703, 1e-05
  %v1706 = vadd.f32 %v1704, 1e-05
  %v1707 = vrsqrt.pop %v1705
  %v1708 = vrsqrt.pop %v1706
  %v1709 = vmul.f32 %v1693, %v1707
  %v1710 = vmul.f32 %v1694, %v1708
  %v1712 = vlaneseq
  %v1713 = vshrl.u32 %v1712, 7
  %v1714 = vsub.s32 0, %v1713
  %v1715 = vrot.slane %v1683, %v1714
  %v1717 = vmul.f32 %v1709, %v1715
  %v1718 = vmul.f32 %v1710, %v1715
  %v1720 = vlaneseq
  %v1721 = vshrl.u32 %v1720, 7
  %v1722 = vsub.s32 0, %v1721
  %v1723 = vrot.slane %v1684, %v1722
  %v1725 = vadd.f32 %v1717, %v1723
  %v1726 = vadd.f32 %v1718, %v1723
  %v1727 = vld [vmem:[%s11] sm:$0xff]
  %v1728 = vld [vmem:[%s11 + $0x8] sm:$0xff]
  %v1729 = vld [vmem:[%s11 + $0x10] sm:$0xff]
  %v1730 = vld [vmem:[%s11 + $0x18] sm:$0xff]
  %v1731 = vld [vmem:[%s12] sm:$0x1]
  %v1733 = vlaneseq
  %v1734 = vshrl.u32 %v1733, 7
  %v1735 = vsub.s32 0, %v1734
  %v1736 = vrot.slane %v1731, %v1735
  %v1739 = vsel %vm68, %v1725, 0
  %v1742 = vsel %vm68, %v1726, 0
  %1744 = vmatprep.subr.mxu0 0.0
  %1745 = vmatpush1.msra.mxu0 %v1727
  %1746 = vmatprep.subr.mxu0 0.0
  %1747 = vmatpush1.msra.mxu0 %v1728
  %1748 = vmatprep.subr.mxu0 0.0
  %1749 = vmatpush1.msra.mxu0 %v1729
  %1750 = vmatprep.subr.mxu0 0.0
  %1751 = vmatpush1.msra.mxu0 %v1730
  %1752 = vmatprep.subr.mxu0 0.0
  %1753 = vmatpush1.msra.mxu0 0.0
  %1754 = vmatprep.subr.mxu0 0.0
  %1755 = vmatpush1.msra.mxu0 0.0
  %1756 = vmatprep.subr.mxu0 0.0
  %1757 = vmatpush1.msra.mxu0 0.0
  %1758 = vmatprep.subr.mxu0 0.0
  %1759 = vmatpush1.msra.mxu0 0.0
  %1760 = vmatprep.subr.mxu0 0.0
  %1761 = vmatpush1.msra.mxu0 0.0
  %1762 = vmatprep.subr.mxu0 0.0
  %1763 = vmatpush1.msra.mxu0 0.0
  %1764 = vmatprep.subr.mxu0 0.0
  %1765 = vmatpush1.msra.mxu0 0.0
  %1766 = vmatprep.subr.mxu0 0.0
  %1767 = vmatpush1.msra.mxu0 0.0
  %1768 = vmatprep.subr.mxu0 0.0
  %1769 = vmatpush1.msra.mxu0 0.0
  %1770 = vmatprep.subr.mxu0 0.0
  %1771 = vmatpush1.msra.mxu0 0.0
  %1772 = vmatprep.subr.mxu0 0.0
  %1773 = vmatpush1.msra.mxu0 0.0
  %1774 = vmatprep.subr.mxu0 0.0
  %1775 = vmatpush1.msra.mxu0 0.0
  %1776 = vmatprep.subr.mxu0 0.0
  %1777 = vmatpush1.msra.mxu0 0.0
  %1778 = vmatprep.subr.mxu0 0.0
  %1779 = vmatpush1.msra.mxu0 0.0
  %1780 = vmatprep.subr.mxu0 0.0
  %1781 = vmatpush1.msra.mxu0 0.0
  %1782 = vmatprep.subr.mxu0 0.0
  %1783 = vmatpush1.msra.mxu0 0.0
  %1784 = vmatprep.subr.mxu0 0.0
  %1785 = vmatpush1.msra.mxu0 0.0
  %1786 = vmatprep.subr.mxu0 0.0
  %1787 = vmatpush1.msra.mxu0 0.0
  %1788 = vmatprep.subr.mxu0 0.0
  %1789 = vmatpush1.msra.mxu0 0.0
  %1790 = vmatprep.subr.mxu0 0.0
  %1791 = vmatpush1.msra.mxu0 0.0
  %1792 = vmatprep.subr.mxu0 0.0
  %1793 = vmatpush1.msra.mxu0 0.0
  %1794 = vmatprep.subr.mxu0 0.0
  %1795 = vmatpush1.msra.mxu0 0.0
  %1796 = vmatprep.subr.mxu0 0.0
  %1797 = vmatpush1.msra.mxu0 0.0
  %1798 = vmatprep.subr.mxu0 0.0
  %1799 = vmatpush1.msra.mxu0 0.0
  %1800 = vmatprep.subr.mxu0 0.0
  %1801 = vmatpush1.msra.mxu0 0.0
  %1802 = vmatprep.subr.mxu0 0.0
  %1803 = vmatpush1.msra.mxu0 0.0
  %1804 = vmatprep.subr.mxu0 0.0
  %1805 = vmatpush1.msra.mxu0 0.0
  %1806 = vmatprep.subr.mxu0 0.0
  %1807 = vmatpush1.msra.mxu0 0.0
  %1808 = vmatprep.mubr.f32.mxu0 0.0
  %1809 = vmatmul.mubr.f32.gmra.mrb[0].mxu0 %v1739
  %v1810 = vpop.f32.mrb[0].mxu0
  %v1811 = vadd.f32 %v1736, %v1810
  %v1812 = vpop.f32.mrb[0].mxu0
  %1813 = vmatprep.mubr.f32.mxu0 0.0
  %1814 = vmatmul.mubr.f32.gmra.mrb[0].mxu0 %v1742
  %v1815 = vpop.f32.mrb[0].mxu0
  %v1816 = vadd.f32 %v1736, %v1815
  %v1817 = vpop.f32.mrb[0].mxu0
  %1818 = vdwg.mxu0
  %v1819 = vmul.f32 %v1811, %v1811
  %v1820 = vmul.f32 %v1816, %v1816
  %v1821 = vmul.f32 %v1811, %v1819
  %v1822 = vmul.f32 %v1816, %v1820
  %v1823 = vmul.f32 %v1821, 0.044715
  %v1824 = vmul.f32 %v1822, 0.044715
  %v1825 = vadd.f32 %v1811, %v1823
  %v1826 = vadd.f32 %v1816, %v1824
  %v1827 = vmul.f32 %v1825, 0.7978846
  %v1828 = vmul.f32 %v1826, 0.7978846
  %v1829 = vtanh.pop %v1827
  %v1830 = vtanh.pop %v1828
  %v1831 = vadd.f32 %v1829, 1.0
  %v1832 = vadd.f32 %v1830, 1.0
  %v1833 = vmul.f32 %v1831, 0.5
  %v1834 = vmul.f32 %v1832, 0.5
  %v1835 = vmul.f32 %v1811, %v1833
  %v1836 = vmul.f32 %v1816, %v1834
  %v1837 = vld [vmem:[%s13] sm:$0xff]
  %v1838 = vld [vmem:[%s13 + $0x8] sm:$0xff]
  %v1839 = vld [vmem:[%s13 + $0x10] sm:$0xff]
  %v1840 = vld [vmem:[%s13 + $0x18] sm:$0xff]
  %v1841 = vld [vmem:[%s13 + $0x20] sm:$0xff]
  %v1842 = vld [vmem:[%s13 + $0x28] sm:$0xff]
  %v1843 = vld [vmem:[%s13 + $0x30] sm:$0xff]
  %v1844 = vld [vmem:[%s13 + $0x38] sm:$0xff]
  %v1845 = vld [vmem:[%s14] sm:$0x1]
  %v1847 = vlaneseq
  %v1848 = vshrl.u32 %v1847, 7
  %v1849 = vsub.s32 0, %v1848
  %v1850 = vrot.slane %v1845, %v1849
  %vm1852 = vcmask 523264
  %v1854 = vsel %vm1852, %v1835, 0
  %v1857 = vsel %vm1852, %v1836, 0
  %1859 = vmatprep.subr.mxu0 0.0
  %1860 = vmatpush1.msra.mxu0 %v1837
  %1861 = vmatprep.subr.mxu0 0.0
  %1862 = vmatpush1.msra.mxu0 %v1838
  %1863 = vmatprep.subr.mxu0 0.0
  %1864 = vmatpush1.msra.mxu0 %v1839
  %1865 = vmatprep.subr.mxu0 0.0
  %1866 = vmatpush1.msra.mxu0 %v1840
  %1867 = vmatprep.subr.mxu0 0.0
  %1868 = vmatpush1.msra.mxu0 %v1841
  %1869 = vmatprep.subr.mxu0 0.0
  %1870 = vmatpush1.msra.mxu0 %v1842
  %1871 = vmatprep.subr.mxu0 0.0
  %1872 = vmatpush1.msra.mxu0 %v1843
  %1873 = vmatprep.subr.mxu0 0.0
  %1874 = vmatpush1.msra.mxu0 %v1844
  %1875 = vmatprep.subr.mxu0 0.0
  %1876 = vmatpush1.msra.mxu0 0.0
  %1877 = vmatprep.subr.mxu0 0.0
  %1878 = vmatpush1.msra.mxu0 0.0
  %1879 = vmatprep.subr.mxu0 0.0
  %1880 = vmatpush1.msra.mxu0 0.0
  %1881 = vmatprep.subr.mxu0 0.0
  %1882 = vmatpush1.msra.mxu0 0.0
  %1883 = vmatprep.subr.mxu0 0.0
  %1884 = vmatpush1.msra.mxu0 0.0
  %1885 = vmatprep.subr.mxu0 0.0
  %1886 = vmatpush1.msra.mxu0 0.0
  %1887 = vmatprep.subr.mxu0 0.0
  %1888 = vmatpush1.msra.mxu0 0.0
  %1889 = vmatprep.subr.mxu0 0.0
  %1890 = vmatpush1.msra.mxu0 0.0
  %1891 = vmatprep.subr.mxu0 0.0
  %1892 = vmatpush1.msra.mxu0 0.0
  %1893 = vmatprep.subr.mxu0 0.0
  %1894 = vmatpush1.msra.mxu0 0.0
  %1895 = vmatprep.subr.mxu0 0.0
  %1896 = vmatpush1.msra.mxu0 0.0
  %1897 = vmatprep.subr.mxu0 0.0
  %1898 = vmatpush1.msra.mxu0 0.0
  %1899 = vmatprep.subr.mxu0 0.0
  %1900 = vmatpush1.msra.mxu0 0.0
  %1901 = vmatprep.subr.mxu0 0.0
  %1902 = vmatpush1.msra.mxu0 0.0
  %1903 = vmatprep.subr.mxu0 0.0
  %1904 = vmatpush1.msra.mxu0 0.0
  %1905 = vmatprep.subr.mxu0 0.0
  %1906 = vmatpush1.msra.mxu0 0.0
  %1907 = vmatprep.subr.mxu0 0.0
  %1908 = vmatpush1.msra.mxu0 0.0
  %1909 = vmatprep.subr.mxu0 0.0
  %1910 = vmatpush1.msra.mxu0 0.0
  %1911 = vmatprep.subr.mxu0 0.0
  %1912 = vmatpush1.msra.mxu0 0.0
  %1913 = vmatprep.subr.mxu0 0.0
  %1914 = vmatpush1.msra.mxu0 0.0
  %1915 = vmatprep.subr.mxu0 0.0
  %1916 = vmatpush1.msra.mxu0 0.0
  %1917 = vmatprep.subr.mxu0 0.0
  %1918 = vmatpush1.msra.mxu0 0.0
  %1919 = vmatprep.subr.mxu0 0.0
  %1920 = vmatpush1.msra.mxu0 0.0
  %1921 = vmatprep.subr.mxu0 0.0
  %1922 = vmatpush1.msra.mxu0 0.0
  %1923 = vmatprep.mubr.f32.mxu0 0.0
  %1924 = vmatmul.mubr.f32.gmra.mrb[0].mxu0 %v1854
  %v1925 = vpop.f32.mrb[0].mxu0
  %v1926 = vadd.f32 %v1850, %v1925
  %v1927 = vpop.f32.mrb[0].mxu0
  %1928 = vmatprep.mubr.f32.mxu0 0.0
  %1929 = vmatmul.mubr.f32.gmra.mrb[0].mxu0 %v1857
  %v1930 = vpop.f32.mrb[0].mxu0
  %v1931 = vadd.f32 %v1850, %v1930
  %v1932 = vpop.f32.mrb[0].mxu0
  %1933 = vdwg.mxu0
  %v1934 = vadd.f32 %v1926, %v1725
  %v1935 = vadd.f32 %v1931, %v1726
  %v1936 = vld [vmem:[%s15] sm:$0x1]
  %v1937 = vld [vmem:[%s16] sm:$0x1]
  %v1938 = vsel %vm68, %v1934, 0.0
  %1939 = vadd.xlane.f32.xlu0 %v1938
  %v1940 = vpop.xlane.xlu0 %1939
  %v1941 = vsel %vm68, %v1935, 0.0
  %1942 = vadd.xlane.f32.xlu0 %v1941
  %v1943 = vpop.xlane.xlu0 %1942
  %v1944 = vmul.f32 %v1940, %v75
  %v1945 = vmul.f32 %v1943, %v75
  %v1946 = vsub.f32 %v1934, %v1944
  %v1947 = vsub.f32 %v1935, %v1945
  %v1948 = vmul.f32 %v1946, %v1946
  %v1949 = vmul.f32 %v1947, %v1947
  %v1950 = vsel %vm68, %v1948, 0.0
  %1951 = vadd.xlane.f32.xlu0 %v1950
  %v1952 = vpop.xlane.xlu0 %1951
  %v1953 = vsel %vm68, %v1949, 0.0
  %1954 = vadd.xlane.f32.xlu0 %v1953
  %v1955 = vpop.xlane.xlu0 %1954
  %v1956 = vmul.f32 %v1952, %v75
  %v1957 = vmul.f32 %v1955, %v75
  %v1958 = vadd.f32 %v1956, 1e-05
  %v1959 = vadd.f32 %v1957, 1e-05
  %v1960 = vrsqrt.pop %v1958
  %v1961 = vrsqrt.pop %v1959
  %v1962 = vmul.f32 %v1946, %v1960
  %v1963 = vmul.f32 %v1947, %v1961
  %v1965 = vlaneseq
  %v1966 = vshrl.u32 %v1965, 7
  %v1967 = vsub.s32 0, %v1966
  %v1968 = vrot.slane %v1936, %v1967
  %v1970 = vmul.f32 %v1962, %v1968
  %v1971 = vmul.f32 %v1963, %v1968
  %v1973 = vlaneseq
  %v1974 = vshrl.u32 %v1973, 7
  %v1975 = vsub.s32 0, %v1974
  %v1976 = vrot.slane %v1937, %v1975
  %v1978 = vadd.f32 %v1970, %v1976
  %v1979 = vadd.f32 %v1971, %v1976
  %s1980 = scalar_lea.vmem %s5, 32
  %v1981 = vld [vmem:[%s1980] sm:$0xff]
  %v1982 = vld [vmem:[%s1980 + $0x8] sm:$0xff]
  %v1983 = vld [vmem:[%s1980 + $0x10] sm:$0xff]
  %v1984 = vld [vmem:[%s1980 + $0x18] sm:$0xff]
  %s1985 = scalar_lea.vmem %s6, 1
  %v1986 = vld [vmem:[%s1985] sm:$0x1]
  %v1988 = vlaneseq
  %v1989 = vshrl.u32 %v1988, 7
  %v1990 = vsub.s32 0, %v1989
  %v1991 = vrot.slane %v1986, %v1990
  %v1994 = vsel %vm68, %v1978, 0
  %v1997 = vsel %vm68, %v1979, 0
  %1999 = vmatprep.subr.mxu0 0.0
  %2000 = vmatpush1.msra.mxu0 %v1981
  %2001 = vmatprep.subr.mxu0 0.0
  %2002 = vmatpush1.msra.mxu0 %v1982
  %2003 = vmatprep.subr.mxu0 0.0
  %2004 = vmatpush1.msra.mxu0 %v1983
  %2005 = vmatprep.subr.mxu0 0.0
  %2006 = vmatpush1.msra.mxu0 %v1984
  %2007 = vmatprep.subr.mxu0 0.0
  %2008 = vmatpush1.msra.mxu0 0.0
  %2009 = vmatprep.subr.mxu0 0.0
  %2010 = vmatpush1.msra.mxu0 0.0
  %2011 = vmatprep.subr.mxu0 0.0
  %2012 = vmatpush1.msra.mxu0 0.0
  %2013 = vmatprep.subr.mxu0 0.0
  %2014 = vmatpush1.msra.mxu0 0.0
  %2015 = vmatprep.subr.mxu0 0.0
  %2016 = vmatpush1.msra.mxu0 0.0
  %2017 = vmatprep.subr.mxu0 0.0
  %2018 = vmatpush1.msra.mxu0 0.0
  %2019 = vmatprep.subr.mxu0 0.0
  %2020 = vmatpush1.msra.mxu0 0.0
  %2021 = vmatprep.subr.mxu0 0.0
  %2022 = vmatpush1.msra.mxu0 0.0
  %2023 = vmatprep.subr.mxu0 0.0
  %2024 = vmatpush1.msra.mxu0 0.0
  %2025 = vmatprep.subr.mxu0 0.0
  %2026 = vmatpush1.msra.mxu0 0.0
  %2027 = vmatprep.subr.mxu0 0.0
  %2028 = vmatpush1.msra.mxu0 0.0
  %2029 = vmatprep.subr.mxu0 0.0
  %2030 = vmatpush1.msra.mxu0 0.0
  %2031 = vmatprep.subr.mxu0 0.0
  %2032 = vmatpush1.msra.mxu0 0.0
  %2033 = vmatprep.subr.mxu0 0.0
  %2034 = vmatpush1.msra.mxu0 0.0
  %2035 = vmatprep.subr.mxu0 0.0
  %2036 = vmatpush1.msra.mxu0 0.0
  %2037 = vmatprep.subr.mxu0 0.0
  %2038 = vmatpush1.msra.mxu0 0.0
  %2039 = vmatprep.subr.mxu0 0.0
  %2040 = vmatpush1.msra.mxu0 0.0
  %2041 = vmatprep.subr.mxu0 0.0
  %2042 = vmatpush1.msra.mxu0 0.0
  %2043 = vmatprep.subr.mxu0 0.0
  %2044 = vmatpush1.msra.mxu0 0.0
  %2045 = vmatprep.subr.mxu0 0.0
  %2046 = vmatpush1.msra.mxu0 0.0
  %2047 = vmatprep.subr.mxu0 0.0
  %2048 = vmatpush1.msra.mxu0 0.0
  %2049 = vmatprep.subr.mxu0 0.0
  %2050 = vmatpush1.msra.mxu0 0.0
  %2051 = vmatprep.subr.mxu0 0.0
  %2052 = vmatpush1.msra.mxu0 0.0
  %2053 = vmatprep.subr.mxu0 0.0
  %2054 = vmatpush1.msra.mxu0 0.0
  %2055 = vmatprep.subr.mxu0 0.0
  %2056 = vmatpush1.msra.mxu0 0.0
  %2057 = vmatprep.subr.mxu0 0.0
  %2058 = vmatpush1.msra.mxu0 0.0
  %2059 = vmatprep.subr.mxu0 0.0
  %2060 = vmatpush1.msra.mxu0 0.0
  %2061 = vmatprep.subr.mxu0 0.0
  %2062 = vmatpush1.msra.mxu0 0.0
  %2063 = vmatprep.mubr.f32.mxu0 0.0
  %2064 = vmatmul.mubr.f32.gmra.mrb[0].mxu0 %v1994
  %v2065 = vpop.f32.mrb[0].mxu0
  %v2066 = vadd.f32 %v1991, %v2065
  %v2067 = vpop.f32.mrb[0].mxu0
  %2068 = vmatprep.mubr.f32.mxu0 0.0
  %2069 = vmatmul.mubr.f32.gmra.mrb[0].mxu0 %v1997
  %v2070 = vpop.f32.mrb[0].mxu0
  %v2071 = vadd.f32 %v1991, %v2070
  %v2072 = vpop.f32.mrb[0].mxu0
  %2073 = vdwg.mxu0
  %2075 = vrot.lane.b32.xlu0 %v2066, 96
  %v2076 = vpop.permute.xlu0 %2075
  %v2077 = vsel %vm213, %v2066, 0
  %v2079 = vsel %vm213, %v2076, 0
  %2081 = vmatprep.subr.mxu0 0.0
  %2082 = vmatpush1.xpose.msra.mxu0 %v2079
  %2083 = vmatprep.subr.mxu0 0.0
  %2084 = vmatpush1.xpose.msra.mxu0 0.0
  %2085 = vmatprep.subr.mxu0 0.0
  %2086 = vmatpush1.xpose.msra.mxu0 0.0
  %2087 = vmatprep.subr.mxu0 0.0
  %2088 = vmatpush1.xpose.msra.mxu0 0.0
  %2089 = vmatprep.subr.mxu0 0.0
  %2090 = vmatpush1.xpose.msra.mxu0 0.0
  %2091 = vmatprep.subr.mxu0 0.0
  %2092 = vmatpush1.xpose.msra.mxu0 0.0
  %2093 = vmatprep.subr.mxu0 0.0
  %2094 = vmatpush1.xpose.msra.mxu0 0.0
  %2095 = vmatprep.subr.mxu0 0.0
  %2096 = vmatpush1.xpose.msra.mxu0 0.0
  %2097 = vmatprep.subr.mxu0 0.0
  %2098 = vmatpush1.xpose.msra.mxu0 0.0
  %2099 = vmatprep.subr.mxu0 0.0
  %2100 = vmatpush1.xpose.msra.mxu0 0.0
  %2101 = vmatprep.subr.mxu0 0.0
  %2102 = vmatpush1.xpose.msra.mxu0 0.0
  %2103 = vmatprep.subr.mxu0 0.0
  %2104 = vmatpush1.xpose.msra.mxu0 0.0
  %2105 = vmatprep.subr.mxu0 0.0
  %2106 = vmatpush1.xpose.msra.mxu0 0.0
  %2107 = vmatprep.subr.mxu0 0.0
  %2108 = vmatpush1.xpose.msra.mxu0 0.0
  %2109 = vmatprep.subr.mxu0 0.0
  %2110 = vmatpush1.xpose.msra.mxu0 0.0
  %2111 = vmatprep.subr.mxu0 0.0
  %2112 = vmatpush1.xpose.msra.mxu0 0.0
  %2113 = vmatprep.subr.mxu0 0.0
  %2114 = vmatpush1.xpose.msra.mxu0 0.0
  %2115 = vmatprep.subr.mxu0 0.0
  %2116 = vmatpush1.xpose.msra.mxu0 0.0
  %2117 = vmatprep.subr.mxu0 0.0
  %2118 = vmatpush1.xpose.msra.mxu0 0.0
  %2119 = vmatprep.subr.mxu0 0.0
  %2120 = vmatpush1.xpose.msra.mxu0 0.0
  %2121 = vmatprep.subr.mxu0 0.0
  %2122 = vmatpush1.xpose.msra.mxu0 0.0
  %2123 = vmatprep.subr.mxu0 0.0
  %2124 = vmatpush1.xpose.msra.mxu0 0.0
  %2125 = vmatprep.subr.mxu0 0.0
  %2126 = vmatpush1.xpose.msra.mxu0 0.0
  %2127 = vmatprep.subr.mxu0 0.0
  %2128 = vmatpush1.xpose.msra.mxu0 0.0
  %2129 = vmatprep.subr.mxu0 0.0
  %2130 = vmatpush1.xpose.msra.mxu0 0.0
  %2131 = vmatprep.subr.mxu0 0.0
  %2132 = vmatpush1.xpose.msra.mxu0 0.0
  %2133 = vmatprep.subr.mxu0 0.0
  %2134 = vmatpush1.xpose.msra.mxu0 0.0
  %2135 = vmatprep.subr.mxu0 0.0
  %2136 = vmatpush1.xpose.msra.mxu0 0.0
  %2137 = vmatprep.subr.mxu0 0.0
  %2138 = vmatpush1.xpose.msra.mxu0 0.0
  %2139 = vmatprep.subr.mxu0 0.0
  %2140 = vmatpush1.xpose.msra.mxu0 0.0
  %2141 = vmatprep.subr.mxu0 0.0
  %2142 = vmatpush1.xpose.msra.mxu0 0.0
  %2143 = vmatprep.subr.mxu0 0.0
  %2144 = vmatpush1.xpose.msra.mxu0 0.0
  %2145 = vmatprep.mubr.f32.mxu0 0.0
  %2146 = vmatmul.mubr.f32.gmra.mrb[0].mxu0 %v2077
  %v2147 = vpop.f32.mrb[0].mxu0
  %v2148 = vadd.f32 0.0, %v2147
  %v2149 = vpop.f32.mrb[0].mxu0
  %2150 = vdwg.mxu0
  %2152 = vrot.lane.b32.xlu0 %v2071, 96
  %v2153 = vpop.permute.xlu0 %2152
  %v2154 = vsel %vm213, %v2071, 0
  %v2156 = vsel %vm213, %v2153, 0
  %2158 = vmatprep.subr.mxu0 0.0
  %2159 = vmatpush1.xpose.msra.mxu0 %v2156
  %2160 = vmatprep.subr.mxu0 0.0
  %2161 = vmatpush1.xpose.msra.mxu0 0.0
  %2162 = vmatprep.subr.mxu0 0.0
  %2163 = vmatpush1.xpose.msra.mxu0 0.0
  %2164 = vmatprep.subr.mxu0 0.0
  %2165 = vmatpush1.xpose.msra.mxu0 0.0
  %2166 = vmatprep.subr.mxu0 0.0
  %2167 = vmatpush1.xpose.msra.mxu0 0.0
  %2168 = vmatprep.subr.mxu0 0.0
  %2169 = vmatpush1.xpose.msra.mxu0 0.0
  %2170 = vmatprep.subr.mxu0 0.0
  %2171 = vmatpush1.xpose.msra.mxu0 0.0
  %2172 = vmatprep.subr.mxu0 0.0
  %2173 = vmatpush1.xpose.msra.mxu0 0.0
  %2174 = vmatprep.subr.mxu0 0.0
  %2175 = vmatpush1.xpose.msra.mxu0 0.0
  %2176 = vmatprep.subr.mxu0 0.0
  %2177 = vmatpush1.xpose.msra.mxu0 0.0
  %2178 = vmatprep.subr.mxu0 0.0
  %2179 = vmatpush1.xpose.msra.mxu0 0.0
  %2180 = vmatprep.subr.mxu0 0.0
  %2181 = vmatpush1.xpose.msra.mxu0 0.0
  %2182 = vmatprep.subr.mxu0 0.0
  %2183 = vmatpush1.xpose.msra.mxu0 0.0
  %2184 = vmatprep.subr.mxu0 0.0
  %2185 = vmatpush1.xpose.msra.mxu0 0.0
  %2186 = vmatprep.subr.mxu0 0.0
  %2187 = vmatpush1.xpose.msra.mxu0 0.0
  %2188 = vmatprep.subr.mxu0 0.0
  %2189 = vmatpush1.xpose.msra.mxu0 0.0
  %2190 = vmatprep.subr.mxu0 0.0
  %2191 = vmatpush1.xpose.msra.mxu0 0.0
  %2192 = vmatprep.subr.mxu0 0.0
  %2193 = vmatpush1.xpose.msra.mxu0 0.0
  %2194 = vmatprep.subr.mxu0 0.0
  %2195 = vmatpush1.xpose.msra.mxu0 0.0
  %2196 = vmatprep.subr.mxu0 0.0
  %2197 = vmatpush1.xpose.msra.mxu0 0.0
  %2198 = vmatprep.subr.mxu0 0.0
  %2199 = vmatpush1.xpose.msra.mxu0 0.0
  %2200 = vmatprep.subr.mxu0 0.0
  %2201 = vmatpush1.xpose.msra.mxu0 0.0
  %2202 = vmatprep.subr.mxu0 0.0
  %2203 = vmatpush1.xpose.msra.mxu0 0.0
  %2204 = vmatprep.subr.mxu0 0.0
  %2205 = vmatpush1.xpose.msra.mxu0 0.0
  %2206 = vmatprep.subr.mxu0 0.0
  %2207 = vmatpush1.xpose.msra.mxu0 0.0
  %2208 = vmatprep.subr.mxu0 0.0
  %2209 = vmatpush1.xpose.msra.mxu0 0.0
  %2210 = vmatprep.subr.mxu0 0.0
  %2211 = vmatpush1.xpose.msra.mxu0 0.0
  %2212 = vmatprep.subr.mxu0 0.0
  %2213 = vmatpush1.xpose.msra.mxu0 0.0
  %2214 = vmatprep.subr.mxu0 0.0
  %2215 = vmatpush1.xpose.msra.mxu0 0.0
  %2216 = vmatprep.subr.mxu0 0.0
  %2217 = vmatpush1.xpose.msra.mxu0 0.0
  %2218 = vmatprep.subr.mxu0 0.0
  %2219 = vmatpush1.xpose.msra.mxu0 0.0
  %2220 = vmatprep.subr.mxu0 0.0
  %2221 = vmatpush1.xpose.msra.mxu0 0.0
  %2222 = vmatprep.mubr.f32.mxu0 0.0
  %2223 = vmatmul.mubr.f32.gmra.mrb[0].mxu0 %v2154
  %v2224 = vpop.f32.mrb[0].mxu0
  %v2225 = vadd.f32 0.0, %v2224
  %v2226 = vpop.f32.mrb[0].mxu0
  %2227 = vdwg.mxu0
  %v2228 = vmul.f32 %v2148, 0.35355338
  %v2229 = vmul.f32 %v2225, 0.35355338
  %v2230 = vadd.f32 %v2228, %v372
  %v2231 = vadd.f32 %v2229, %v376
  %v2232 = vsel %vm213, %v2230, -inf
  %2233 = vmax.xlane.f32.xlu0 %v2232
  %v2234 = vpop.xlane.xlu0 %2233
  %v2235 = vsel %vm213, %v2231, -inf
  %2236 = vmax.xlane.f32.xlu0 %v2235
  %v2237 = vpop.xlane.xlu0 %2236
  %v2238 = vsub.f32 %v2230, %v2234
  %v2239 = vsub.f32 %v2231, %v2237
  %v2240 = vmul.f32 %v2238, 1.442695
  %v2241 = vpow.pop %v2240
  %v2242 = vmul.f32 %v2239, 1.442695
  %v2243 = vpow.pop %v2242
  %v2244 = vsel %vm213, %v2241, 0.0
  %2245 = vadd.xlane.f32.xlu0 %v2244
  %v2246 = vpop.xlane.xlu0 %2245
  %v2247 = vsel %vm213, %v2243, 0.0
  %2248 = vadd.xlane.f32.xlu0 %v2247
  %v2249 = vpop.xlane.xlu0 %2248
  %v2250 = vrcp.pop %v2246
  %v2251 = vrcp.pop %v2249
  %v2252 = vmul.f32 %v2241, %v2250
  %v2253 = vmul.f32 %v2243, %v2251
  %2254 = vrot.lane.b32.xlu0 %v2066, 64
  %v2255 = vpop.permute.xlu0 %2254
  %v2258 = vsel %vm213, %v2252, 0
  %2260 = vmatprep.subr.mxu0 0.0
  %2261 = vmatpush1.msra.mxu0 %v2255
  %2262 = vmatprep.subr.mxu0 0.0
  %2263 = vmatpush1.msra.mxu0 0.0
  %2264 = vmatprep.subr.mxu0 0.0
  %2265 = vmatpush1.msra.mxu0 0.0
  %2266 = vmatprep.subr.mxu0 0.0
  %2267 = vmatpush1.msra.mxu0 0.0
  %2268 = vmatprep.subr.mxu0 0.0
  %2269 = vmatpush1.msra.mxu0 0.0
  %2270 = vmatprep.subr.mxu0 0.0
  %2271 = vmatpush1.msra.mxu0 0.0
  %2272 = vmatprep.subr.mxu0 0.0
  %2273 = vmatpush1.msra.mxu0 0.0
  %2274 = vmatprep.subr.mxu0 0.0
  %2275 = vmatpush1.msra.mxu0 0.0
  %2276 = vmatprep.subr.mxu0 0.0
  %2277 = vmatpush1.msra.mxu0 0.0
  %2278 = vmatprep.subr.mxu0 0.0
  %2279 = vmatpush1.msra.mxu0 0.0
  %2280 = vmatprep.subr.mxu0 0.0
  %2281 = vmatpush1.msra.mxu0 0.0
  %2282 = vmatprep.subr.mxu0 0.0
  %2283 = vmatpush1.msra.mxu0 0.0
  %2284 = vmatprep.subr.mxu0 0.0
  %2285 = vmatpush1.msra.mxu0 0.0
  %2286 = vmatprep.subr.mxu0 0.0
  %2287 = vmatpush1.msra.mxu0 0.0
  %2288 = vmatprep.subr.mxu0 0.0
  %2289 = vmatpush1.msra.mxu0 0.0
  %2290 = vmatprep.subr.mxu0 0.0
  %2291 = vmatpush1.msra.mxu0 0.0
  %2292 = vmatprep.subr.mxu0 0.0
  %2293 = vmatpush1.msra.mxu0 0.0
  %2294 = vmatprep.subr.mxu0 0.0
  %2295 = vmatpush1.msra.mxu0 0.0
  %2296 = vmatprep.subr.mxu0 0.0
  %2297 = vmatpush1.msra.mxu0 0.0
  %2298 = vmatprep.subr.mxu0 0.0
  %2299 = vmatpush1.msra.mxu0 0.0
  %2300 = vmatprep.subr.mxu0 0.0
  %2301 = vmatpush1.msra.mxu0 0.0
  %2302 = vmatprep.subr.mxu0 0.0
  %2303 = vmatpush1.msra.mxu0 0.0
  %2304 = vmatprep.subr.mxu0 0.0
  %2305 = vmatpush1.msra.mxu0 0.0
  %2306 = vmatprep.subr.mxu0 0.0
  %2307 = vmatpush1.msra.mxu0 0.0
  %2308 = vmatprep.subr.mxu0 0.0
  %2309 = vmatpush1.msra.mxu0 0.0
  %2310 = vmatprep.subr.mxu0 0.0
  %2311 = vmatpush1.msra.mxu0 0.0
  %2312 = vmatprep.subr.mxu0 0.0
  %2313 = vmatpush1.msra.mxu0 0.0
  %2314 = vmatprep.subr.mxu0 0.0
  %2315 = vmatpush1.msra.mxu0 0.0
  %2316 = vmatprep.subr.mxu0 0.0
  %2317 = vmatpush1.msra.mxu0 0.0
  %2318 = vmatprep.subr.mxu0 0.0
  %2319 = vmatpush1.msra.mxu0 0.0
  %2320 = vmatprep.subr.mxu0 0.0
  %2321 = vmatpush1.msra.mxu0 0.0
  %2322 = vmatprep.subr.mxu0 0.0
  %2323 = vmatpush1.msra.mxu0 0.0
  %2324 = vmatprep.mubr.f32.mxu0 0.0
  %2325 = vmatmul.mubr.f32.gmra.mrb[0].mxu0 %v2258
  %v2326 = vpop.f32.mrb[0].mxu0
  %v2327 = vadd.f32 0.0, %v2326
  %v2328 = vpop.f32.mrb[0].mxu0
  %2329 = vdwg.mxu0
  %2330 = vrot.lane.b32.xlu0 %v2071, 64
  %v2331 = vpop.permute.xlu0 %2330
  %v2334 = vsel %vm213, %v2253, 0
  %2336 = vmatprep.subr.mxu0 0.0
  %2337 = vmatpush1.msra.mxu0 %v2331
  %2338 = vmatprep.subr.mxu0 0.0
  %2339 = vmatpush1.msra.mxu0 0.0
  %2340 = vmatprep.subr.mxu0 0.0
  %2341 = vmatpush1.msra.mxu0 0.0
  %2342 = vmatprep.subr.mxu0 0.0
  %2343 = vmatpush1.msra.mxu0 0.0
  %2344 = vmatprep.subr.mxu0 0.0
  %2345 = vmatpush1.msra.mxu0 0.0
  %2346 = vmatprep.subr.mxu0 0.0
  %2347 = vmatpush1.msra.mxu0 0.0
  %2348 = vmatprep.subr.mxu0 0.0
  %2349 = vmatpush1.msra.mxu0 0.0
  %2350 = vmatprep.subr.mxu0 0.0
  %2351 = vmatpush1.msra.mxu0 0.0
  %2352 = vmatprep.subr.mxu0 0.0
  %2353 = vmatpush1.msra.mxu0 0.0
  %2354 = vmatprep.subr.mxu0 0.0
  %2355 = vmatpush1.msra.mxu0 0.0
  %2356 = vmatprep.subr.mxu0 0.0
  %2357 = vmatpush1.msra.mxu0 0.0
  %2358 = vmatprep.subr.mxu0 0.0
  %2359 = vmatpush1.msra.mxu0 0.0
  %2360 = vmatprep.subr.mxu0 0.0
  %2361 = vmatpush1.msra.mxu0 0.0
  %2362 = vmatprep.subr.mxu0 0.0
  %2363 = vmatpush1.msra.mxu0 0.0
  %2364 = vmatprep.subr.mxu0 0.0
  %2365 = vmatpush1.msra.mxu0 0.0
  %2366 = vmatprep.subr.mxu0 0.0
  %2367 = vmatpush1.msra.mxu0 0.0
  %2368 = vmatprep.subr.mxu0 0.0
  %2369 = vmatpush1.msra.mxu0 0.0
  %2370 = vmatprep.subr.mxu0 0.0
  %2371 = vmatpush1.msra.mxu0 0.0
  %2372 = vmatprep.subr.mxu0 0.0
  %2373 = vmatpush1.msra.mxu0 0.0
  %2374 = vmatprep.subr.mxu0 0.0
  %2375 = vmatpush1.msra.mxu0 0.0
  %2376 = vmatprep.subr.mxu0 0.0
  %2377 = vmatpush1.msra.mxu0 0.0
  %2378 = vmatprep.subr.mxu0 0.0
  %2379 = vmatpush1.msra.mxu0 0.0
  %2380 = vmatprep.subr.mxu0 0.0
  %2381 = vmatpush1.msra.mxu0 0.0
  %2382 = vmatprep.subr.mxu0 0.0
  %2383 = vmatpush1.msra.mxu0 0.0
  %2384 = vmatprep.subr.mxu0 0.0
  %2385 = vmatpush1.msra.mxu0 0.0
  %2386 = vmatprep.subr.mxu0 0.0
  %2387 = vmatpush1.msra.mxu0 0.0
  %2388 = vmatprep.subr.mxu0 0.0
  %2389 = vmatpush1.msra.mxu0 0.0
  %2390 = vmatprep.subr.mxu0 0.0
  %2391 = vmatpush1.msra.mxu0 0.0
  %2392 = vmatprep.subr.mxu0 0.0
  %2393 = vmatpush1.msra.mxu0 0.0
  %2394 = vmatprep.subr.mxu0 0.0
  %2395 = vmatpush1.msra.mxu0 0.0
  %2396 = vmatprep.subr.mxu0 0.0
  %2397 = vmatpush1.msra.mxu0 0.0
  %2398 = vmatprep.subr.mxu0 0.0
  %2399 = vmatpush1.msra.mxu0 0.0
  %2400 = vmatprep.mubr.f32.mxu0 0.0
  %2401 = vmatmul.mubr.f32.gmra.mrb[0].mxu0 %v2334
  %v2402 = vpop.f32.mrb[0].mxu0
  %v2403 = vadd.f32 0.0, %v2402
  %v2404 = vpop.f32.mrb[0].mxu0
  %2405 = vdwg.mxu0
  %2406 = vrot.lane.b32.xlu0 %v2066, 120
  %v2407 = vpop.permute.xlu0 %2406
  %2408 = vrot.lane.b32.xlu0 %v2066, 88
  %v2409 = vpop.permute.xlu0 %2408
  %v2410 = vsel %vm213, %v2407, 0
  %v2412 = vsel %vm213, %v2409, 0
  %2414 = vmatprep.subr.mxu0 0.0
  %2415 = vmatpush1.xpose.msra.mxu0 %v2412
  %2416 = vmatprep.subr.mxu0 0.0
  %2417 = vmatpush1.xpose.msra.mxu0 0.0
  %2418 = vmatprep.subr.mxu0 0.0
  %2419 = vmatpush1.xpose.msra.mxu0 0.0
  %2420 = vmatprep.subr.mxu0 0.0
  %2421 = vmatpush1.xpose.msra.mxu0 0.0
  %2422 = vmatprep.subr.mxu0 0.0
  %2423 = vmatpush1.xpose.msra.mxu0 0.0
  %2424 = vmatprep.subr.mxu0 0.0
  %2425 = vmatpush1.xpose.msra.mxu0 0.0
  %2426 = vmatprep.subr.mxu0 0.0
  %2427 = vmatpush1.xpose.msra.mxu0 0.0
  %2428 = vmatprep.subr.mxu0 0.0
  %2429 = vmatpush1.xpose.msra.mxu0 0.0
  %2430 = vmatprep.subr.mxu0 0.0
  %2431 = vmatpush1.xpose.msra.mxu0 0.0
  %2432 = vmatprep.subr.mxu0 0.0
  %2433 = vmatpush1.xpose.msra.mxu0 0.0
  %2434 = vmatprep.subr.mxu0 0.0
  %2435 = vmatpush1.xpose.msra.mxu0 0.0
  %2436 = vmatprep.subr.mxu0 0.0
  %2437 = vmatpush1.xpose.msra.mxu0 0.0
  %2438 = vmatprep.subr.mxu0 0.0
  %2439 = vmatpush1.xpose.msra.mxu0 0.0
  %2440 = vmatprep.subr.mxu0 0.0
  %2441 = vmatpush1.xpose.msra.mxu0 0.0
  %2442 = vmatprep.subr.mxu0 0.0
  %2443 = vmatpush1.xpose.msra.mxu0 0.0
  %2444 = vmatprep.subr.mxu0 0.0
  %2445 = vmatpush1.xpose.msra.mxu0 0.0
  %2446 = vmatprep.subr.mxu0 0.0
  %2447 = vmatpush1.xpose.msra.mxu0 0.0
  %2448 = vmatprep.subr.mxu0 0.0
  %2449 = vmatpush1.xpose.msra.mxu0 0.0
  %2450 = vmatprep.subr.mxu0 0.0
  %2451 = vmatpush1.xpose.msra.mxu0 0.0
  %2452 = vmatprep.subr.mxu0 0.0
  %2453 = vmatpush1.xpose.msra.mxu0 0.0
  %2454 = vmatprep.subr.mxu0 0.0
  %2455 = vmatpush1.xpose.msra.mxu0 0.0
  %2456 = vmatprep.subr.mxu0 0.0
  %2457 = vmatpush1.xpose.msra.mxu0 0.0
  %2458 = vmatprep.subr.mxu0 0.0
  %2459 = vmatpush1.xpose.msra.mxu0 0.0
  %2460 = vmatprep.subr.mxu0 0.0
  %2461 = vmatpush1.xpose.msra.mxu0 0.0
  %2462 = vmatprep.subr.mxu0 0.0
  %2463 = vmatpush1.xpose.msra.mxu0 0.0
  %2464 = vmatprep.subr.mxu0 0.0
  %2465 = vmatpush1.xpose.msra.mxu0 0.0
  %2466 = vmatprep.subr.mxu0 0.0
  %2467 = vmatpush1.xpose.msra.mxu0 0.0
  %2468 = vmatprep.subr.mxu0 0.0
  %2469 = vmatpush1.xpose.msra.mxu0 0.0
  %2470 = vmatprep.subr.mxu0 0.0
  %2471 = vmatpush1.xpose.msra.mxu0 0.0
  %2472 = vmatprep.subr.mxu0 0.0
  %2473 = vmatpush1.xpose.msra.mxu0 0.0
  %2474 = vmatprep.subr.mxu0 0.0
  %2475 = vmatpush1.xpose.msra.mxu0 0.0
  %2476 = vmatprep.subr.mxu0 0.0
  %2477 = vmatpush1.xpose.msra.mxu0 0.0
  %2478 = vmatprep.mubr.f32.mxu0 0.0
  %2479 = vmatmul.mubr.f32.gmra.mrb[0].mxu0 %v2410
  %v2480 = vpop.f32.mrb[0].mxu0
  %v2481 = vadd.f32 0.0, %v2480
  %v2482 = vpop.f32.mrb[0].mxu0
  %2483 = vdwg.mxu0
  %2484 = vrot.lane.b32.xlu0 %v2071, 120
  %v2485 = vpop.permute.xlu0 %2484
  %2486 = vrot.lane.b32.xlu0 %v2071, 88
  %v2487 = vpop.permute.xlu0 %2486
  %v2488 = vsel %vm213, %v2485, 0
  %v2490 = vsel %vm213, %v2487, 0
  %2492 = vmatprep.subr.mxu0 0.0
  %2493 = vmatpush1.xpose.msra.mxu0 %v2490
  %2494 = vmatprep.subr.mxu0 0.0
  %2495 = vmatpush1.xpose.msra.mxu0 0.0
  %2496 = vmatprep.subr.mxu0 0.0
  %2497 = vmatpush1.xpose.msra.mxu0 0.0
  %2498 = vmatprep.subr.mxu0 0.0
  %2499 = vmatpush1.xpose.msra.mxu0 0.0
  %2500 = vmatprep.subr.mxu0 0.0
  %2501 = vmatpush1.xpose.msra.mxu0 0.0
  %2502 = vmatprep.subr.mxu0 0.0
  %2503 = vmatpush1.xpose.msra.mxu0 0.0
  %2504 = vmatprep.subr.mxu0 0.0
  %2505 = vmatpush1.xpose.msra.mxu0 0.0
  %2506 = vmatprep.subr.mxu0 0.0
  %2507 = vmatpush1.xpose.msra.mxu0 0.0
  %2508 = vmatprep.subr.mxu0 0.0
  %2509 = vmatpush1.xpose.msra.mxu0 0.0
  %2510 = vmatprep.subr.mxu0 0.0
  %2511 = vmatpush1.xpose.msra.mxu0 0.0
  %2512 = vmatprep.subr.mxu0 0.0
  %2513 = vmatpush1.xpose.msra.mxu0 0.0
  %2514 = vmatprep.subr.mxu0 0.0
  %2515 = vmatpush1.xpose.msra.mxu0 0.0
  %2516 = vmatprep.subr.mxu0 0.0
  %2517 = vmatpush1.xpose.msra.mxu0 0.0
  %2518 = vmatprep.subr.mxu0 0.0
  %2519 = vmatpush1.xpose.msra.mxu0 0.0
  %2520 = vmatprep.subr.mxu0 0.0
  %2521 = vmatpush1.xpose.msra.mxu0 0.0
  %2522 = vmatprep.subr.mxu0 0.0
  %2523 = vmatpush1.xpose.msra.mxu0 0.0
  %2524 = vmatprep.subr.mxu0 0.0
  %2525 = vmatpush1.xpose.msra.mxu0 0.0
  %2526 = vmatprep.subr.mxu0 0.0
  %2527 = vmatpush1.xpose.msra.mxu0 0.0
  %2528 = vmatprep.subr.mxu0 0.0
  %2529 = vmatpush1.xpose.msra.mxu0 0.0
  %2530 = vmatprep.subr.mxu0 0.0
  %2531 = vmatpush1.xpose.msra.mxu0 0.0
  %2532 = vmatprep.subr.mxu0 0.0
  %2533 = vmatpush1.xpose.msra.mxu0 0.0
  %2534 = vmatprep.subr.mxu0 0.0
  %2535 = vmatpush1.xpose.msra.mxu0 0.0
  %2536 = vmatprep.subr.mxu0 0.0
  %2537 = vmatpush1.xpose.msra.mxu0 0.0
  %2538 = vmatprep.subr.mxu0 0.0
  %2539 = vmatpush1.xpose.msra.mxu0 0.0
  %2540 = vmatprep.subr.mxu0 0.0
  %2541 = vmatpush1.xpose.msra.mxu0 0.0
  %2542 = vmatprep.subr.mxu0 0.0
  %2543 = vmatpush1.xpose.msra.mxu0 0.0
  %2544 = vmatprep.subr.mxu0 0.0
  %2545 = vmatpush1.xpose.msra.mxu0 0.0
  %2546 = vmatprep.subr.mxu0 0.0
  %2547 = vmatpush1.xpose.msra.mxu0 0.0
  %2548 = vmatprep.subr.mxu0 0.0
  %2549 = vmatpush1.xpose.msra.mxu0 0.0
  %2550 = vmatprep.subr.mxu0 0.0
  %2551 = vmatpush1.xpose.msra.mxu0 0.0
  %2552 = vmatprep.subr.mxu0 0.0
  %2553 = vmatpush1.xpose.msra.mxu0 0.0
  %2554 = vmatprep.subr.mxu0 0.0
  %2555 = vmatpush1.xpose.msra.mxu0 0.0
  %2556 = vmatprep.mubr.f32.mxu0 0.0
  %2557 = vmatmul.mubr.f32.gmra.mrb[0].mxu0 %v2488
  %v2558 = vpop.f32.mrb[0].mxu0
  %v2559 = vadd.f32 0.0, %v2558
  %v2560 = vpop.f32.mrb[0].mxu0
  %2561 = vdwg.mxu0
  %v2562 = vmul.f32 %v2481, 0.35355338
  %v2563 = vmul.f32 %v2559, 0.35355338
  %v2564 = vadd.f32 %v2562, %v372
  %v2565 = vadd.f32 %v2563, %v376
  %v2566 = vsel %vm213, %v2564, -inf
  %2567 = vmax.xlane.f32.xlu0 %v2566
  %v2568 = vpop.xlane.xlu0 %2567
  %v2569 = vsel %vm213, %v2565, -inf
  %2570 = vmax.xlane.f32.xlu0 %v2569
  %v2571 = vpop.xlane.xlu0 %2570
  %v2572 = vsub.f32 %v2564, %v2568
  %v2573 = vsub.f32 %v2565, %v2571
  %v2574 = vmul.f32 %v2572, 1.442695
  %v2575 = vpow.pop %v2574
  %v2576 = vmul.f32 %v2573, 1.442695
  %v2577 = vpow.pop %v2576
  %v2578 = vsel %vm213, %v2575, 0.0
  %2579 = vadd.xlane.f32.xlu0 %v2578
  %v2580 = vpop.xlane.xlu0 %2579
  %v2581 = vsel %vm213, %v2577, 0.0
  %2582 = vadd.xlane.f32.xlu0 %v2581
  %v2583 = vpop.xlane.xlu0 %2582
  %v2584 = vrcp.pop %v2580
  %v2585 = vrcp.pop %v2583
  %v2586 = vmul.f32 %v2575, %v2584
  %v2587 = vmul.f32 %v2577, %v2585
  %2588 = vrot.lane.b32.xlu0 %v2066, 56
  %v2589 = vpop.permute.xlu0 %2588
  %v2592 = vsel %vm213, %v2586, 0
  %2594 = vmatprep.subr.mxu0 0.0
  %2595 = vmatpush1.msra.mxu0 %v2589
  %2596 = vmatprep.subr.mxu0 0.0
  %2597 = vmatpush1.msra.mxu0 0.0
  %2598 = vmatprep.subr.mxu0 0.0
  %2599 = vmatpush1.msra.mxu0 0.0
  %2600 = vmatprep.subr.mxu0 0.0
  %2601 = vmatpush1.msra.mxu0 0.0
  %2602 = vmatprep.subr.mxu0 0.0
  %2603 = vmatpush1.msra.mxu0 0.0
  %2604 = vmatprep.subr.mxu0 0.0
  %2605 = vmatpush1.msra.mxu0 0.0
  %2606 = vmatprep.subr.mxu0 0.0
  %2607 = vmatpush1.msra.mxu0 0.0
  %2608 = vmatprep.subr.mxu0 0.0
  %2609 = vmatpush1.msra.mxu0 0.0
  %2610 = vmatprep.subr.mxu0 0.0
  %2611 = vmatpush1.msra.mxu0 0.0
  %2612 = vmatprep.subr.mxu0 0.0
  %2613 = vmatpush1.msra.mxu0 0.0
  %2614 = vmatprep.subr.mxu0 0.0
  %2615 = vmatpush1.msra.mxu0 0.0
  %2616 = vmatprep.subr.mxu0 0.0
  %2617 = vmatpush1.msra.mxu0 0.0
  %2618 = vmatprep.subr.mxu0 0.0
  %2619 = vmatpush1.msra.mxu0 0.0
  %2620 = vmatprep.subr.mxu0 0.0
  %2621 = vmatpush1.msra.mxu0 0.0
  %2622 = vmatprep.subr.mxu0 0.0
  %2623 = vmatpush1.msra.mxu0 0.0
  %2624 = vmatprep.subr.mxu0 0.0
  %2625 = vmatpush1.msra.mxu0 0.0
  %2626 = vmatprep.subr.mxu0 0.0
  %2627 = vmatpush1.msra.mxu0 0.0
  %2628 = vmatprep.subr.mxu0 0.0
  %2629 = vmatpush1.msra.mxu0 0.0
  %2630 = vmatprep.subr.mxu0 0.0
  %2631 = vmatpush1.msra.mxu0 0.0
  %2632 = vmatprep.subr.mxu0 0.0
  %2633 = vmatpush1.msra.mxu0 0.0
  %2634 = vmatprep.subr.mxu0 0.0
  %2635 = vmatpush1.msra.mxu0 0.0
  %2636 = vmatprep.subr.mxu0 0.0
  %2637 = vmatpush1.msra.mxu0 0.0
  %2638 = vmatprep.subr.mxu0 0.0
  %2639 = vmatpush1.msra.mxu0 0.0
  %2640 = vmatprep.subr.mxu0 0.0
  %2641 = vmatpush1.msra.mxu0 0.0
  %2642 = vmatprep.subr.mxu0 0.0
  %2643 = vmatpush1.msra.mxu0 0.0
  %2644 = vmatprep.subr.mxu0 0.0
  %2645 = vmatpush1.msra.mxu0 0.0
  %2646 = vmatprep.subr.mxu0 0.0
  %2647 = vmatpush1.msra.mxu0 0.0
  %2648 = vmatprep.subr.mxu0 0.0
  %2649 = vmatpush1.msra.mxu0 0.0
  %2650 = vmatprep.subr.mxu0 0.0
  %2651 = vmatpush1.msra.mxu0 0.0
  %2652 = vmatprep.subr.mxu0 0.0
  %2653 = vmatpush1.msra.mxu0 0.0
  %2654 = vmatprep.subr.mxu0 0.0
  %2655 = vmatpush1.msra.mxu0 0.0
  %2656 = vmatprep.subr.mxu0 0.0
  %2657 = vmatpush1.msra.mxu0 0.0
  %2658 = vmatprep.mubr.f32.mxu0 0.0
  %2659 = vmatmul.mubr.f32.gmra.mrb[0].mxu0 %v2592
  %v2660 = vpop.f32.mrb[0].mxu0
  %v2661 = vadd.f32 0.0, %v2660
  %v2662 = vpop.f32.mrb[0].mxu0
  %2663 = vdwg.mxu0
  %2664 = vrot.lane.b32.xlu0 %v2071, 56
  %v2665 = vpop.permute.xlu0 %2664
  %v2668 = vsel %vm213, %v2587, 0
  %2670 = vmatprep.subr.mxu0 0.0
  %2671 = vmatpush1.msra.mxu0 %v2665
  %2672 = vmatprep.subr.mxu0 0.0
  %2673 = vmatpush1.msra.mxu0 0.0
  %2674 = vmatprep.subr.mxu0 0.0
  %2675 = vmatpush1.msra.mxu0 0.0
  %2676 = vmatprep.subr.mxu0 0.0
  %2677 = vmatpush1.msra.mxu0 0.0
  %2678 = vmatprep.subr.mxu0 0.0
  %2679 = vmatpush1.msra.mxu0 0.0
  %2680 = vmatprep.subr.mxu0 0.0
  %2681 = vmatpush1.msra.mxu0 0.0
  %2682 = vmatprep.subr.mxu0 0.0
  %2683 = vmatpush1.msra.mxu0 0.0
  %2684 = vmatprep.subr.mxu0 0.0
  %2685 = vmatpush1.msra.mxu0 0.0
  %2686 = vmatprep.subr.mxu0 0.0
  %2687 = vmatpush1.msra.mxu0 0.0
  %2688 = vmatprep.subr.mxu0 0.0
  %2689 = vmatpush1.msra.mxu0 0.0
  %2690 = vmatprep.subr.mxu0 0.0
  %2691 = vmatpush1.msra.mxu0 0.0
  %2692 = vmatprep.subr.mxu0 0.0
  %2693 = vmatpush1.msra.mxu0 0.0
  %2694 = vmatprep.subr.mxu0 0.0
  %2695 = vmatpush1.msra.mxu0 0.0
  %2696 = vmatprep.subr.mxu0 0.0
  %2697 = vmatpush1.msra.mxu0 0.0
  %2698 = vmatprep.subr.mxu0 0.0
  %2699 = vmatpush1.msra.mxu0 0.0
  %2700 = vmatprep.subr.mxu0 0.0
  %2701 = vmatpush1.msra.mxu0 0.0
  %2702 = vmatprep.subr.mxu0 0.0
  %2703 = vmatpush1.msra.mxu0 0.0
  %2704 = vmatprep.subr.mxu0 0.0
  %2705 = vmatpush1.msra.mxu0 0.0
  %2706 = vmatprep.subr.mxu0 0.0
  %2707 = vmatpush1.msra.mxu0 0.0
  %2708 = vmatprep.subr.mxu0 0.0
  %2709 = vmatpush1.msra.mxu0 0.0
  %2710 = vmatprep.subr.mxu0 0.0
  %2711 = vmatpush1.msra.mxu0 0.0
  %2712 = vmatprep.subr.mxu0 0.0
  %2713 = vmatpush1.msra.mxu0 0.0
  %2714 = vmatprep.subr.mxu0 0.0
  %2715 = vmatpush1.msra.mxu0 0.0
  %2716 = vmatprep.subr.mxu0 0.0
  %2717 = vmatpush1.msra.mxu0 0.0
  %2718 = vmatprep.subr.mxu0 0.0
  %2719 = vmatpush1.msra.mxu0 0.0
  %2720 = vmatprep.subr.mxu0 0.0
  %2721 = vmatpush1.msra.mxu0 0.0
  %2722 = vmatprep.subr.mxu0 0.0
  %2723 = vmatpush1.msra.mxu0 0.0
  %2724 = vmatprep.subr.mxu0 0.0
  %2725 = vmatpush1.msra.mxu0 0.0
  %2726 = vmatprep.subr.mxu0 0.0
  %2727 = vmatpush1.msra.mxu0 0.0
  %2728 = vmatprep.subr.mxu0 0.0
  %2729 = vmatpush1.msra.mxu0 0.0
  %2730 = vmatprep.subr.mxu0 0.0
  %2731 = vmatpush1.msra.mxu0 0.0
  %2732 = vmatprep.subr.mxu0 0.0
  %2733 = vmatpush1.msra.mxu0 0.0
  %2734 = vmatprep.mubr.f32.mxu0 0.0
  %2735 = vmatmul.mubr.f32.gmra.mrb[0].mxu0 %v2668
  %v2736 = vpop.f32.mrb[0].mxu0
  %v2737 = vadd.f32 0.0, %v2736
  %v2738 = vpop.f32.mrb[0].mxu0
  %2739 = vdwg.mxu0
  %2740 = vrot.lane.b32.xlu0 %v2066, 112
  %v2741 = vpop.permute.xlu0 %2740
  %2742 = vrot.lane.b32.xlu0 %v2066, 80
  %v2743 = vpop.permute.xlu0 %2742
  %v2744 = vsel %vm213, %v2741, 0
  %v2746 = vsel %vm213, %v2743, 0
  %2748 = vmatprep.subr.mxu0 0.0
  %2749 = vmatpush1.xpose.msra.mxu0 %v2746
  %2750 = vmatprep.subr.mxu0 0.0
  %2751 = vmatpush1.xpose.msra.mxu0 0.0
  %2752 = vmatprep.subr.mxu0 0.0
  %2753 = vmatpush1.xpose.msra.mxu0 0.0
  %2754 = vmatprep.subr.mxu0 0.0
  %2755 = vmatpush1.xpose.msra.mxu0 0.0
  %2756 = vmatprep.subr.mxu0 0.0
  %2757 = vmatpush1.xpose.msra.mxu0 0.0
  %2758 = vmatprep.subr.mxu0 0.0
  %2759 = vmatpush1.xpose.msra.mxu0 0.0
  %2760 = vmatprep.subr.mxu0 0.0
  %2761 = vmatpush1.xpose.msra.mxu0 0.0
  %2762 = vmatprep.subr.mxu0 0.0
  %2763 = vmatpush1.xpose.msra.mxu0 0.0
  %2764 = vmatprep.subr.mxu0 0.0
  %2765 = vmatpush1.xpose.msra.mxu0 0.0
  %2766 = vmatprep.subr.mxu0 0.0
  %2767 = vmatpush1.xpose.msra.mxu0 0.0
  %2768 = vmatprep.subr.mxu0 0.0
  %2769 = vmatpush1.xpose.msra.mxu0 0.0
  %2770 = vmatprep.subr.mxu0 0.0
  %2771 = vmatpush1.xpose.msra.mxu0 0.0
  %2772 = vmatprep.subr.mxu0 0.0
  %2773 = vmatpush1.xpose.msra.mxu0 0.0
  %2774 = vmatprep.subr.mxu0 0.0
  %2775 = vmatpush1.xpose.msra.mxu0 0.0
  %2776 = vmatprep.subr.mxu0 0.0
  %2777 = vmatpush1.xpose.msra.mxu0 0.0
  %2778 = vmatprep.subr.mxu0 0.0
  %2779 = vmatpush1.xpose.msra.mxu0 0.0
  %2780 = vmatprep.subr.mxu0 0.0
  %2781 = vmatpush1.xpose.msra.mxu0 0.0
  %2782 = vmatprep.subr.mxu0 0.0
  %2783 = vmatpush1.xpose.msra.mxu0 0.0
  %2784 = vmatprep.subr.mxu0 0.0
  %2785 = vmatpush1.xpose.msra.mxu0 0.0
  %2786 = vmatprep.subr.mxu0 0.0
  %2787 = vmatpush1.xpose.msra.mxu0 0.0
  %2788 = vmatprep.subr.mxu0 0.0
  %2789 = vmatpush1.xpose.msra.mxu0 0.0
  %2790 = vmatprep.subr.mxu0 0.0
  %2791 = vmatpush1.xpose.msra.mxu0 0.0
  %2792 = vmatprep.subr.mxu0 0.0
  %2793 = vmatpush1.xpose.msra.mxu0 0.0
  %2794 = vmatprep.subr.mxu0 0.0
  %2795 = vmatpush1.xpose.msra.mxu0 0.0
  %2796 = vmatprep.subr.mxu0 0.0
  %2797 = vmatpush1.xpose.msra.mxu0 0.0
  %2798 = vmatprep.subr.mxu0 0.0
  %2799 = vmatpush1.xpose.msra.mxu0 0.0
  %2800 = vmatprep.subr.mxu0 0.0
  %2801 = vmatpush1.xpose.msra.mxu0 0.0
  %2802 = vmatprep.subr.mxu0 0.0
  %2803 = vmatpush1.xpose.msra.mxu0 0.0
  %2804 = vmatprep.subr.mxu0 0.0
  %2805 = vmatpush1.xpose.msra.mxu0 0.0
  %2806 = vmatprep.subr.mxu0 0.0
  %2807 = vmatpush1.xpose.msra.mxu0 0.0
  %2808 = vmatprep.subr.mxu0 0.0
  %2809 = vmatpush1.xpose.msra.mxu0 0.0
  %2810 = vmatprep.subr.mxu0 0.0
  %2811 = vmatpush1.xpose.msra.mxu0 0.0
  %2812 = vmatprep.mubr.f32.mxu0 0.0
  %2813 = vmatmul.mubr.f32.gmra.mrb[0].mxu0 %v2744
  %v2814 = vpop.f32.mrb[0].mxu0
  %v2815 = vadd.f32 0.0, %v2814
  %v2816 = vpop.f32.mrb[0].mxu0
  %2817 = vdwg.mxu0
  %2818 = vrot.lane.b32.xlu0 %v2071, 112
  %v2819 = vpop.permute.xlu0 %2818
  %2820 = vrot.lane.b32.xlu0 %v2071, 80
  %v2821 = vpop.permute.xlu0 %2820
  %v2822 = vsel %vm213, %v2819, 0
  %v2824 = vsel %vm213, %v2821, 0
  %2826 = vmatprep.subr.mxu0 0.0
  %2827 = vmatpush1.xpose.msra.mxu0 %v2824
  %2828 = vmatprep.subr.mxu0 0.0
  %2829 = vmatpush1.xpose.msra.mxu0 0.0
  %2830 = vmatprep.subr.mxu0 0.0
  %2831 = vmatpush1.xpose.msra.mxu0 0.0
  %2832 = vmatprep.subr.mxu0 0.0
  %2833 = vmatpush1.xpose.msra.mxu0 0.0
  %2834 = vmatprep.subr.mxu0 0.0
  %2835 = vmatpush1.xpose.msra.mxu0 0.0
  %2836 = vmatprep.subr.mxu0 0.0
  %2837 = vmatpush1.xpose.msra.mxu0 0.0
  %2838 = vmatprep.subr.mxu0 0.0
  %2839 = vmatpush1.xpose.msra.mxu0 0.0
  %2840 = vmatprep.subr.mxu0 0.0
  %2841 = vmatpush1.xpose.msra.mxu0 0.0
  %2842 = vmatprep.subr.mxu0 0.0
  %2843 = vmatpush1.xpose.msra.mxu0 0.0
  %2844 = vmatprep.subr.mxu0 0.0
  %2845 = vmatpush1.xpose.msra.mxu0 0.0
  %2846 = vmatprep.subr.mxu0 0.0
  %2847 = vmatpush1.xpose.msra.mxu0 0.0
  %2848 = vmatprep.subr.mxu0 0.0
  %2849 = vmatpush1.xpose.msra.mxu0 0.0
  %2850 = vmatprep.subr.mxu0 0.0
  %2851 = vmatpush1.xpose.msra.mxu0 0.0
  %2852 = vmatprep.subr.mxu0 0.0
  %2853 = vmatpush1.xpose.msra.mxu0 0.0
  %2854 = vmatprep.subr.mxu0 0.0
  %2855 = vmatpush1.xpose.msra.mxu0 0.0
  %2856 = vmatprep.subr.mxu0 0.0
  %2857 = vmatpush1.xpose.msra.mxu0 0.0
  %2858 = vmatprep.subr.mxu0 0.0
  %2859 = vmatpush1.xpose.msra.mxu0 0.0
  %2860 = vmatprep.subr.mxu0 0.0
  %2861 = vmatpush1.xpose.msra.mxu0 0.0
  %2862 = vmatprep.subr.mxu0 0.0
  %2863 = vmatpush1.xpose.msra.mxu0 0.0
  %2864 = vmatprep.subr.mxu0 0.0
  %2865 = vmatpush1.xpose.msra.mxu0 0.0
  %2866 = vmatprep.subr.mxu0 0.0
  %2867 = vmatpush1.xpose.msra.mxu0 0.0
  %2868 = vmatprep.subr.mxu0 0.0
  %2869 = vmatpush1.xpose.msra.mxu0 0.0
  %2870 = vmatprep.subr.mxu0 0.0
  %2871 = vmatpush1.xpose.msra.mxu0 0.0
  %2872 = vmatprep.subr.mxu0 0.0
  %2873 = vmatpush1.xpose.msra.mxu0 0.0
  %2874 = vmatprep.subr.mxu0 0.0
  %2875 = vmatpush1.xpose.msra.mxu0 0.0
  %2876 = vmatprep.subr.mxu0 0.0
  %2877 = vmatpush1.xpose.msra.mxu0 0.0
  %2878 = vmatprep.subr.mxu0 0.0
  %2879 = vmatpush1.xpose.msra.mxu0 0.0
  %2880 = vmatprep.subr.mxu0 0.0
  %2881 = vmatpush1.xpose.msra.mxu0 0.0
  %2882 = vmatprep.subr.mxu0 0.0
  %2883 = vmatpush1.xpose.msra.mxu0 0.0
  %2884 = vmatprep.subr.mxu0 0.0
  %2885 = vmatpush1.xpose.msra.mxu0 0.0
  %2886 = vmatprep.subr.mxu0 0.0
  %2887 = vmatpush1.xpose.msra.mxu0 0.0
  %2888 = vmatprep.subr.mxu0 0.0
  %2889 = vmatpush1.xpose.msra.mxu0 0.0
  %2890 = vmatprep.mubr.f32.mxu0 0.0
  %2891 = vmatmul.mubr.f32.gmra.mrb[0].mxu0 %v2822
  %v2892 = vpop.f32.mrb[0].mxu0
  %v2893 = vadd.f32 0.0, %v2892
  %v2894 = vpop.f32.mrb[0].mxu0
  %2895 = vdwg.mxu0
  %v2896 = vmul.f32 %v2815, 0.35355338
  %v2897 = vmul.f32 %v2893, 0.35355338
  %v2898 = vadd.f32 %v2896, %v372
  %v2899 = vadd.f32 %v2897, %v376
  %v2900 = vsel %vm213, %v2898, -inf
  %2901 = vmax.xlane.f32.xlu0 %v2900
  %v2902 = vpop.xlane.xlu0 %2901
  %v2903 = vsel %vm213, %v2899, -inf
  %2904 = vmax.xlane.f32.xlu0 %v2903
  %v2905 = vpop.xlane.xlu0 %2904
  %v2906 = vsub.f32 %v2898, %v2902
  %v2907 = vsub.f32 %v2899, %v2905
  %v2908 = vmul.f32 %v2906, 1.442695
  %v2909 = vpow.pop %v2908
  %v2910 = vmul.f32 %v2907, 1.442695
  %v2911 = vpow.pop %v2910
  %v2912 = vsel %vm213, %v2909, 0.0
  %2913 = vadd.xlane.f32.xlu0 %v2912
  %v2914 = vpop.xlane.xlu0 %2913
  %v2915 = vsel %vm213, %v2911, 0.0
  %2916 = vadd.xlane.f32.xlu0 %v2915
  %v2917 = vpop.xlane.xlu0 %2916
  %v2918 = vrcp.pop %v2914
  %v2919 = vrcp.pop %v2917
  %v2920 = vmul.f32 %v2909, %v2918
  %v2921 = vmul.f32 %v2911, %v2919
  %2922 = vrot.lane.b32.xlu0 %v2066, 48
  %v2923 = vpop.permute.xlu0 %2922
  %v2926 = vsel %vm213, %v2920, 0
  %2928 = vmatprep.subr.mxu0 0.0
  %2929 = vmatpush1.msra.mxu0 %v2923
  %2930 = vmatprep.subr.mxu0 0.0
  %2931 = vmatpush1.msra.mxu0 0.0
  %2932 = vmatprep.subr.mxu0 0.0
  %2933 = vmatpush1.msra.mxu0 0.0
  %2934 = vmatprep.subr.mxu0 0.0
  %2935 = vmatpush1.msra.mxu0 0.0
  %2936 = vmatprep.subr.mxu0 0.0
  %2937 = vmatpush1.msra.mxu0 0.0
  %2938 = vmatprep.subr.mxu0 0.0
  %2939 = vmatpush1.msra.mxu0 0.0
  %2940 = vmatprep.subr.mxu0 0.0
  %2941 = vmatpush1.msra.mxu0 0.0
  %2942 = vmatprep.subr.mxu0 0.0
  %2943 = vmatpush1.msra.mxu0 0.0
  %2944 = vmatprep.subr.mxu0 0.0
  %2945 = vmatpush1.msra.mxu0 0.0
  %2946 = vmatprep.subr.mxu0 0.0
  %2947 = vmatpush1.msra.mxu0 0.0
  %2948 = vmatprep.subr.mxu0 0.0
  %2949 = vmatpush1.msra.mxu0 0.0
  %2950 = vmatprep.subr.mxu0 0.0
  %2951 = vmatpush1.msra.mxu0 0.0
  %2952 = vmatprep.subr.mxu0 0.0
  %2953 = vmatpush1.msra.mxu0 0.0
  %2954 = vmatprep.subr.mxu0 0.0
  %2955 = vmatpush1.msra.mxu0 0.0
  %2956 = vmatprep.subr.mxu0 0.0
  %2957 = vmatpush1.msra.mxu0 0.0
  %2958 = vmatprep.subr.mxu0 0.0
  %2959 = vmatpush1.msra.mxu0 0.0
  %2960 = vmatprep.subr.mxu0 0.0
  %2961 = vmatpush1.msra.mxu0 0.0
  %2962 = vmatprep.subr.mxu0 0.0
  %2963 = vmatpush1.msra.mxu0 0.0
  %2964 = vmatprep.subr.mxu0 0.0
  %2965 = vmatpush1.msra.mxu0 0.0
  %2966 = vmatprep.subr.mxu0 0.0
  %2967 = vmatpush1.msra.mxu0 0.0
  %2968 = vmatprep.subr.mxu0 0.0
  %2969 = vmatpush1.msra.mxu0 0.0
  %2970 = vmatprep.subr.mxu0 0.0
  %2971 = vmatpush1.msra.mxu0 0.0
  %2972 = vmatprep.subr.mxu0 0.0
  %2973 = vmatpush1.msra.mxu0 0.0
  %2974 = vmatprep.subr.mxu0 0.0
  %2975 = vmatpush1.msra.mxu0 0.0
  %2976 = vmatprep.subr.mxu0 0.0
  %2977 = vmatpush1.msra.mxu0 0.0
  %2978 = vmatprep.subr.mxu0 0.0
  %2979 = vmatpush1.msra.mxu0 0.0
  %2980 = vmatprep.subr.mxu0 0.0
  %2981 = vmatpush1.msra.mxu0 0.0
  %2982 = vmatprep.subr.mxu0 0.0
  %2983 = vmatpush1.msra.mxu0 0.0
  %2984 = vmatprep.subr.mxu0 0.0
  %2985 = vmatpush1.msra.mxu0 0.0
  %2986 = vmatprep.subr.mxu0 0.0
  %2987 = vmatpush1.msra.mxu0 0.0
  %2988 = vmatprep.subr.mxu0 0.0
  %2989 = vmatpush1.msra.mxu0 0.0
  %2990 = vmatprep.subr.mxu0 0.0
  %2991 = vmatpush1.msra.mxu0 0.0
  %2992 = vmatprep.mubr.f32.mxu0 0.0
  %2993 = vmatmul.mubr.f32.gmra.mrb[0].mxu0 %v2926
  %v2994 = vpop.f32.mrb[0].mxu0
  %v2995 = vadd.f32 0.0, %v2994
  %v2996 = vpop.f32.mrb[0].mxu0
  %2997 = vdwg.mxu0
  %2998 = vrot.lane.b32.xlu0 %v2071, 48
  %v2999 = vpop.permute.xlu0 %2998
  %v3002 = vsel %vm213, %v2921, 0
  %3004 = vmatprep.subr.mxu0 0.0
  %3005 = vmatpush1.msra.mxu0 %v2999
  %3006 = vmatprep.subr.mxu0 0.0
  %3007 = vmatpush1.msra.mxu0 0.0
  %3008 = vmatprep.subr.mxu0 0.0
  %3009 = vmatpush1.msra.mxu0 0.0
  %3010 = vmatprep.subr.mxu0 0.0
  %3011 = vmatpush1.msra.mxu0 0.0
  %3012 = vmatprep.subr.mxu0 0.0
  %3013 = vmatpush1.msra.mxu0 0.0
  %3014 = vmatprep.subr.mxu0 0.0
  %3015 = vmatpush1.msra.mxu0 0.0
  %3016 = vmatprep.subr.mxu0 0.0
  %3017 = vmatpush1.msra.mxu0 0.0
  %3018 = vmatprep.subr.mxu0 0.0
  %3019 = vmatpush1.msra.mxu0 0.0
  %3020 = vmatprep.subr.mxu0 0.0
  %3021 = vmatpush1.msra.mxu0 0.0
  %3022 = vmatprep.subr.mxu0 0.0
  %3023 = vmatpush1.msra.mxu0 0.0
  %3024 = vmatprep.subr.mxu0 0.0
  %3025 = vmatpush1.msra.mxu0 0.0
  %3026 = vmatprep.subr.mxu0 0.0
  %3027 = vmatpush1.msra.mxu0 0.0
  %3028 = vmatprep.subr.mxu0 0.0
  %3029 = vmatpush1.msra.mxu0 0.0
  %3030 = vmatprep.subr.mxu0 0.0
  %3031 = vmatpush1.msra.mxu0 0.0
  %3032 = vmatprep.subr.mxu0 0.0
  %3033 = vmatpush1.msra.mxu0 0.0
  %3034 = vmatprep.subr.mxu0 0.0
  %3035 = vmatpush1.msra.mxu0 0.0
  %3036 = vmatprep.subr.mxu0 0.0
  %3037 = vmatpush1.msra.mxu0 0.0
  %3038 = vmatprep.subr.mxu0 0.0
  %3039 = vmatpush1.msra.mxu0 0.0
  %3040 = vmatprep.subr.mxu0 0.0
  %3041 = vmatpush1.msra.mxu0 0.0
  %3042 = vmatprep.subr.mxu0 0.0
  %3043 = vmatpush1.msra.mxu0 0.0
  %3044 = vmatprep.subr.mxu0 0.0
  %3045 = vmatpush1.msra.mxu0 0.0
  %3046 = vmatprep.subr.mxu0 0.0
  %3047 = vmatpush1.msra.mxu0 0.0
  %3048 = vmatprep.subr.mxu0 0.0
  %3049 = vmatpush1.msra.mxu0 0.0
  %3050 = vmatprep.subr.mxu0 0.0
  %3051 = vmatpush1.msra.mxu0 0.0
  %3052 = vmatprep.subr.mxu0 0.0
  %3053 = vmatpush1.msra.mxu0 0.0
  %3054 = vmatprep.subr.mxu0 0.0
  %3055 = vmatpush1.msra.mxu0 0.0
  %3056 = vmatprep.subr.mxu0 0.0
  %3057 = vmatpush1.msra.mxu0 0.0
  %3058 = vmatprep.subr.mxu0 0.0
  %3059 = vmatpush1.msra.mxu0 0.0
  %3060 = vmatprep.subr.mxu0 0.0
  %3061 = vmatpush1.msra.mxu0 0.0
  %3062 = vmatprep.subr.mxu0 0.0
  %3063 = vmatpush1.msra.mxu0 0.0
  %3064 = vmatprep.subr.mxu0 0.0
  %3065 = vmatpush1.msra.mxu0 0.0
  %3066 = vmatprep.subr.mxu0 0.0
  %3067 = vmatpush1.msra.mxu0 0.0
  %3068 = vmatprep.mubr.f32.mxu0 0.0
  %3069 = vmatmul.mubr.f32.gmra.mrb[0].mxu0 %v3002
  %v3070 = vpop.f32.mrb[0].mxu0
  %v3071 = vadd.f32 0.0, %v3070
  %v3072 = vpop.f32.mrb[0].mxu0
  %3073 = vdwg.mxu0
  %3074 = vrot.lane.b32.xlu0 %v2066, 104
  %v3075 = vpop.permute.xlu0 %3074
  %3076 = vrot.lane.b32.xlu0 %v2066, 72
  %v3077 = vpop.permute.xlu0 %3076
  %v3078 = vsel %vm213, %v3075, 0
  %v3080 = vsel %vm213, %v3077, 0
  %3082 = vmatprep.subr.mxu0 0.0
  %3083 = vmatpush1.xpose.msra.mxu0 %v3080
  %3084 = vmatprep.subr.mxu0 0.0
  %3085 = vmatpush1.xpose.msra.mxu0 0.0
  %3086 = vmatprep.subr.mxu0 0.0
  %3087 = vmatpush1.xpose.msra.mxu0 0.0
  %3088 = vmatprep.subr.mxu0 0.0
  %3089 = vmatpush1.xpose.msra.mxu0 0.0
  %3090 = vmatprep.subr.mxu0 0.0
  %3091 = vmatpush1.xpose.msra.mxu0 0.0
  %3092 = vmatprep.subr.mxu0 0.0
  %3093 = vmatpush1.xpose.msra.mxu0 0.0
  %3094 = vmatprep.subr.mxu0 0.0
  %3095 = vmatpush1.xpose.msra.mxu0 0.0
  %3096 = vmatprep.subr.mxu0 0.0
  %3097 = vmatpush1.xpose.msra.mxu0 0.0
  %3098 = vmatprep.subr.mxu0 0.0
  %3099 = vmatpush1.xpose.msra.mxu0 0.0
  %3100 = vmatprep.subr.mxu0 0.0
  %3101 = vmatpush1.xpose.msra.mxu0 0.0
  %3102 = vmatprep.subr.mxu0 0.0
  %3103 = vmatpush1.xpose.msra.mxu0 0.0
  %3104 = vmatprep.subr.mxu0 0.0
  %3105 = vmatpush1.xpose.msra.mxu0 0.0
  %3106 = vmatprep.subr.mxu0 0.0
  %3107 = vmatpush1.xpose.msra.mxu0 0.0
  %3108 = vmatprep.subr.mxu0 0.0
  %3109 = vmatpush1.xpose.msra.mxu0 0.0
  %3110 = vmatprep.subr.mxu0 0.0
  %3111 = vmatpush1.xpose.msra.mxu0 0.0
  %3112 = vmatprep.subr.mxu0 0.0
  %3113 = vmatpush1.xpose.msra.mxu0 0.0
  %3114 = vmatprep.subr.mxu0 0.0
  %3115 = vmatpush1.xpose.msra.mxu0 0.0
  %3116 = vmatprep.subr.mxu0 0.0
  %3117 = vmatpush1.xpose.msra.mxu0 0.0
  %3118 = vmatprep.subr.mxu0 0.0
  %3119 = vmatpush1.xpose.msra.mxu0 0.0
  %3120 = vmatprep.subr.mxu0 0.0
  %3121 = vmatpush1.xpose.msra.mxu0 0.0
  %3122 = vmatprep.subr.mxu0 0.0
  %3123 = vmatpush1.xpose.msra.mxu0 0.0
  %3124 = vmatprep.subr.mxu0 0.0
  %3125 = vmatpush1.xpose.msra.mxu0 0.0
  %3126 = vmatprep.subr.mxu0 0.0
  %3127 = vmatpush1.xpose.msra.mxu0 0.0
  %3128 = vmatprep.subr.mxu0 0.0
  %3129 = vmatpush1.xpose.msra.mxu0 0.0
  %3130 = vmatprep.subr.mxu0 0.0
  %3131 = vmatpush1.xpose.msra.mxu0 0.0
  %3132 = vmatprep.subr.mxu0 0.0
  %3133 = vmatpush1.xpose.msra.mxu0 0.0
  %3134 = vmatprep.subr.mxu0 0.0
  %3135 = vmatpush1.xpose.msra.mxu0 0.0
  %3136 = vmatprep.subr.mxu0 0.0
  %3137 = vmatpush1.xpose.msra.mxu0 0.0
  %3138 = vmatprep.subr.mxu0 0.0
  %3139 = vmatpush1.xpose.msra.mxu0 0.0
  %3140 = vmatprep.subr.mxu0 0.0
  %3141 = vmatpush1.xpose.msra.mxu0 0.0
  %3142 = vmatprep.subr.mxu0 0.0
  %3143 = vmatpush1.xpose.msra.mxu0 0.0
  %3144 = vmatprep.subr.mxu0 0.0
  %3145 = vmatpush1.xpose.msra.mxu0 0.0
  %3146 = vmatprep.mubr.f32.mxu0 0.0
  %3147 = vmatmul.mubr.f32.gmra.mrb[0].mxu0 %v3078
  %v3148 = vpop.f32.mrb[0].mxu0
  %v3149 = vadd.f32 0.0, %v3148
  %v3150 = vpop.f32.mrb[0].mxu0
  %3151 = vdwg.mxu0
  %3152 = vrot.lane.b32.xlu0 %v2071, 104
  %v3153 = vpop.permute.xlu0 %3152
  %3154 = vrot.lane.b32.xlu0 %v2071, 72
  %v3155 = vpop.permute.xlu0 %3154
  %v3156 = vsel %vm213, %v3153, 0
  %v3158 = vsel %vm213, %v3155, 0
  %3160 = vmatprep.subr.mxu0 0.0
  %3161 = vmatpush1.xpose.msra.mxu0 %v3158
  %3162 = vmatprep.subr.mxu0 0.0
  %3163 = vmatpush1.xpose.msra.mxu0 0.0
  %3164 = vmatprep.subr.mxu0 0.0
  %3165 = vmatpush1.xpose.msra.mxu0 0.0
  %3166 = vmatprep.subr.mxu0 0.0
  %3167 = vmatpush1.xpose.msra.mxu0 0.0
  %3168 = vmatprep.subr.mxu0 0.0
  %3169 = vmatpush1.xpose.msra.mxu0 0.0
  %3170 = vmatprep.subr.mxu0 0.0
  %3171 = vmatpush1.xpose.msra.mxu0 0.0
  %3172 = vmatprep.subr.mxu0 0.0
  %3173 = vmatpush1.xpose.msra.mxu0 0.0
  %3174 = vmatprep.subr.mxu0 0.0
  %3175 = vmatpush1.xpose.msra.mxu0 0.0
  %3176 = vmatprep.subr.mxu0 0.0
  %3177 = vmatpush1.xpose.msra.mxu0 0.0
  %3178 = vmatprep.subr.mxu0 0.0
  %3179 = vmatpush1.xpose.msra.mxu0 0.0
  %3180 = vmatprep.subr.mxu0 0.0
  %3181 = vmatpush1.xpose.msra.mxu0 0.0
  %3182 = vmatprep.subr.mxu0 0.0
  %3183 = vmatpush1.xpose.msra.mxu0 0.0
  %3184 = vmatprep.subr.mxu0 0.0
  %3185 = vmatpush1.xpose.msra.mxu0 0.0
  %3186 = vmatprep.subr.mxu0 0.0
  %3187 = vmatpush1.xpose.msra.mxu0 0.0
  %3188 = vmatprep.subr.mxu0 0.0
  %3189 = vmatpush1.xpose.msra.mxu0 0.0
  %3190 = vmatprep.subr.mxu0 0.0
  %3191 = vmatpush1.xpose.msra.mxu0 0.0
  %3192 = vmatprep.subr.mxu0 0.0
  %3193 = vmatpush1.xpose.msra.mxu0 0.0
  %3194 = vmatprep.subr.mxu0 0.0
  %3195 = vmatpush1.xpose.msra.mxu0 0.0
  %3196 = vmatprep.subr.mxu0 0.0
  %3197 = vmatpush1.xpose.msra.mxu0 0.0
  %3198 = vmatprep.subr.mxu0 0.0
  %3199 = vmatpush1.xpose.msra.mxu0 0.0
  %3200 = vmatprep.subr.mxu0 0.0
  %3201 = vmatpush1.xpose.msra.mxu0 0.0
  %3202 = vmatprep.subr.mxu0 0.0
  %3203 = vmatpush1.xpose.msra.mxu0 0.0
  %3204 = vmatprep.subr.mxu0 0.0
  %3205 = vmatpush1.xpose.msra.mxu0 0.0
  %3206 = vmatprep.subr.mxu0 0.0
  %3207 = vmatpush1.xpose.msra.mxu0 0.0
  %3208 = vmatprep.subr.mxu0 0.0
  %3209 = vmatpush1.xpose.msra.mxu0 0.0
  %3210 = vmatprep.subr.mxu0 0.0
  %3211 = vmatpush1.xpose.msra.mxu0 0.0
  %3212 = vmatprep.subr.mxu0 0.0
  %3213 = vmatpush1.xpose.msra.mxu0 0.0
  %3214 = vmatprep.subr.mxu0 0.0
  %3215 = vmatpush1.xpose.msra.mxu0 0.0
  %3216 = vmatprep.subr.mxu0 0.0
  %3217 = vmatpush1.xpose.msra.mxu0 0.0
  %3218 = vmatprep.subr.mxu0 0.0
  %3219 = vmatpush1.xpose.msra.mxu0 0.0
  %3220 = vmatprep.subr.mxu0 0.0
  %3221 = vmatpush1.xpose.msra.mxu0 0.0
  %3222 = vmatprep.subr.mxu0 0.0
  %3223 = vmatpush1.xpose.msra.mxu0 0.0
  %3224 = vmatprep.mubr.f32.mxu0 0.0
  %3225 = vmatmul.mubr.f32.gmra.mrb[0].mxu0 %v3156
  %v3226 = vpop.f32.mrb[0].mxu0
  %v3227 = vadd.f32 0.0, %v3226
  %v3228 = vpop.f32.mrb[0].mxu0
  %3229 = vdwg.mxu0
  %v3230 = vmul.f32 %v3149, 0.35355338
  %v3231 = vmul.f32 %v3227, 0.35355338
  %v3232 = vadd.f32 %v3230, %v372
  %v3233 = vadd.f32 %v3231, %v376
  %v3234 = vsel %vm213, %v3232, -inf
  %3235 = vmax.xlane.f32.xlu0 %v3234
  %v3236 = vpop.xlane.xlu0 %3235
  %v3237 = vsel %vm213, %v3233, -inf
  %3238 = vmax.xlane.f32.xlu0 %v3237
  %v3239 = vpop.xlane.xlu0 %3238
  %v3240 = vsub.f32 %v3232, %v3236
  %v3241 = vsub.f32 %v3233, %v3239
  %v3242 = vmul.f32 %v3240, 1.442695
  %v3243 = vpow.pop %v3242
  %v3244 = vmul.f32 %v3241, 1.442695
  %v3245 = vpow.pop %v3244
  %v3246 = vsel %vm213, %v3243, 0.0
  %3247 = vadd.xlane.f32.xlu0 %v3246
  %v3248 = vpop.xlane.xlu0 %3247
  %v3249 = vsel %vm213, %v3245, 0.0
  %3250 = vadd.xlane.f32.xlu0 %v3249
  %v3251 = vpop.xlane.xlu0 %3250
  %v3252 = vrcp.pop %v3248
  %v3253 = vrcp.pop %v3251
  %v3254 = vmul.f32 %v3243, %v3252
  %v3255 = vmul.f32 %v3245, %v3253
  %3256 = vrot.lane.b32.xlu0 %v2066, 40
  %v3257 = vpop.permute.xlu0 %3256
  %v3260 = vsel %vm213, %v3254, 0
  %3262 = vmatprep.subr.mxu0 0.0
  %3263 = vmatpush1.msra.mxu0 %v3257
  %3264 = vmatprep.subr.mxu0 0.0
  %3265 = vmatpush1.msra.mxu0 0.0
  %3266 = vmatprep.subr.mxu0 0.0
  %3267 = vmatpush1.msra.mxu0 0.0
  %3268 = vmatprep.subr.mxu0 0.0
  %3269 = vmatpush1.msra.mxu0 0.0
  %3270 = vmatprep.subr.mxu0 0.0
  %3271 = vmatpush1.msra.mxu0 0.0
  %3272 = vmatprep.subr.mxu0 0.0
  %3273 = vmatpush1.msra.mxu0 0.0
  %3274 = vmatprep.subr.mxu0 0.0
  %3275 = vmatpush1.msra.mxu0 0.0
  %3276 = vmatprep.subr.mxu0 0.0
  %3277 = vmatpush1.msra.mxu0 0.0
  %3278 = vmatprep.subr.mxu0 0.0
  %3279 = vmatpush1.msra.mxu0 0.0
  %3280 = vmatprep.subr.mxu0 0.0
  %3281 = vmatpush1.msra.mxu0 0.0
  %3282 = vmatprep.subr.mxu0 0.0
  %3283 = vmatpush1.msra.mxu0 0.0
  %3284 = vmatprep.subr.mxu0 0.0
  %3285 = vmatpush1.msra.mxu0 0.0
  %3286 = vmatprep.subr.mxu0 0.0
  %3287 = vmatpush1.msra.mxu0 0.0
  %3288 = vmatprep.subr.mxu0 0.0
  %3289 = vmatpush1.msra.mxu0 0.0
  %3290 = vmatprep.subr.mxu0 0.0
  %3291 = vmatpush1.msra.mxu0 0.0
  %3292 = vmatprep.subr.mxu0 0.0
  %3293 = vmatpush1.msra.mxu0 0.0
  %3294 = vmatprep.subr.mxu0 0.0
  %3295 = vmatpush1.msra.mxu0 0.0
  %3296 = vmatprep.subr.mxu0 0.0
  %3297 = vmatpush1.msra.mxu0 0.0
  %3298 = vmatprep.subr.mxu0 0.0
  %3299 = vmatpush1.msra.mxu0 0.0
  %3300 = vmatprep.subr.mxu0 0.0
  %3301 = vmatpush1.msra.mxu0 0.0
  %3302 = vmatprep.subr.mxu0 0.0
  %3303 = vmatpush1.msra.mxu0 0.0
  %3304 = vmatprep.subr.mxu0 0.0
  %3305 = vmatpush1.msra.mxu0 0.0
  %3306 = vmatprep.subr.mxu0 0.0
  %3307 = vmatpush1.msra.mxu0 0.0
  %3308 = vmatprep.subr.mxu0 0.0
  %3309 = vmatpush1.msra.mxu0 0.0
  %3310 = vmatprep.subr.mxu0 0.0
  %3311 = vmatpush1.msra.mxu0 0.0
  %3312 = vmatprep.subr.mxu0 0.0
  %3313 = vmatpush1.msra.mxu0 0.0
  %3314 = vmatprep.subr.mxu0 0.0
  %3315 = vmatpush1.msra.mxu0 0.0
  %3316 = vmatprep.subr.mxu0 0.0
  %3317 = vmatpush1.msra.mxu0 0.0
  %3318 = vmatprep.subr.mxu0 0.0
  %3319 = vmatpush1.msra.mxu0 0.0
  %3320 = vmatprep.subr.mxu0 0.0
  %3321 = vmatpush1.msra.mxu0 0.0
  %3322 = vmatprep.subr.mxu0 0.0
  %3323 = vmatpush1.msra.mxu0 0.0
  %3324 = vmatprep.subr.mxu0 0.0
  %3325 = vmatpush1.msra.mxu0 0.0
  %3326 = vmatprep.mubr.f32.mxu0 0.0
  %3327 = vmatmul.mubr.f32.gmra.mrb[0].mxu0 %v3260
  %v3328 = vpop.f32.mrb[0].mxu0
  %v3329 = vadd.f32 0.0, %v3328
  %v3330 = vpop.f32.mrb[0].mxu0
  %3331 = vdwg.mxu0
  %3332 = vrot.lane.b32.xlu0 %v2071, 40
  %v3333 = vpop.permute.xlu0 %3332
  %v3336 = vsel %vm213, %v3255, 0
  %3338 = vmatprep.subr.mxu0 0.0
  %3339 = vmatpush1.msra.mxu0 %v3333
  %3340 = vmatprep.subr.mxu0 0.0
  %3341 = vmatpush1.msra.mxu0 0.0
  %3342 = vmatprep.subr.mxu0 0.0
  %3343 = vmatpush1.msra.mxu0 0.0
  %3344 = vmatprep.subr.mxu0 0.0
  %3345 = vmatpush1.msra.mxu0 0.0
  %3346 = vmatprep.subr.mxu0 0.0
  %3347 = vmatpush1.msra.mxu0 0.0
  %3348 = vmatprep.subr.mxu0 0.0
  %3349 = vmatpush1.msra.mxu0 0.0
  %3350 = vmatprep.subr.mxu0 0.0
  %3351 = vmatpush1.msra.mxu0 0.0
  %3352 = vmatprep.subr.mxu0 0.0
  %3353 = vmatpush1.msra.mxu0 0.0
  %3354 = vmatprep.subr.mxu0 0.0
  %3355 = vmatpush1.msra.mxu0 0.0
  %3356 = vmatprep.subr.mxu0 0.0
  %3357 = vmatpush1.msra.mxu0 0.0
  %3358 = vmatprep.subr.mxu0 0.0
  %3359 = vmatpush1.msra.mxu0 0.0
  %3360 = vmatprep.subr.mxu0 0.0
  %3361 = vmatpush1.msra.mxu0 0.0
  %3362 = vmatprep.subr.mxu0 0.0
  %3363 = vmatpush1.msra.mxu0 0.0
  %3364 = vmatprep.subr.mxu0 0.0
  %3365 = vmatpush1.msra.mxu0 0.0
  %3366 = vmatprep.subr.mxu0 0.0
  %3367 = vmatpush1.msra.mxu0 0.0
  %3368 = vmatprep.subr.mxu0 0.0
  %3369 = vmatpush1.msra.mxu0 0.0
  %3370 = vmatprep.subr.mxu0 0.0
  %3371 = vmatpush1.msra.mxu0 0.0
  %3372 = vmatprep.subr.mxu0 0.0
  %3373 = vmatpush1.msra.mxu0 0.0
  %3374 = vmatprep.subr.mxu0 0.0
  %3375 = vmatpush1.msra.mxu0 0.0
  %3376 = vmatprep.subr.mxu0 0.0
  %3377 = vmatpush1.msra.mxu0 0.0
  %3378 = vmatprep.subr.mxu0 0.0
  %3379 = vmatpush1.msra.mxu0 0.0
  %3380 = vmatprep.subr.mxu0 0.0
  %3381 = vmatpush1.msra.mxu0 0.0
  %3382 = vmatprep.subr.mxu0 0.0
  %3383 = vmatpush1.msra.mxu0 0.0
  %3384 = vmatprep.subr.mxu0 0.0
  %3385 = vmatpush1.msra.mxu0 0.0
  %3386 = vmatprep.subr.mxu0 0.0
  %3387 = vmatpush1.msra.mxu0 0.0
  %3388 = vmatprep.subr.mxu0 0.0
  %3389 = vmatpush1.msra.mxu0 0.0
  %3390 = vmatprep.subr.mxu0 0.0
  %3391 = vmatpush1.msra.mxu0 0.0
  %3392 = vmatprep.subr.mxu0 0.0
  %3393 = vmatpush1.msra.mxu0 0.0
  %3394 = vmatprep.subr.mxu0 0.0
  %3395 = vmatpush1.msra.mxu0 0.0
  %3396 = vmatprep.subr.mxu0 0.0
  %3397 = vmatpush1.msra.mxu0 0.0
  %3398 = vmatprep.subr.mxu0 0.0
  %3399 = vmatpush1.msra.mxu0 0.0
  %3400 = vmatprep.subr.mxu0 0.0
  %3401 = vmatpush1.msra.mxu0 0.0
  %3402 = vmatprep.mubr.f32.mxu0 0.0
  %3403 = vmatmul.mubr.f32.gmra.mrb[0].mxu0 %v3336
  %v3404 = vpop.f32.mrb[0].mxu0
  %v3405 = vadd.f32 0.0, %v3404
  %v3406 = vpop.f32.mrb[0].mxu0
  %3407 = vdwg.mxu0
  %3410 = vrot.lane.b32.xlu0 %v2661, 8
  %v3411 = vpop.permute.xlu0 %3410
  %3412 = vrot.lane.b32.xlu0 %v2737, 8
  %v3413 = vpop.permute.xlu0 %3412
  %3418 = vrot.lane.b32.xlu0 %v2995, 16
  %v3419 = vpop.permute.xlu0 %3418
  %3420 = vrot.lane.b32.xlu0 %v3071, 16
  %v3421 = vpop.permute.xlu0 %3420
  %3426 = vrot.lane.b32.xlu0 %v3329, 24
  %v3427 = vpop.permute.xlu0 %3426
  %3428 = vrot.lane.b32.xlu0 %v3405, 24
  %v3429 = vpop.permute.xlu0 %3428
  %v3432 = vsel %vm213, %v2327, %v3411
  %v3433 = vsel %vm213, %v2403, %v3413
  %v3434 = vsel %vm1583, %v3432, %v3419
  %v3435 = vsel %vm1583, %v3433, %v3421
  %v3436 = vsel %vm1586, %v3434, %v3427
  %v3437 = vsel %vm1586, %v3435, %v3429
  %s3438 = scalar_lea.vmem %s7, 32
  %v3439 = vld [vmem:[%s3438] sm:$0xff]
  %v3440 = vld [vmem:[%s3438 + $0x8] sm:$0xff]
  %v3441 = vld [vmem:[%s3438 + $0x10] sm:$0xff]
  %v3442 = vld [vmem:[%s3438 + $0x18] sm:$0xff]
  %s3443 = scalar_lea.vmem %s8, 1
  %v3444 = vld [vmem:[%s3443] sm:$0x1]
  %v3446 = vlaneseq
  %v3447 = vshrl.u32 %v3446, 7
  %v3448 = vsub.s32 0, %v3447
  %v3449 = vrot.slane %v3444, %v3448
  %v3452 = vsel %vm68, %v3436, 0
  %v3455 = vsel %vm68, %v3437, 0
  %3457 = vmatprep.subr.mxu0 0.0
  %3458 = vmatpush1.msra.mxu0 %v3439
  %3459 = vmatprep.subr.mxu0 0.0
  %3460 = vmatpush1.msra.mxu0 %v3440
  %3461 = vmatprep.subr.mxu0 0.0
  %3462 = vmatpush1.msra.mxu0 %v3441
  %3463 = vmatprep.subr.mxu0 0.0
  %3464 = vmatpush1.msra.mxu0 %v3442
  %3465 = vmatprep.subr.mxu0 0.0
  %3466 = vmatpush1.msra.mxu0 0.0
  %3467 = vmatprep.subr.mxu0 0.0
  %3468 = vmatpush1.msra.mxu0 0.0
  %3469 = vmatprep.subr.mxu0 0.0
  %3470 = vmatpush1.msra.mxu0 0.0
  %3471 = vmatprep.subr.mxu0 0.0
  %3472 = vmatpush1.msra.mxu0 0.0
  %3473 = vmatprep.subr.mxu0 0.0
  %3474 = vmatpush1.msra.mxu0 0.0
  %3475 = vmatprep.subr.mxu0 0.0
  %3476 = vmatpush1.msra.mxu0 0.0
  %3477 = vmatprep.subr.mxu0 0.0
  %3478 = vmatpush1.msra.mxu0 0.0
  %3479 = vmatprep.subr.mxu0 0.0
  %3480 = vmatpush1.msra.mxu0 0.0
  %3481 = vmatprep.subr.mxu0 0.0
  %3482 = vmatpush1.msra.mxu0 0.0
  %3483 = vmatprep.subr.mxu0 0.0
  %3484 = vmatpush1.msra.mxu0 0.0
  %3485 = vmatprep.subr.mxu0 0.0
  %3486 = vmatpush1.msra.mxu0 0.0
  %3487 = vmatprep.subr.mxu0 0.0
  %3488 = vmatpush1.msra.mxu0 0.0
  %3489 = vmatprep.subr.mxu0 0.0
  %3490 = vmatpush1.msra.mxu0 0.0
  %3491 = vmatprep.subr.mxu0 0.0
  %3492 = vmatpush1.msra.mxu0 0.0
  %3493 = vmatprep.subr.mxu0 0.0
  %3494 = vmatpush1.msra.mxu0 0.0
  %3495 = vmatprep.subr.mxu0 0.0
  %3496 = vmatpush1.msra.mxu0 0.0
  %3497 = vmatprep.subr.mxu0 0.0
  %3498 = vmatpush1.msra.mxu0 0.0
  %3499 = vmatprep.subr.mxu0 0.0
  %3500 = vmatpush1.msra.mxu0 0.0
  %3501 = vmatprep.subr.mxu0 0.0
  %3502 = vmatpush1.msra.mxu0 0.0
  %3503 = vmatprep.subr.mxu0 0.0
  %3504 = vmatpush1.msra.mxu0 0.0
  %3505 = vmatprep.subr.mxu0 0.0
  %3506 = vmatpush1.msra.mxu0 0.0
  %3507 = vmatprep.subr.mxu0 0.0
  %3508 = vmatpush1.msra.mxu0 0.0
  %3509 = vmatprep.subr.mxu0 0.0
  %3510 = vmatpush1.msra.mxu0 0.0
  %3511 = vmatprep.subr.mxu0 0.0
  %3512 = vmatpush1.msra.mxu0 0.0
  %3513 = vmatprep.subr.mxu0 0.0
  %3514 = vmatpush1.msra.mxu0 0.0
  %3515 = vmatprep.subr.mxu0 0.0
  %3516 = vmatpush1.msra.mxu0 0.0
  %3517 = vmatprep.subr.mxu0 0.0
  %3518 = vmatpush1.msra.mxu0 0.0
  %3519 = vmatprep.subr.mxu0 0.0
  %3520 = vmatpush1.msra.mxu0 0.0
  %3521 = vmatprep.mubr.f32.mxu0 0.0
  %3522 = vmatmul.mubr.f32.gmra.mrb[0].mxu0 %v3452
  %v3523 = vpop.f32.mrb[0].mxu0
  %v3524 = vadd.f32 %v3449, %v3523
  %v3525 = vpop.f32.mrb[0].mxu0
  %3526 = vmatprep.mubr.f32.mxu0 0.0
  %3527 = vmatmul.mubr.f32.gmra.mrb[0].mxu0 %v3455
  %v3528 = vpop.f32.mrb[0].mxu0
  %v3529 = vadd.f32 %v3449, %v3528
  %v3530 = vpop.f32.mrb[0].mxu0
  %3531 = vdwg.mxu0
  %v3532 = vadd.f32 %v3524, %v1978
  %v3533 = vadd.f32 %v3529, %v1979
  %s3534 = scalar_lea.vmem %s9, 1
  %v3535 = vld [vmem:[%s3534] sm:$0x1]
  %s3536 = scalar_lea.vmem %s10, 1
  %v3537 = vld [vmem:[%s3536] sm:$0x1]
  %v3538 = vsel %vm68, %v3532, 0.0
  %3539 = vadd.xlane.f32.xlu0 %v3538
  %v3540 = vpop.xlane.xlu0 %3539
  %v3541 = vsel %vm68, %v3533, 0.0
  %3542 = vadd.xlane.f32.xlu0 %v3541
  %v3543 = vpop.xlane.xlu0 %3542
  %v3544 = vmul.f32 %v3540, %v75
  %v3545 = vmul.f32 %v3543, %v75
  %v3546 = vsub.f32 %v3532, %v3544
  %v3547 = vsub.f32 %v3533, %v3545
  %v3548 = vmul.f32 %v3546, %v3546
  %v3549 = vmul.f32 %v3547, %v3547
  %v3550 = vsel %vm68, %v3548, 0.0
  %3551 = vadd.xlane.f32.xlu0 %v3550
  %v3552 = vpop.xlane.xlu0 %3551
  %v3553 = vsel %vm68, %v3549, 0.0
  %3554 = vadd.xlane.f32.xlu0 %v3553
  %v3555 = vpop.xlane.xlu0 %3554
  %v3556 = vmul.f32 %v3552, %v75
  %v3557 = vmul.f32 %v3555, %v75
  %v3558 = vadd.f32 %v3556, 1e-05
  %v3559 = vadd.f32 %v3557, 1e-05
  %v3560 = vrsqrt.pop %v3558
  %v3561 = vrsqrt.pop %v3559
  %v3562 = vmul.f32 %v3546, %v3560
  %v3563 = vmul.f32 %v3547, %v3561
  %v3565 = vlaneseq
  %v3566 = vshrl.u32 %v3565, 7
  %v3567 = vsub.s32 0, %v3566
  %v3568 = vrot.slane %v3535, %v3567
  %v3570 = vmul.f32 %v3562, %v3568
  %v3571 = vmul.f32 %v3563, %v3568
  %v3573 = vlaneseq
  %v3574 = vshrl.u32 %v3573, 7
  %v3575 = vsub.s32 0, %v3574
  %v3576 = vrot.slane %v3537, %v3575
  %v3578 = vadd.f32 %v3570, %v3576
  %v3579 = vadd.f32 %v3571, %v3576
  %s3580 = scalar_lea.vmem %s11, 32
  %v3581 = vld [vmem:[%s3580] sm:$0xff]
  %v3582 = vld [vmem:[%s3580 + $0x8] sm:$0xff]
  %v3583 = vld [vmem:[%s3580 + $0x10] sm:$0xff]
  %v3584 = vld [vmem:[%s3580 + $0x18] sm:$0xff]
  %s3585 = scalar_lea.vmem %s12, 1
  %v3586 = vld [vmem:[%s3585] sm:$0x1]
  %v3588 = vlaneseq
  %v3589 = vshrl.u32 %v3588, 7
  %v3590 = vsub.s32 0, %v3589
  %v3591 = vrot.slane %v3586, %v3590
  %v3594 = vsel %vm68, %v3578, 0
  %v3597 = vsel %vm68, %v3579, 0
  %3599 = vmatprep.subr.mxu0 0.0
  %3600 = vmatpush1.msra.mxu0 %v3581
  %3601 = vmatprep.subr.mxu0 0.0
  %3602 = vmatpush1.msra.mxu0 %v3582
  %3603 = vmatprep.subr.mxu0 0.0
  %3604 = vmatpush1.msra.mxu0 %v3583
  %3605 = vmatprep.subr.mxu0 0.0
  %3606 = vmatpush1.msra.mxu0 %v3584
  %3607 = vmatprep.subr.mxu0 0.0
  %3608 = vmatpush1.msra.mxu0 0.0
  %3609 = vmatprep.subr.mxu0 0.0
  %3610 = vmatpush1.msra.mxu0 0.0
  %3611 = vmatprep.subr.mxu0 0.0
  %3612 = vmatpush1.msra.mxu0 0.0
  %3613 = vmatprep.subr.mxu0 0.0
  %3614 = vmatpush1.msra.mxu0 0.0
  %3615 = vmatprep.subr.mxu0 0.0
  %3616 = vmatpush1.msra.mxu0 0.0
  %3617 = vmatprep.subr.mxu0 0.0
  %3618 = vmatpush1.msra.mxu0 0.0
  %3619 = vmatprep.subr.mxu0 0.0
  %3620 = vmatpush1.msra.mxu0 0.0
  %3621 = vmatprep.subr.mxu0 0.0
  %3622 = vmatpush1.msra.mxu0 0.0
  %3623 = vmatprep.subr.mxu0 0.0
  %3624 = vmatpush1.msra.mxu0 0.0
  %3625 = vmatprep.subr.mxu0 0.0
  %3626 = vmatpush1.msra.mxu0 0.0
  %3627 = vmatprep.subr.mxu0 0.0
  %3628 = vmatpush1.msra.mxu0 0.0
  %3629 = vmatprep.subr.mxu0 0.0
  %3630 = vmatpush1.msra.mxu0 0.0
  %3631 = vmatprep.subr.mxu0 0.0
  %3632 = vmatpush1.msra.mxu0 0.0
  %3633 = vmatprep.subr.mxu0 0.0
  %3634 = vmatpush1.msra.mxu0 0.0
  %3635 = vmatprep.subr.mxu0 0.0
  %3636 = vmatpush1.msra.mxu0 0.0
  %3637 = vmatprep.subr.mxu0 0.0
  %3638 = vmatpush1.msra.mxu0 0.0
  %3639 = vmatprep.subr.mxu0 0.0
  %3640 = vmatpush1.msra.mxu0 0.0
  %3641 = vmatprep.subr.mxu0 0.0
  %3642 = vmatpush1.msra.mxu0 0.0
  %3643 = vmatprep.subr.mxu0 0.0
  %3644 = vmatpush1.msra.mxu0 0.0
  %3645 = vmatprep.subr.mxu0 0.0
  %3646 = vmatpush1.msra.mxu0 0.0
  %3647 = vmatprep.subr.mxu0 0.0
  %3648 = vmatpush1.msra.mxu0 0.0
  %3649 = vmatprep.subr.mxu0 0.0
  %3650 = vmatpush1.msra.mxu0 0.0
  %3651 = vmatprep.subr.mxu0 0.0
  %3652 = vmatpush1.msra.mxu0 0.0
  %3653 = vmatprep.subr.mxu0 0.0
  %3654 = vmatpush1.msra.mxu0 0.0
  %3655 = vmatprep.subr.mxu0 0.0
  %3656 = vmatpush1.msra.mxu0 0.0
  %3657 = vmatprep.subr.mxu0 0.0
  %3658 = vmatpush1.msra.mxu0 0.0
  %3659 = vmatprep.subr.mxu0 0.0
  %3660 = vmatpush1.msra.mxu0 0.0
  %3661 = vmatprep.subr.mxu0 0.0
  %3662 = vmatpush1.msra.mxu0 0.0
  %3663 = vmatprep.mubr.f32.mxu0 0.0
  %3664 = vmatmul.mubr.f32.gmra.mrb[0].mxu0 %v3594
  %v3665 = vpop.f32.mrb[0].mxu0
  %v3666 = vadd.f32 %v3591, %v3665
  %v3667 = vpop.f32.mrb[0].mxu0
  %3668 = vmatprep.mubr.f32.mxu0 0.0
  %3669 = vmatmul.mubr.f32.gmra.mrb[0].mxu0 %v3597
  %v3670 = vpop.f32.mrb[0].mxu0
  %v3671 = vadd.f32 %v3591, %v3670
  %v3672 = vpop.f32.mrb[0].mxu0
  %3673 = vdwg.mxu0
  %v3674 = vmul.f32 %v3666, %v3666
  %v3675 = vmul.f32 %v3671, %v3671
  %v3676 = vmul.f32 %v3666, %v3674
  %v3677 = vmul.f32 %v3671, %v3675
  %v3678 = vmul.f32 %v3676, 0.044715
  %v3679 = vmul.f32 %v3677, 0.044715
  %v3680 = vadd.f32 %v3666, %v3678
  %v3681 = vadd.f32 %v3671, %v3679
  %v3682 = vmul.f32 %v3680, 0.7978846
  %v3683 = vmul.f32 %v3681, 0.7978846
  %v3684 = vtanh.pop %v3682
  %v3685 = vtanh.pop %v3683
  %v3686 = vadd.f32 %v3684, 1.0
  %v3687 = vadd.f32 %v3685, 1.0
  %v3688 = vmul.f32 %v3686, 0.5
  %v3689 = vmul.f32 %v3687, 0.5
  %v3690 = vmul.f32 %v3666, %v3688
  %v3691 = vmul.f32 %v3671, %v3689
  %s3692 = scalar_lea.vmem %s13, 64
  %v3693 = vld [vmem:[%s3692] sm:$0xff]
  %v3694 = vld [vmem:[%s3692 + $0x8] sm:$0xff]
  %v3695 = vld [vmem:[%s3692 + $0x10] sm:$0xff]
  %v3696 = vld [vmem:[%s3692 + $0x18] sm:$0xff]
  %v3697 = vld [vmem:[%s3692 + $0x20] sm:$0xff]
  %v3698 = vld [vmem:[%s3692 + $0x28] sm:$0xff]
  %v3699 = vld [vmem:[%s3692 + $0x30] sm:$0xff]
  %v3700 = vld [vmem:[%s3692 + $0x38] sm:$0xff]
  %s3701 = scalar_lea.vmem %s14, 1
  %v3702 = vld [vmem:[%s3701] sm:$0x1]
  %v3704 = vlaneseq
  %v3705 = vshrl.u32 %v3704, 7
  %v3706 = vsub.s32 0, %v3705
  %v3707 = vrot.slane %v3702, %v3706
  %v3710 = vsel %vm1852, %v3690, 0
  %v3713 = vsel %vm1852, %v3691, 0
  %3715 = vmatprep.subr.mxu0 0.0
  %3716 = vmatpush1.msra.mxu0 %v3693
  %3717 = vmatprep.subr.mxu0 0.0
  %3718 = vmatpush1.msra.mxu0 %v3694
  %3719 = vmatprep.subr.mxu0 0.0
  %3720 = vmatpush1.msra.mxu0 %v3695
  %3721 = vmatprep.subr.mxu0 0.0
  %3722 = vmatpush1.msra.mxu0 %v3696
  %3723 = vmatprep.subr.mxu0 0.0
  %3724 = vmatpush1.msra.mxu0 %v3697
  %3725 = vmatprep.subr.mxu0 0.0
  %3726 = vmatpush1.msra.mxu0 %v3698
  %3727 = vmatprep.subr.mxu0 0.0
  %3728 = vmatpush1.msra.mxu0 %v3699
  %3729 = vmatprep.subr.mxu0 0.0
  %3730 = vmatpush1.msra.mxu0 %v3700
  %3731 = vmatprep.subr.mxu0 0.0
  %3732 = vmatpush1.msra.mxu0 0.0
  %3733 = vmatprep.subr.mxu0 0.0
  %3734 = vmatpush1.msra.mxu0 0.0
  %3735 = vmatprep.subr.mxu0 0.0
  %3736 = vmatpush1.msra.mxu0 0.0
  %3737 = vmatprep.subr.mxu0 0.0
  %3738 = vmatpush1.msra.mxu0 0.0
  %3739 = vmatprep.subr.mxu0 0.0
  %3740 = vmatpush1.msra.mxu0 0.0
  %3741 = vmatprep.subr.mxu0 0.0
  %3742 = vmatpush1.msra.mxu0 0.0
  %3743 = vmatprep.subr.mxu0 0.0
  %3744 = vmatpush1.msra.mxu0 0.0
  %3745 = vmatprep.subr.mxu0 0.0
  %3746 = vmatpush1.msra.mxu0 0.0
  %3747 = vmatprep.subr.mxu0 0.0
  %3748 = vmatpush1.msra.mxu0 0.0
  %3749 = vmatprep.subr.mxu0 0.0
  %3750 = vmatpush1.msra.mxu0 0.0
  %3751 = vmatprep.subr.mxu0 0.0
  %3752 = vmatpush1.msra.mxu0 0.0
  %3753 = vmatprep.subr.mxu0 0.0
  %3754 = vmatpush1.msra.mxu0 0.0
  %3755 = vmatprep.subr.mxu0 0.0
  %3756 = vmatpush1.msra.mxu0 0.0
  %3757 = vmatprep.subr.mxu0 0.0
  %3758 = vmatpush1.msra.mxu0 0.0
  %3759 = vmatprep.subr.mxu0 0.0
  %3760 = vmatpush1.msra.mxu0 0.0
  %3761 = vmatprep.subr.mxu0 0.0
  %3762 = vmatpush1.msra.mxu0 0.0
  %3763 = vmatprep.subr.mxu0 0.0
  %3764 = vmatpush1.msra.mxu0 0.0
  %3765 = vmatprep.subr.mxu0 0.0
  %3766 = vmatpush1.msra.mxu0 0.0
  %3767 = vmatprep.subr.mxu0 0.0
  %3768 = vmatpush1.msra.mxu0 0.0
  %3769 = vmatprep.subr.mxu0 0.0
  %3770 = vmatpush1.msra.mxu0 0.0
  %3771 = vmatprep.subr.mxu0 0.0
  %3772 = vmatpush1.msra.mxu0 0.0
  %3773 = vmatprep.subr.mxu0 0.0
  %3774 = vmatpush1.msra.mxu0 0.0
  %3775 = vmatprep.subr.mxu0 0.0
  %3776 = vmatpush1.msra.mxu0 0.0
  %3777 = vmatprep.subr.mxu0 0.0
  %3778 = vmatpush1.msra.mxu0 0.0
  %3779 = vmatprep.mubr.f32.mxu0 0.0
  %3780 = vmatmul.mubr.f32.gmra.mrb[0].mxu0 %v3710
  %v3781 = vpop.f32.mrb[0].mxu0
  %v3782 = vadd.f32 %v3707, %v3781
  %v3783 = vpop.f32.mrb[0].mxu0
  %3784 = vmatprep.mubr.f32.mxu0 0.0
  %3785 = vmatmul.mubr.f32.gmra.mrb[0].mxu0 %v3713
  %v3786 = vpop.f32.mrb[0].mxu0
  %v3787 = vadd.f32 %v3707, %v3786
  %v3788 = vpop.f32.mrb[0].mxu0
  %3789 = vdwg.mxu0
  %v3790 = vadd.f32 %v3782, %v3578
  %v3791 = vadd.f32 %v3787, %v3579
  %s3792 = scalar_lea.vmem %s15, 1
  %v3793 = vld [vmem:[%s3792] sm:$0x1]
  %s3794 = scalar_lea.vmem %s16, 1
  %v3795 = vld [vmem:[%s3794] sm:$0x1]
  %v3796 = vsel %vm68, %v3790, 0.0
  %3797 = vadd.xlane.f32.xlu0 %v3796
  %v3798 = vpop.xlane.xlu0 %3797
  %v3799 = vsel %vm68, %v3791, 0.0
  %3800 = vadd.xlane.f32.xlu0 %v3799
  %v3801 = vpop.xlane.xlu0 %3800
  %v3802 = vmul.f32 %v3798, %v75
  %v3803 = vmul.f32 %v3801, %v75
  %v3804 = vsub.f32 %v3790, %v3802
  %v3805 = vsub.f32 %v3791, %v3803
  %v3806 = vmul.f32 %v3804, %v3804
  %v3807 = vmul.f32 %v3805, %v3805
  %v3808 = vsel %vm68, %v3806, 0.0
  %3809 = vadd.xlane.f32.xlu0 %v3808
  %v3810 = vpop.xlane.xlu0 %3809
  %v3811 = vsel %vm68, %v3807, 0.0
  %3812 = vadd.xlane.f32.xlu0 %v3811
  %v3813 = vpop.xlane.xlu0 %3812
  %v3814 = vmul.f32 %v3810, %v75
  %v3815 = vmul.f32 %v3813, %v75
  %v3816 = vadd.f32 %v3814, 1e-05
  %v3817 = vadd.f32 %v3815, 1e-05
  %v3818 = vrsqrt.pop %v3816
  %v3819 = vrsqrt.pop %v3817
  %v3820 = vmul.f32 %v3804, %v3818
  %v3821 = vmul.f32 %v3805, %v3819
  %v3823 = vlaneseq
  %v3824 = vshrl.u32 %v3823, 7
  %v3825 = vsub.s32 0, %v3824
  %v3826 = vrot.slane %v3793, %v3825
  %v3828 = vmul.f32 %v3820, %v3826
  %v3829 = vmul.f32 %v3821, %v3826
  %v3831 = vlaneseq
  %v3832 = vshrl.u32 %v3831, 7
  %v3833 = vsub.s32 0, %v3832
  %v3834 = vrot.slane %v3795, %v3833
  %v3836 = vadd.f32 %v3828, %v3834
  %v3837 = vadd.f32 %v3829, %v3834
  %v3838 = vld [vmem:[%s2] sm:$0xff]
  %v3839 = vld [vmem:[%s2 + $0x8] sm:$0xff]
  %3841 = vset.pattern.permute.xlu0 0
  %3842 = vperm.xlu0 %3841, %v3838
  %v3843 = vpop.permute.xlu0 %3842
  %3846 = vset.pattern.permute.xlu0 0
  %3847 = vperm.xlu0 %3846, %v3839
  %v3848 = vpop.permute.xlu0 %3847
  %v3850 = vmul.f32 %v3836, %v3843
  %v3851 = vmul.f32 %v3837, %v3848
  %v3852 = vsel %vm68, %v3850, 0.0
  %v3853 = vrot.slane %v3852, 4
  %v3854 = vadd.f32 %v3852, %v3853
  %v3855 = vrot.slane %v3854, 2
  %v3856 = vadd.f32 %v3854, %v3855
  %v3857 = vrot.slane %v3856, 1
  %v3858 = vadd.f32 %v3856, %v3857
  %v3859 = vsel %vm68, %v3851, 0.0
  %v3860 = vrot.slane %v3859, 4
  %v3861 = vadd.f32 %v3859, %v3860
  %v3862 = vrot.slane %v3861, 2
  %v3863 = vadd.f32 %v3861, %v3862
  %v3864 = vrot.slane %v3863, 1
  %v3865 = vadd.f32 %v3863, %v3864
  %vm3866 = vcmask 7168
  %v3867 = vsel %vm3866, %v3838, 0.0
  %v3868 = vsel %vm3866, %v3839, 0.0
  %v3869 = vadd.f32 %v3867, %v3868
  %3870 = vadd.xlane.f32.xlu0 %v3869
  %v3871 = vpop.xlane.xlu0 %3870
  %v3872 = vrot.slane %v3871, 4
  %v3873 = vadd.f32 %v3871, %v3872
  %v3874 = vrot.slane %v3873, 2
  %v3875 = vadd.f32 %v3873, %v3874
  %v3876 = vrot.slane %v3875, 1
  %v3877 = vadd.f32 %v3875, %v3876
  %s3878 = vtos %v3877
  %v3879 = vstv %s3878
  %v3880 = vrcp.pop %v3879
  %v3881 = vmul.f32 %v3858, %v3880
  %v3882 = vmul.f32 %v3865, %v3880
  %v3883 = vld [vmem:[%s17] sm:$0x1]
  %v3885 = vlaneseq
  %v3886 = vshrl.u32 %v3885, 7
  %v3887 = vsub.s32 0, %v3886
  %v3888 = vrot.slane %v3883, %v3887
  %v3890 = vmul.f32 %v3881, %v3888
  %v3891 = vmul.f32 %v3882, %v3888
  %v3894 = vrot.slane %v3891, 7
  %vm3895 = vcmask 1041409
  %v3896 = vsel %vm3895, %v3894, %v3890
  %vm3898 = vcmask 254976
  %v3899 = vsel %vm3898, %v3896, 0.0
  %3900 = vadd.xlane.f32.xlu0 %v3899
  %v3901 = vpop.xlane.xlu0 %3900
  %v3902 = vld [vmem:[#allocation2] sm:$0x1]
  %v3904 = vlaneseq
  %v3905 = vshrl.u32 %v3904, 7
  %v3906 = vsub.s32 0, %v3905
  %v3907 = vrot.slane %v3902, %v3906
  %v3909 = vadd.f32 %v3901, %v3907
  %vm3910 = vcmask 1024
  %3911 = vst.msk [vmem:[%s19] sm:$0x3] %vm3910, %v3909
  // Predicated region
  $region78: #{forward.1} parent=0 // pred_check
    _
  $region79: #{forward.1} parent=0 // pred_check_branch
    %3913 = sbr.rel (0) target = $region81
  $region80: #{forward.1} parent=0 // pred_region
    _
  $region81: #{forward.1} parent=0 // pred_fallthru
    _
  // Predicated region
  $region82: #{forward.1} parent=0 // pred_check
    _
  $region83: #{forward.1} parent=0 // pred_check_branch
    %3915 = sbr.rel (0) target = $region85
  $region84: #{forward.1} parent=0 // pred_region
    _
  $region85: #{forward.1} parent=0 // pred_fallthru
    _

</llo_original>
